<compile_context>
chip_gen: v5e
topology: v5e:2x2
jax: 0.10.0
libtpu: 0.0.40
codegen_flags: <defaults>
</compile_context>

<pallas_src>
import math
from functools import partial

import jax
import jax.numpy as jnp
from jax import lax
from jax.experimental import pallas as pl
from jax.experimental.pallas import tpu as pltpu

F32 = jnp.float32
BF16 = jnp.bfloat16


# ----------------------------- in-kernel helpers -----------------------------

def _gelu(x):
    # tanh-approximate GELU (EUP tanh + a few VALU ops); |err| vs the exact
    # erf-GELU of the PyTorch module is < ~1e-3, inside bf16 matmul tolerance.
    c = 0.7978845608028654  # sqrt(2/pi)
    return 0.5 * x * (1.0 + jnp.tanh(c * (x + 0.044715 * x * x * x)))


# --------------------------------- kernels ------------------------------------

def _proj_kernel(x_ref, w_in_a_ref, w_in_g_ref, b_in_a_ref, b_in_g_ref,
                 w_qkv_ref, b_qkv_ref, qkv_ref):
    """in_proj + GLU + fused q|k|v projection for one (batch, time-block)."""
    x = x_ref[0]                                                    # (Pt, hidden) bf16
    # a/g use separate weights so no misaligned lane-axis split is needed
    # (at op % 128 == 0 these two matmuls can be re-fused into one).
    a = jnp.dot(x, w_in_a_ref[...], preferred_element_type=F32) + b_in_a_ref[...]
    g = jnp.dot(x, w_in_g_ref[...], preferred_element_type=F32) + b_in_g_ref[...]
    u = (a * jax.nn.sigmoid(g)).astype(BF16)                        # (Pt, op)
    # q|k|v fused, produced channel-major (3*op, Pt) so the conv kernels read
    # channel-major blocks without any XLA-side transpose.
    qkv = lax.dot_general(w_qkv_ref[...], u, (((1,), (1,)), ((), ())),
                          preferred_element_type=F32) + b_qkv_ref[...]
    qkv_ref[0] = qkv.astype(BF16)                                   # (3*op, Pt)


def _key_conv_kernel(k_ref, bank_ref, key_ref, acc_ref):
    """Depthwise causal conv of `key` with k_key, tiled over (t_blk, s_blk)."""
    t_blk = pl.program_id(1)
    s_blk = pl.program_id(2)

    @pl.when(s_blk == 0)
    def _init():
        acc_ref[...] = jnp.zeros_like(acc_ref)

    @pl.when(s_blk <= t_blk)          # causal block skip
    def _accumulate():
        # batched Toeplitz-tile matvec on the MXU: (op, 1, Ps) x (op, Pt, Ps).
        conv = lax.dot_general(
            k_ref[0][:, None, :], bank_ref[0],
            (((2,), (2,)), ((0,), (0,))),
            preferred_element_type=F32)                             # (op, 1, Pt)
        acc_ref[...] += conv[:, 0, :]

    @pl.when(s_blk == pl.num_programs(2) - 1)
    def _store():
        key_ref[0] = acc_ref[...].astype(key_ref.dtype)


def _gconv_kernel(key_ref, val_ref, q_ref, bank_ref, w_out_ref, b_out_ref,
                  o_ref, acc_ref, *, h, head_dim, op):
    """kv outer product + causal conv (tiled) + query gating + GELU +
    output_linear + GELU, for one (batch, t-block)."""
    t_blk = pl.program_id(1)
    s_blk = pl.program_id(2)

    @pl.when(s_blk == 0)
    def _init():
        acc_ref[...] = jnp.zeros_like(acc_ref)

    @pl.when(s_blk <= t_blk)          # causal block skip
    def _accumulate():
        key_s = key_ref[0]                                          # (op, Ps) bf16
        val_s = val_ref[0]                                          # (op, Ps) bf16
        ps = key_s.shape[-1]
        # kv built directly in bf16 (D skip is folded into the conv kernel, so
        # no separate f32 path is needed); one (d1*d2)-batched MXU contraction.
        kv3 = (key_s.reshape(h, head_dim, 1, ps) *
               val_s.reshape(h, 1, head_dim, ps)).reshape(h, head_dim * head_dim, ps)
        acc_ref[...] += lax.dot_general(
            kv3, bank_ref[0],                                       # x (h, Pt, Ps)
            (((2,), (2,)), ((0,), (0,))),
            preferred_element_type=F32)                             # (h, d1*d2, Pt)

    @pl.when(s_blk == pl.num_programs(2) - 1)
    def _epilogue():
        pt = acc_ref.shape[-1]
        y4 = acc_ref[...].reshape(h, head_dim, head_dim, pt)        # f32, one tile only
        q_r = q_ref[0].astype(F32).reshape(h, head_dim, 1, pt)
        gated = jnp.sum(q_r * y4, axis=1)                           # (h, d2, Pt)
        gated = _gelu(gated).reshape(op, pt)                        # channel = h_*hd + d2
        y_tm = gated.T.astype(BF16)                                 # (Pt, op) time-major
        # output_linear with the (d2, h) torch channel interleave folded into
        # the pre-permuted / pre-transposed weight; lane-dense time-major store
        # (no post-kernel transpose).
        out = jnp.dot(y_tm, w_out_ref[...], preferred_element_type=F32) + b_out_ref[...]
        o_ref[0] = _gelu(out)                                       # (Pt, op) f32


# ----------------------------- glue (plain JAX) -------------------------------

def _torch_linear_interp(x, scale):
    # F.interpolate(mode='linear', align_corners=False) along the last axis.
    in_w = x.shape[-1]
    out_w = int(math.floor(in_w * scale))
    j = jnp.arange(out_w, dtype=jnp.float32)
    src = jnp.maximum((j + 0.5) / scale - 0.5, 0.0)
    i0 = jnp.floor(src).astype(jnp.int32)
    lam = src - i0.astype(jnp.float32)
    i1 = jnp.minimum(i0 + 1, in_w - 1)
    return x[..., i0] * (1.0 - lam) + x[..., i1] * lam


def _get_kernels_forward_cat(multiplier, kernel_list, init_scale=0):
    # GConv3.get_kernels_forward, mode contains 'cat' (linear interpolation).
    num_scales = len(kernel_list)
    pieces = []
    for i in range(num_scales):
        scale = 2 ** (max(0, i - 1) + init_scale)
        pieces.append(_torch_linear_interp(kernel_list[i], scale)
                      * multiplier ** (num_scales - i - 1))
    return jnp.concatenate(pieces, axis=-1)      # (1, dims, Lk)


def _prep_kernel(k_full, L):
    # kernel_norm over full length (first-forward buffer init), truncate/pad to L.
    norm = jnp.sqrt(jnp.sum(k_full * k_full, axis=-1, keepdims=True))
    Lk = k_full.shape[-1]
    if Lk >= L:
        k = k_full[..., :L]
    else:
        k = jnp.pad(k_full, ((0, 0), (0, 0), (0, L - Lk)))
    return (k / norm)[0]                          # (dims, L)


def _toeplitz_bank(k1d, P):
    """(C, L) 1-D causal kernels -> (L//P, C, P, P) bank of Toeplitz tiles.

    bank[d, c, i, j] = k1d[c, d*P + i - j] (0 where the lag is out of range),
    i.e. the block of the full causal Toeplitz matrix at block-diagonal offset
    d = t_blk - s_blk.  Only O(C*L*P) storage instead of O(C*L^2).
    """
    C, L = k1d.shape
    n_d = L // P
    d = jnp.arange(n_d)[:, None, None]
    i = jnp.arange(P)[None, :, None]
    j = jnp.arange(P)[None, None, :]
    lag = d * P + i - j                                        # (n_d, P, P)
    valid = (lag >= 0) & (lag < L)
    vals = jnp.take(k1d, jnp.clip(lag, 0, L - 1).reshape(-1), axis=1)
    vals = vals.reshape(C, n_d, P, P)
    vals = jnp.where(valid[None], vals, 0.0)
    return jnp.moveaxis(vals, 1, 0).astype(BF16)               # (n_d, C, P, P)


def _toeplitz(k):
    # Reference-only helper: full (C, L, L) causal Toeplitz matrix.
    L = k.shape[-1]
    idx = jnp.arange(L)
    diff = idx[:, None] - idx[None, :]
    T = jnp.take(k, jnp.clip(diff, 0, L - 1), axis=-1)
    return jnp.where((diff >= 0)[None, :, :], T, 0.0)


def _pick_block(L):
    # Production: 256-wide time tiles (v6e/v7x MXU granule); 128 also works and
    # already saturates v5e's 128-row MXU.
    for p in (256, 128):
        if L % p == 0:
            return p
    # TODO(synk): pad ragged L up to a multiple of 128; small/odd L falls back
    # to a single full-length block (fine for the demo shapes).
    return L


def _tpu_vmem_cap():
    try:
        return int(pltpu.get_tpu_info().vmem_capacity_bytes)
    except Exception:
        return 64 << 20   # v7x per-TensorCore VMEM = smallest across v5e/v6e/v7x


def _vmem_limit(est_bytes, cap_bytes):
    # Tile-derived scoped-VMEM budget: estimate + slack for in-body temporaries,
    # floored at the default scoped limit, capped below physical VMEM.
    return int(min(max(int(est_bytes) + (16 << 20), 32 << 20), (cap_bytes * 9) // 10))


def prepare_sgconv3(params, seq_len, head_dim):
    """One-time parameter preparation (weight packing + Toeplitz tile banks).

    Everything here depends only on the module parameters and L, so it is
    hoisted out of the per-step forward (review item: cache the GConv kernel /
    Toeplitz construction instead of rebuilding it every call).
    """
    op = params['w_in'].shape[0] // 2
    h = op // head_dim
    L = seq_len
    P = _pick_block(L)

    # --- GConv kernel construction ('cat' mode, linear interp) + first-forward
    #     kernel_norm, exactly as in GConv3.get_kernels_forward / forward. ---
    mult_key = jnp.linspace(2.0, 2.0, op).reshape(1, op, 1)   # multiplier_key buffer
    mult = jnp.linspace(2.0, 2.0, h).reshape(1, h, 1)         # multiplier buffer
    k_key = _prep_kernel(_get_kernels_forward_cat(mult_key, params['kernel_list_key']), L)  # (op, L)
    k_ = _prep_kernel(_get_kernels_forward_cat(mult, params['kernel_list']), L)             # (h, L)

    # Fold the D skips into the lag-0 taps: conv(x,k) + D*x == conv(x,k') with k'[0]=k[0]+D.
    k_key = k_key.at[:, 0].add(params['D_key'][0])
    k_ = k_.at[:, 0].add(params['D'][0])

    # Compact per-block-diagonal Toeplitz banks (O(C*L*P), not O(C*L^2)).
    # TODO(synk): build these tiles fully in-kernel from the 1-D kernels to drop
    # the bank's HBM footprint / read traffic as well.
    bank_key = _toeplitz_bank(k_key, P)                       # (n_d, op, Pt, Ps)
    bank_kv = _toeplitz_bank(k_, P)                           # (n_d, h, Pt, Ps)

    w_in_t = params['w_in'].T                                 # (hidden, 2*op)
    # output_linear: fold the (d2, h) -> (h_, d2) channel interleave into the
    # (pre-transposed) weight so the kernel's time-major matmul needs no perm.
    cm = jnp.arange(op)
    perm = (cm % head_dim) * h + (cm // head_dim)             # kernel channel -> torch channel

    return dict(
        w_in_a=w_in_t[:, :op].astype(BF16),
        w_in_g=w_in_t[:, op:].astype(BF16),
        b_in_a=params['b_in'][:op].reshape(1, op).astype(F32),
        b_in_g=params['b_in'][op:].reshape(1, op).astype(F32),
        w_qkv=jnp.concatenate([params['w_q'], params['w_k'], params['w_v']],
                              axis=0).astype(BF16),           # (3*op, op)
        b_qkv=jnp.concatenate([params['b_q'], params['b_k'], params['b_v']],
                              axis=0).reshape(3 * op, 1).astype(F32),
        bank_key=bank_key,
        bank_kv=bank_kv,
        w_out_t=params['w_out'][:, perm].T.astype(BF16),      # (op_in, op_out)
        b_out=params['b_out'].reshape(1, op).astype(F32),
    )


def sgconv3_forward(x, prep, single_buffer_consts=True):
    """x: (B, L, hidden) float32. Returns (B, L, op) = SGConv3.forward(x)[0]."""
    B, L, hidden = x.shape
    op = prep['w_in_a'].shape[1]
    h = prep['bank_kv'].shape[1]
    head_dim = op // h
    P = prep['bank_kv'].shape[2]
    n_blk = L // P
    assert n_blk * P == L and prep['bank_kv'].shape[0] == n_blk

    cap = _tpu_vmem_cap()
    bs, fs = 2, 4                                              # bf16 / f32 item sizes
    n_cbuf = 1 if single_buffer_consts else 2

    def const_spec(arr):
        nd = arr.ndim
        if single_buffer_consts:
            return pl.BlockSpec(arr.shape, lambda *_: (0,) * nd,
                                pipeline_mode=pl.Buffered(1))
        return pl.BlockSpec(arr.shape, lambda *_: (0,) * nd)

    x_b = x.astype(BF16)

    # ---- call A: in_proj + GLU + fused q|k|v projection (channel-major out) ----
    consts_a = (prep['w_in_a'], prep['w_in_g'], prep['b_in_a'], prep['b_in_g'],
                prep['w_qkv'], prep['b_qkv'])
    est_a = (2 * (P * hidden + 3 * op * P) * bs
             + n_cbuf * sum(a.size * a.dtype.itemsize for a in consts_a))
    qkv_cm = pl.pallas_call(
        _proj_kernel,
        out_shape=jax.ShapeDtypeStruct((B, 3 * op, L), BF16),
        grid_spec=pltpu.PrefetchScalarGridSpec(
            num_scalar_prefetch=0,
            grid=(B, n_blk),
            in_specs=[pl.BlockSpec((1, P, hidden), lambda b, t: (b, t, 0))] +
                     [const_spec(a) for a in consts_a],
            out_specs=pl.BlockSpec((1, 3 * op, P), lambda b, t: (b, 0, t)),
        ),
        compiler_params=pltpu.CompilerParams(
            dimension_semantics=("parallel", "parallel"),
            vmem_limit_bytes=_vmem_limit(est_a, cap)),
    )(x_b, *consts_a)

    # ---- call B: depthwise causal conv of `key` with k_key (Toeplitz tiles) ----
    est_b = 2 * (op * P * P * bs + 2 * op * P * bs) + op * P * fs
    key_cm = pl.pallas_call(
        _key_conv_kernel,
        out_shape=jax.ShapeDtypeStruct((B, op, L), BF16),
        grid_spec=pltpu.PrefetchScalarGridSpec(
            num_scalar_prefetch=0,
            grid=(B, n_blk, n_blk),
            in_specs=[
                # k = rows [op, 2op) of qkv_cm, at the s-block (clamped so that
                # skipped non-causal steps re-request the same block -> DMA elided).
                pl.BlockSpec((1, op, P),
                             lambda b, t, s: (b, 1, jnp.minimum(s, t))),
                # Toeplitz tile for block-diagonal d = t - s (clamped when skipped).
                pl.BlockSpec((1, op, P, P),
                             lambda b, t, s: (jnp.maximum(t - s, 0), 0, 0, 0)),
            ],
            out_specs=pl.BlockSpec((1, op, P), lambda b, t, s: (b, 0, t)),
            scratch_shapes=[pltpu.VMEM((op, P), F32)],
        ),
        compiler_params=pltpu.CompilerParams(
            dimension_semantics=("parallel", "parallel", "arbitrary"),
            vmem_limit_bytes=_vmem_limit(est_b, cap)),
    )(qkv_cm, prep['bank_key'])

    # ---- call C: kv outer product + causal conv + gating + epilogue ----
    consts_c = (prep['w_out_t'], prep['b_out'])
    est_c = (2 * (h * P * P * bs + 3 * op * P * bs + P * op * fs)
             + op * head_dim * P * fs                      # f32 accumulator
             + 4 * op * head_dim * P * (bs + fs)           # in-body kv / y4 temporaries
             + n_cbuf * sum(a.size * a.dtype.itemsize for a in consts_c))
    out_tm = pl.pallas_call(
        partial(_gconv_kernel, h=h, head_dim=head_dim, op=op),
        out_shape=jax.ShapeDtypeStruct((B, L, op), F32),
        grid_spec=pltpu.PrefetchScalarGridSpec(
            num_scalar_prefetch=0,
            grid=(B, n_blk, n_blk),
            in_specs=[
                pl.BlockSpec((1, op, P),
                             lambda b, t, s: (b, 0, jnp.minimum(s, t))),   # key (post conv)
                pl.BlockSpec((1, op, P),
                             lambda b, t, s: (b, 2, jnp.minimum(s, t))),   # value rows of qkv
                pl.BlockSpec((1, op, P), lambda b, t, s: (b, 0, t)),       # query rows of qkv
                pl.BlockSpec((1, h, P, P),
                             lambda b, t, s: (jnp.maximum(t - s, 0), 0, 0, 0)),
                const_spec(prep['w_out_t']),
                const_spec(prep['b_out']),
            ],
            out_specs=pl.BlockSpec((1, P, op), lambda b, t, s: (b, t, 0)),
            scratch_shapes=[pltpu.VMEM((h, head_dim * head_dim, P), F32)],
        ),
        compiler_params=pltpu.CompilerParams(
            dimension_semantics=("parallel", "parallel", "arbitrary"),
            vmem_limit_bytes=_vmem_limit(est_c, cap)),
    )(key_cm, qkv_cm, qkv_cm, prep['bank_kv'], *consts_c)

    return out_tm                                              # (B, L, op) time-major


# ------------------------ pure-JAX f32 reference (check) ----------------------

def sgconv3_reference(x, p, *, head_dim):
    B, L, _ = x.shape
    op = p['w_in'].shape[0] // 2
    h = op // head_dim
    z = x @ p['w_in'].T + p['b_in']
    u = z[..., :op] * jax.nn.sigmoid(z[..., op:])             # (B, L, op)
    q = (u @ p['w_q'].T + p['b_q']).transpose(0, 2, 1)        # (B, op, L)
    k = (u @ p['w_k'].T + p['b_k']).transpose(0, 2, 1)
    v = (u @ p['w_v'].T + p['b_v']).transpose(0, 2, 1)
    mult_key = jnp.linspace(2.0, 2.0, op).reshape(1, op, 1)
    mult = jnp.linspace(2.0, 2.0, h).reshape(1, h, 1)
    k_key = _prep_kernel(_get_kernels_forward_cat(mult_key, p['kernel_list_key']), L)
    k_ = _prep_kernel(_get_kernels_forward_cat(mult, p['kernel_list']), L)
    T_key = _toeplitz(k_key)
    T_k = _toeplitz(k_)
    key = jnp.einsum('cts,bcs->bct', T_key, k) + k * p['D_key'].reshape(1, op, 1)
    key_r = key.reshape(B, h, head_dim, L)                    # [b, h, d1, l]
    val_r = v.reshape(B, h, head_dim, L)                      # [b, h, d2, l]
    q_r = q.reshape(B, h, head_dim, L)
    kv = key_r[:, :, :, None, :] * val_r[:, :, None, :, :]    # (B, h, d1, d2, L)
    y = jnp.einsum('hts,bhijs->bhijt', T_k, kv) + kv * p['D'].reshape(1, h, 1, 1, 1)
    gated = jnp.einsum('bhit,bhijt->bhjt', q_r, y)            # (B, h, d2, L)
    gated = jax.nn.gelu(gated, approximate=False)
    y_pt = gated.transpose(0, 2, 1, 3).reshape(B, op, L)      # channel = d2*h + h_
    out = y_pt.transpose(0, 2, 1) @ p['w_out'].T + p['b_out']
    return jax.nn.gelu(out, approximate=False)


# ----------------------------------- main -------------------------------------

if __name__ == "__main__":
    # Small config consistent with SGConv3.__init__ (production shapes should
    # use hidden/op multiples of 128 and L a multiple of 128/256; the tiling
    # logic above targets those, the demo degenerates to full-dim blocks).
    hidden_size = 32
    total_heads = 4
    op_heads = 2
    head_size = hidden_size // total_heads          # 8
    op_size = op_heads * head_size                  # 16  (GConv3 d_model)
    h = op_size // op_heads                         # 8
    kernel_size = 8                                 # arch_config.pick('kernel_size')
    l_max = 32                                      # hf_config.max_position_embeddings
    init_scale = 0
    num_scales = 1 + math.ceil(math.log2(l_max / kernel_size)) - init_scale   # 3
    B, S = 2, 16

    key = jax.random.PRNGKey(0)
    ks = jax.random.split(key, 24)

    def nrm(k, shape, scale=1.0):
        return scale * jax.random.normal(k, shape, jnp.float32)

    params = {
        # SGConv3.in_proj = Linear(hidden, 2*op_size) + GLU
        'w_in': nrm(ks[0], (2 * op_size, hidden_size), 0.1),
        'b_in': nrm(ks[1], (2 * op_size,), 0.1),
        # GConv3 q/k/v projections: Linear(op_size, op_size)
        'w_q': nrm(ks[2], (op_size, op_size), 0.1),
        'b_q': nrm(ks[3], (op_size,), 0.1),
        'w_k': nrm(ks[4], (op_size, op_size), 0.1),
        'b_k': nrm(ks[5], (op_size,), 0.1),
        'w_v': nrm(ks[6], (op_size, op_size), 0.1),
        'b_v': nrm(ks[7], (op_size,), 0.1),
        # kernel_list_key: num_scales x (channels=1, op_size, kernel_size)
        'kernel_list_key': [nrm(ks[8 + i], (1, op_size, kernel_size)) for i in range(num_scales)],
        # kernel_list: num_scales x (channels=1, h, kernel_size)
        'kernel_list': [nrm(ks[12 + i], (1, h, kernel_size)) for i in range(num_scales)],
        # D_key: (1, op_size), D: (1, h)
        'D_key': nrm(ks[16], (1, op_size)),
        'D': nrm(ks[17], (1, h)),
        # GConv.output_linear: Linear(op_size, op_size)   (pw_linear unused in forward)
        'w_out': nrm(ks[18], (op_size, op_size), 0.1),
        'b_out': nrm(ks[19], (op_size,), 0.1),
    }
    # TODO(synk): kernel_norm buffers are computed on first forward (done in
    # prepare); dropout=0 / ln=False / norm=Identity paths are folded away.

    x = jax.random.normal(ks[20], (B, S, hidden_size), jnp.float32)

    # One-time parameter / Toeplitz-bank preparation (hoisted out of forward).
    prep = prepare_sgconv3(params, S, head_dim=op_heads)

    fwd = jax.jit(sgconv3_forward, static_argnames=("single_buffer_consts",))
    try:
        out = jax.block_until_ready(fwd(x, prep, single_buffer_consts=True))
    except Exception:
        # Fallback if pl.Buffered(1) single-buffering is rejected by this jax
        # version: default double-buffered constants (functionally identical).
        out = jax.block_until_ready(fwd(x, prep, single_buffer_consts=False))

    assert out.shape == (B, S, op_size), out.shape
    assert bool(jnp.all(jnp.isfinite(out)))

    # loose tolerance: bf16 matmul/conv operands + tanh-GELU vs f32/erf reference
    # TODO(synk): re-validate this tolerance at production sequence lengths.
    ref = sgconv3_reference(x, params, head_dim=op_heads)
    err = float(jnp.max(jnp.abs(out - ref)))
    assert err < 5e-2, f"max abs error vs f32 reference: {err}"

    print("KERNEL_OK")
</pallas_src>

<mosaic_0001>
module attributes {stable_mosaic.version = 11 : i64} {
  func.func @_proj_kernel(%arg0: i32, %arg1: i32, %arg2: memref<1x16x32xbf16, #tpu.memory_space<vmem>>, %arg3: memref<32x16xbf16, #tpu.memory_space<vmem>>, %arg4: memref<32x16xbf16, #tpu.memory_space<vmem>>, %arg5: memref<1x16xf32, #tpu.memory_space<vmem>>, %arg6: memref<1x16xf32, #tpu.memory_space<vmem>>, %arg7: memref<48x16xbf16, #tpu.memory_space<vmem>>, %arg8: memref<48x1xf32, #tpu.memory_space<vmem>>, %arg9: memref<1x48x16xbf16, #tpu.memory_space<vmem>>) attributes {dimension_semantics = [#tpu.dimension_semantics<parallel>, #tpu.dimension_semantics<parallel>], iteration_bounds = array<i64: 2, 1>, scalar_prefetch = 0 : i64, scratch_operands = 0 : i64, tpu.core_type = #tpu.core_type<tc>, window_params = [{transform_indices = @transform_0, window_bounds = array<i64: 1, 16, 32>}, {pipeline_mode = #tpu.pipeline_mode<synchronous>, transform_indices = @transform_1, window_bounds = array<i64: 32, 16>}, {pipeline_mode = #tpu.pipeline_mode<synchronous>, transform_indices = @transform_2, window_bounds = array<i64: 32, 16>}, {pipeline_mode = #tpu.pipeline_mode<synchronous>, transform_indices = @transform_3, window_bounds = array<i64: 1, 16>}, {pipeline_mode = #tpu.pipeline_mode<synchronous>, transform_indices = @transform_4, window_bounds = array<i64: 1, 16>}, {pipeline_mode = #tpu.pipeline_mode<synchronous>, transform_indices = @transform_5, window_bounds = array<i64: 48, 16>}, {pipeline_mode = #tpu.pipeline_mode<synchronous>, transform_indices = @transform_6, window_bounds = array<i64: 48, 1>}, {transform_indices = @transform_7, window_bounds = array<i64: 1, 48, 16>}]} {
    %c0 = arith.constant 0 : index
    %c0_0 = arith.constant 0 : index
    %c0_1 = arith.constant 0 : index
    %0 = vector.load %arg2[%c0, %c0_0, %c0_1] : memref<1x16x32xbf16, #tpu.memory_space<vmem>>, vector<1x16x32xbf16>
    %1 = vector.shape_cast %0 : vector<1x16x32xbf16> to vector<16x32xbf16>
    %c0_2 = arith.constant 0 : index
    %c0_3 = arith.constant 0 : index
    %2 = vector.load %arg3[%c0_2, %c0_3] : memref<32x16xbf16, #tpu.memory_space<vmem>>, vector<32x16xbf16>
    %cst = arith.constant dense<0.000000e+00> : vector<16x16xf32>
    %3 = tpu.matmul %1, %2, %cst {dimension_numbers = #tpu.dot_dimension_numbers<[1], [0], [0], [1], [0, 0, 1, 1], [], []>} : vector<16x32xbf16>, vector<32x16xbf16>, vector<16x16xf32> -> vector<16x16xf32>
    %c0_4 = arith.constant 0 : index
    %c0_5 = arith.constant 0 : index
    %4 = vector.load %arg5[%c0_4, %c0_5] : memref<1x16xf32, #tpu.memory_space<vmem>>, vector<1x16xf32>
    %5 = vector.broadcast %4 : vector<1x16xf32> to vector<16x16xf32>
    %6 = arith.addf %3, %5 : vector<16x16xf32>
    %c0_6 = arith.constant 0 : index
    %c0_7 = arith.constant 0 : index
    %7 = vector.load %arg4[%c0_6, %c0_7] : memref<32x16xbf16, #tpu.memory_space<vmem>>, vector<32x16xbf16>
    %cst_8 = arith.constant dense<0.000000e+00> : vector<16x16xf32>
    %8 = tpu.matmul %1, %7, %cst_8 {dimension_numbers = #tpu.dot_dimension_numbers<[1], [0], [0], [1], [0, 0, 1, 1], [], []>} : vector<16x32xbf16>, vector<32x16xbf16>, vector<16x16xf32> -> vector<16x16xf32>
    %c0_9 = arith.constant 0 : index
    %c0_10 = arith.constant 0 : index
    %9 = vector.load %arg6[%c0_9, %c0_10] : memref<1x16xf32, #tpu.memory_space<vmem>>, vector<1x16xf32>
    %10 = vector.broadcast %9 : vector<1x16xf32> to vector<16x16xf32>
    %11 = arith.addf %8, %10 : vector<16x16xf32>
    %12 = arith.negf %11 : vector<16x16xf32>
    %13 = math.exp %12 : vector<16x16xf32>
    %cst_11 = arith.constant 1.000000e+00 : f32
    %14 = vector.broadcast %cst_11 : f32 to vector<16x16xf32>
    %15 = arith.addf %14, %13 : vector<16x16xf32>
    %16 = arith.divf %14, %15 : vector<16x16xf32>
    %17 = arith.mulf %6, %16 : vector<16x16xf32>
    %18 = arith.truncf %17 : vector<16x16xf32> to vector<16x16xbf16>
    %c0_12 = arith.constant 0 : index
    %c0_13 = arith.constant 0 : index
    %19 = vector.load %arg7[%c0_12, %c0_13] : memref<48x16xbf16, #tpu.memory_space<vmem>>, vector<48x16xbf16>
    %cst_14 = arith.constant dense<0.000000e+00> : vector<48x16xf32>
    %20 = tpu.matmul %19, %18, %cst_14 {dimension_numbers = #tpu.dot_dimension_numbers<[1], [1], [0], [0], [0, 0, 1, 0], [], []>} : vector<48x16xbf16>, vector<16x16xbf16>, vector<48x16xf32> -> vector<48x16xf32>
    %c0_15 = arith.constant 0 : index
    %c0_16 = arith.constant 0 : index
    %21 = vector.load %arg8[%c0_15, %c0_16] : memref<48x1xf32, #tpu.memory_space<vmem>>, vector<48x1xf32>
    %22 = vector.broadcast %21 : vector<48x1xf32> to vector<48x16xf32>
    %23 = arith.addf %20, %22 : vector<48x16xf32>
    %24 = arith.truncf %23 : vector<48x16xf32> to vector<48x16xbf16>
    %c0_17 = arith.constant 0 : index
    %c0_18 = arith.constant 0 : index
    %c0_19 = arith.constant 0 : index
    %25 = vector.load %arg9[%c0_17, %c0_18, %c0_19] : memref<1x48x16xbf16, #tpu.memory_space<vmem>>, vector<1x48x16xbf16>
    %26 = vector.shape_cast %25 : vector<1x48x16xbf16> to vector<48x16xbf16>
    %27 = vector.shape_cast %24 : vector<48x16xbf16> to vector<1x48x16xbf16>
    tpu.vector_store %arg9[%c0_17, %c0_18, %c0_19], %27 {strides = array<i32>} : memref<1x48x16xbf16, #tpu.memory_space<vmem>>, vector<1x48x16xbf16>,
    return
  }
  func.func @transform_0(%arg0: i32, %arg1: i32) -> (i32, i32, i32) {
    %c0_i32 = arith.constant 0 : i32
    %c0_i32_0 = arith.constant 0 : i32
    return %arg0, %arg1, %c0_i32 : i32, i32, i32
  }
  func.func @transform_1(%arg0: i32, %arg1: i32) -> (i32, i32) {
    %c0_i32 = arith.constant 0 : i32
    %c0_i32_0 = arith.constant 0 : i32
    %c0_i32_1 = arith.constant 0 : i32
    return %c0_i32, %c0_i32_0 : i32, i32
  }
  func.func @transform_2(%arg0: i32, %arg1: i32) -> (i32, i32) {
    %c0_i32 = arith.constant 0 : i32
    %c0_i32_0 = arith.constant 0 : i32
    %c0_i32_1 = arith.constant 0 : i32
    return %c0_i32, %c0_i32_0 : i32, i32
  }
  func.func @transform_3(%arg0: i32, %arg1: i32) -> (i32, i32) {
    %c0_i32 = arith.constant 0 : i32
    %c0_i32_0 = arith.constant 0 : i32
    %c0_i32_1 = arith.constant 0 : i32
    return %c0_i32, %c0_i32_0 : i32, i32
  }
  func.func @transform_4(%arg0: i32, %arg1: i32) -> (i32, i32) {
    %c0_i32 = arith.constant 0 : i32
    %c0_i32_0 = arith.constant 0 : i32
    %c0_i32_1 = arith.constant 0 : i32
    return %c0_i32, %c0_i32_0 : i32, i32
  }
  func.func @transform_5(%arg0: i32, %arg1: i32) -> (i32, i32) {
    %c0_i32 = arith.constant 0 : i32
    %c0_i32_0 = arith.constant 0 : i32
    %c0_i32_1 = arith.constant 0 : i32
    return %c0_i32, %c0_i32_0 : i32, i32
  }
  func.func @transform_6(%arg0: i32, %arg1: i32) -> (i32, i32) {
    %c0_i32 = arith.constant 0 : i32
    %c0_i32_0 = arith.constant 0 : i32
    %c0_i32_1 = arith.constant 0 : i32
    return %c0_i32, %c0_i32_0 : i32, i32
  }
  func.func @transform_7(%arg0: i32, %arg1: i32) -> (i32, i32, i32) {
    %c0_i32 = arith.constant 0 : i32
    %c0_i32_0 = arith.constant 0 : i32
    return %arg0, %c0_i32, %arg1 : i32, i32, i32
  }
}

module attributes {stable_mosaic.version = 11 : i64} {
  func.func @_key_conv_kernel(%arg0: i32, %arg1: i32, %arg2: i32, %arg3: memref<1x16x16xbf16, #tpu.memory_space<vmem>>, %arg4: memref<1x16x16x16xbf16, #tpu.memory_space<vmem>>, %arg5: memref<1x16x16xbf16, #tpu.memory_space<vmem>>, %arg6: memref<16x16xf32, #tpu.memory_space<vmem>>) attributes {dimension_semantics = [#tpu.dimension_semantics<parallel>, #tpu.dimension_semantics<parallel>, #tpu.dimension_semantics<arbitrary>], iteration_bounds = array<i64: 2, 1, 1>, scalar_prefetch = 0 : i64, scratch_operands = 1 : i64, tpu.core_type = #tpu.core_type<tc>, window_params = [{transform_indices = @transform_0, window_bounds = array<i64: 1, 16, 16>}, {transform_indices = @transform_1, window_bounds = array<i64: 1, 16, 16, 16>}, {transform_indices = @transform_2, window_bounds = array<i64: 1, 16, 16>}]} {
    %c0_i32 = arith.constant 0 : i32
    %0 = arith.cmpi eq, %arg2, %c0_i32 : i32
    %1 = arith.extui %0 : i1 to i32
    %c0_i32_0 = arith.constant 0 : i32
    %2 = arith.cmpi ne, %1, %c0_i32_0 : i32
    scf.if %2 {
      %cst = arith.constant 0.000000e+00 : f32
      %9 = vector.broadcast %cst : f32 to vector<16x16xf32>
      %c0 = arith.constant 0 : index
      %c0_4 = arith.constant 0 : index
      %10 = vector.load %arg6[%c0, %c0_4] : memref<16x16xf32, #tpu.memory_space<vmem>>, vector<16x16xf32>
      tpu.vector_store %arg6[%c0, %c0_4], %9 {strides = array<i32>} : memref<16x16xf32, #tpu.memory_space<vmem>>, vector<16x16xf32>,
    } else {
    }
    %3 = arith.cmpi sle, %arg2, %arg1 : i32
    %4 = arith.extui %3 : i1 to i32
    %c0_i32_1 = arith.constant 0 : i32
    %5 = arith.cmpi ne, %4, %c0_i32_1 : i32
    scf.if %5 {
      %c0 = arith.constant 0 : index
      %c0_4 = arith.constant 0 : index
      %c0_5 = arith.constant 0 : index
      %9 = vector.load %arg3[%c0, %c0_4, %c0_5] : memref<1x16x16xbf16, #tpu.memory_space<vmem>>, vector<1x16x16xbf16>
      %10 = vector.shape_cast %9 : vector<1x16x16xbf16> to vector<16x16xbf16>
      %11 = vector.shape_cast %10 : vector<16x16xbf16> to vector<16x1x16xbf16>
      %c0_6 = arith.constant 0 : index
      %c0_7 = arith.constant 0 : index
      %c0_8 = arith.constant 0 : index
      %c0_9 = arith.constant 0 : index
      %12 = vector.load %arg4[%c0_6, %c0_7, %c0_8, %c0_9] : memref<1x16x16x16xbf16, #tpu.memory_space<vmem>>, vector<1x16x16x16xbf16>
      %13 = vector.shape_cast %12 : vector<1x16x16x16xbf16> to vector<16x16x16xbf16>
      %cst = arith.constant dense<0.000000e+00> : vector<16x1x16xf32>
      %14 = tpu.matmul %11, %13, %cst {dimension_numbers = #tpu.dot_dimension_numbers<[2], [2], [1], [1], [0, 0, 0, 1, 1, 1], [0], [0]>} : vector<16x1x16xbf16>, vector<16x16x16xbf16>, vector<16x1x16xf32> -> vector<16x1x16xf32>
      %c0_10 = arith.constant 0 : index
      %c0_11 = arith.constant 0 : index
      %15 = vector.load %arg6[%c0_10, %c0_11] : memref<16x16xf32, #tpu.memory_space<vmem>>, vector<16x16xf32>
      %16 = vector.shape_cast %14 : vector<16x1x16xf32> to vector<16x16xf32>
      %17 = arith.addf %15, %16 : vector<16x16xf32>
      %c0_12 = arith.constant 0 : index
      %c0_13 = arith.constant 0 : index
      %18 = vector.load %arg6[%c0_12, %c0_13] : memref<16x16xf32, #tpu.memory_space<vmem>>, vector<16x16xf32>
      tpu.vector_store %arg6[%c0_12, %c0_13], %17 {strides = array<i32>} : memref<16x16xf32, #tpu.memory_space<vmem>>, vector<16x16xf32>,
    } else {
    }
    %c0_i32_2 = arith.constant 0 : i32
    %6 = arith.cmpi eq, %arg2, %c0_i32_2 : i32
    %7 = arith.extui %6 : i1 to i32
    %c0_i32_3 = arith.constant 0 : i32
    %8 = arith.cmpi ne, %7, %c0_i32_3 : i32
    scf.if %8 {
      %c0 = arith.constant 0 : index
      %c0_4 = arith.constant 0 : index
      %9 = vector.load %arg6[%c0, %c0_4] : memref<16x16xf32, #tpu.memory_space<vmem>>, vector<16x16xf32>
      %10 = arith.truncf %9 : vector<16x16xf32> to vector<16x16xbf16>
      %c0_5 = arith.constant 0 : index
      %c0_6 = arith.constant 0 : index
      %c0_7 = arith.constant 0 : index
      %11 = vector.load %arg5[%c0_5, %c0_6, %c0_7] : memref<1x16x16xbf16, #tpu.memory_space<vmem>>, vector<1x16x16xbf16>
      %12 = vector.shape_cast %11 : vector<1x16x16xbf16> to vector<16x16xbf16>
      %13 = vector.shape_cast %10 : vector<16x16xbf16> to vector<1x16x16xbf16>
      tpu.vector_store %arg5[%c0_5, %c0_6, %c0_7], %13 {strides = array<i32>} : memref<1x16x16xbf16, #tpu.memory_space<vmem>>, vector<1x16x16xbf16>,
    } else {
    }
    return
  }
  func.func @transform_0(%arg0: i32, %arg1: i32, %arg2: i32) -> (i32, i32, i32) {
    %0 = arith.minsi %arg2, %arg1 : i32
    %c1_i32 = arith.constant 1 : i32
    %c0_i32 = arith.constant 0 : i32
    return %arg0, %c1_i32, %0 : i32, i32, i32
  }
  func.func @transform_1(%arg0: i32, %arg1: i32, %arg2: i32) -> (i32, i32, i32, i32) {
    %0 = arith.subi %arg1, %arg2 : i32
    %c0_i32 = arith.constant 0 : i32
    %1 = arith.maxsi %0, %c0_i32 : i32
    %c0_i32_0 = arith.constant 0 : i32
    %c0_i32_1 = arith.constant 0 : i32
    %c0_i32_2 = arith.constant 0 : i32
    %c0_i32_3 = arith.constant 0 : i32
    return %1, %c0_i32_0, %c0_i32_1, %c0_i32_2 : i32, i32, i32, i32
  }
  func.func @transform_2(%arg0: i32, %arg1: i32, %arg2: i32) -> (i32, i32, i32) {
    %c0_i32 = arith.constant 0 : i32
    %c0_i32_0 = arith.constant 0 : i32
    return %arg0, %c0_i32, %arg1 : i32, i32, i32
  }
}

module attributes {stable_mosaic.version = 11 : i64} {
  func.func @_gconv_kernel(%arg0: i32, %arg1: i32, %arg2: i32, %arg3: memref<1x16x16xbf16, #tpu.memory_space<vmem>>, %arg4: memref<1x16x16xbf16, #tpu.memory_space<vmem>>, %arg5: memref<1x16x16xbf16, #tpu.memory_space<vmem>>, %arg6: memref<1x8x16x16xbf16, #tpu.memory_space<vmem>>, %arg7: memref<16x16xbf16, #tpu.memory_space<vmem>>, %arg8: memref<1x16xf32, #tpu.memory_space<vmem>>, %arg9: memref<1x16x16xf32, #tpu.memory_space<vmem>>, %arg10: memref<8x4x16xf32, #tpu.memory_space<vmem>>) attributes {dimension_semantics = [#tpu.dimension_semantics<parallel>, #tpu.dimension_semantics<parallel>, #tpu.dimension_semantics<arbitrary>], iteration_bounds = array<i64: 2, 1, 1>, scalar_prefetch = 0 : i64, scratch_operands = 1 : i64, tpu.core_type = #tpu.core_type<tc>, window_params = [{transform_indices = @transform_0, window_bounds = array<i64: 1, 16, 16>}, {transform_indices = @transform_1, window_bounds = array<i64: 1, 16, 16>}, {transform_indices = @transform_2, window_bounds = array<i64: 1, 16, 16>}, {transform_indices = @transform_3, window_bounds = array<i64: 1, 8, 16, 16>}, {pipeline_mode = #tpu.pipeline_mode<synchronous>, transform_indices = @transform_4, window_bounds = array<i64: 16, 16>}, {pipeline_mode = #tpu.pipeline_mode<synchronous>, transform_indices = @transform_5, window_bounds = array<i64: 1, 16>}, {transform_indices = @transform_6, window_bounds = array<i64: 1, 16, 16>}]} {
    %c0_i32 = arith.constant 0 : i32
    %0 = arith.cmpi eq, %arg2, %c0_i32 : i32
    %1 = arith.extui %0 : i1 to i32
    %c0_i32_0 = arith.constant 0 : i32
    %2 = arith.cmpi ne, %1, %c0_i32_0 : i32
    scf.if %2 {
      %cst = arith.constant 0.000000e+00 : f32
      %9 = vector.broadcast %cst : f32 to vector<8x4x16xf32>
      %c0 = arith.constant 0 : index
      %c0_4 = arith.constant 0 : index
      %c0_5 = arith.constant 0 : index
      %10 = vector.load %arg10[%c0, %c0_4, %c0_5] : memref<8x4x16xf32, #tpu.memory_space<vmem>>, vector<8x4x16xf32>
      tpu.vector_store %arg10[%c0, %c0_4, %c0_5], %9 {strides = array<i32>} : memref<8x4x16xf32, #tpu.memory_space<vmem>>, vector<8x4x16xf32>,
    } else {
    }
    %3 = arith.cmpi sle, %arg2, %arg1 : i32
    %4 = arith.extui %3 : i1 to i32
    %c0_i32_1 = arith.constant 0 : i32
    %5 = arith.cmpi ne, %4, %c0_i32_1 : i32
    scf.if %5 {
      %c0 = arith.constant 0 : index
      %c0_4 = arith.constant 0 : index
      %c0_5 = arith.constant 0 : index
      %9 = vector.load %arg3[%c0, %c0_4, %c0_5] : memref<1x16x16xbf16, #tpu.memory_space<vmem>>, vector<1x16x16xbf16>
      %10 = vector.shape_cast %9 : vector<1x16x16xbf16> to vector<16x16xbf16>
      %c0_6 = arith.constant 0 : index
      %c0_7 = arith.constant 0 : index
      %c0_8 = arith.constant 0 : index
      %11 = vector.load %arg4[%c0_6, %c0_7, %c0_8] : memref<1x16x16xbf16, #tpu.memory_space<vmem>>, vector<1x16x16xbf16>
      %12 = vector.shape_cast %11 : vector<1x16x16xbf16> to vector<16x16xbf16>
      %13 = vector.shape_cast %10 : vector<16x16xbf16> to vector<8x2x1x16xbf16>
      %14 = vector.shape_cast %12 : vector<16x16xbf16> to vector<8x1x2x16xbf16>
      %15 = vector.broadcast %13 : vector<8x2x1x16xbf16> to vector<8x2x2x16xbf16>
      %16 = vector.broadcast %14 : vector<8x1x2x16xbf16> to vector<8x2x2x16xbf16>
      %17 = arith.mulf %15, %16 : vector<8x2x2x16xbf16>
      %18 = vector.shape_cast %17 : vector<8x2x2x16xbf16> to vector<8x4x16xbf16>
      %c0_9 = arith.constant 0 : index
      %c0_10 = arith.constant 0 : index
      %c0_11 = arith.constant 0 : index
      %19 = vector.load %arg10[%c0_9, %c0_10, %c0_11] : memref<8x4x16xf32, #tpu.memory_space<vmem>>, vector<8x4x16xf32>
      %c0_12 = arith.constant 0 : index
      %c0_13 = arith.constant 0 : index
      %c0_14 = arith.constant 0 : index
      %c0_15 = arith.constant 0 : index
      %20 = vector.load %arg6[%c0_12, %c0_13, %c0_14, %c0_15] : memref<1x8x16x16xbf16, #tpu.memory_space<vmem>>, vector<1x8x16x16xbf16>
      %21 = vector.shape_cast %20 : vector<1x8x16x16xbf16> to vector<8x16x16xbf16>
      %cst = arith.constant dense<0.000000e+00> : vector<8x4x16xf32>
      %22 = tpu.matmul %18, %21, %cst {dimension_numbers = #tpu.dot_dimension_numbers<[2], [2], [1], [1], [0, 0, 0, 1, 1, 1], [0], [0]>} : vector<8x4x16xbf16>, vector<8x16x16xbf16>, vector<8x4x16xf32> -> vector<8x4x16xf32>
      %23 = arith.addf %19, %22 : vector<8x4x16xf32>
      %c0_16 = arith.constant 0 : index
      %c0_17 = arith.constant 0 : index
      %c0_18 = arith.constant 0 : index
      %24 = vector.load %arg10[%c0_16, %c0_17, %c0_18] : memref<8x4x16xf32, #tpu.memory_space<vmem>>, vector<8x4x16xf32>
      tpu.vector_store %arg10[%c0_16, %c0_17, %c0_18], %23 {strides = array<i32>} : memref<8x4x16xf32, #tpu.memory_space<vmem>>, vector<8x4x16xf32>,
    } else {
    }
    %c0_i32_2 = arith.constant 0 : i32
    %6 = arith.cmpi eq, %arg2, %c0_i32_2 : i32
    %7 = arith.extui %6 : i1 to i32
    %c0_i32_3 = arith.constant 0 : i32
    %8 = arith.cmpi ne, %7, %c0_i32_3 : i32
    scf.if %8 {
      %c0 = arith.constant 0 : index
      %c0_4 = arith.constant 0 : index
      %c0_5 = arith.constant 0 : index
      %9 = vector.load %arg10[%c0, %c0_4, %c0_5] : memref<8x4x16xf32, #tpu.memory_space<vmem>>, vector<8x4x16xf32>
      %10 = vector.shape_cast %9 : vector<8x4x16xf32> to vector<8x2x2x16xf32>
      %c0_6 = arith.constant 0 : index
      %c0_7 = arith.constant 0 : index
      %c0_8 = arith.constant 0 : index
      %11 = vector.load %arg5[%c0_6, %c0_7, %c0_8] : memref<1x16x16xbf16, #tpu.memory_space<vmem>>, vector<1x16x16xbf16>
      %12 = vector.shape_cast %11 : vector<1x16x16xbf16> to vector<16x16xbf16>
      %13 = arith.extf %12 : vector<16x16xbf16> to vector<16x16xf32>
      %14 = vector.shape_cast %13 : vector<16x16xf32> to vector<8x2x1x16xf32>
      %15 = vector.broadcast %14 : vector<8x2x1x16xf32> to vector<8x2x2x16xf32>
      %16 = arith.mulf %15, %10 : vector<8x2x2x16xf32>
      %cst = arith.constant dense<0.000000e+00> : vector<8x2x16xf32>
      %17 = vector.multi_reduction <add>, %16, %cst [1] : vector<8x2x2x16xf32> to vector<8x2x16xf32>
      %cst_9 = arith.constant 5.000000e-01 : f32
      %18 = vector.broadcast %cst_9 : f32 to vector<8x2x16xf32>
      %19 = arith.mulf %18, %17 : vector<8x2x16xf32>
      %cst_10 = arith.constant 4.471500e-02 : f32
      %20 = vector.broadcast %cst_10 : f32 to vector<8x2x16xf32>
      %21 = arith.mulf %20, %17 : vector<8x2x16xf32>
      %22 = arith.mulf %21, %17 : vector<8x2x16xf32>
      %23 = arith.mulf %22, %17 : vector<8x2x16xf32>
      %24 = arith.addf %17, %23 : vector<8x2x16xf32>
      %cst_11 = arith.constant 0.797884583 : f32
      %25 = vector.broadcast %cst_11 : f32 to vector<8x2x16xf32>
      %26 = arith.mulf %25, %24 : vector<8x2x16xf32>
      %27 = math.tanh %26 : vector<8x2x16xf32>
      %cst_12 = arith.constant 1.000000e+00 : f32
      %28 = vector.broadcast %cst_12 : f32 to vector<8x2x16xf32>
      %29 = arith.addf %28, %27 : vector<8x2x16xf32>
      %30 = arith.mulf %19, %29 : vector<8x2x16xf32>
      %31 = vector.shape_cast %30 : vector<8x2x16xf32> to vector<16x16xf32>
      %32 = tpu.transpose %31, [1, 0] : vector<16x16xf32> -> vector<16x16xf32>
      %33 = arith.truncf %32 : vector<16x16xf32> to vector<16x16xbf16>
      %c0_13 = arith.constant 0 : index
      %c0_14 = arith.constant 0 : index
      %34 = vector.load %arg7[%c0_13, %c0_14] : memref<16x16xbf16, #tpu.memory_space<vmem>>, vector<16x16xbf16>
      %cst_15 = arith.constant dense<0.000000e+00> : vector<16x16xf32>
      %35 = tpu.matmul %33, %34, %cst_15 {dimension_numbers = #tpu.dot_dimension_numbers<[1], [0], [0], [1], [0, 0, 1, 1], [], []>} : vector<16x16xbf16>, vector<16x16xbf16>, vector<16x16xf32> -> vector<16x16xf32>
      %c0_16 = arith.constant 0 : index
      %c0_17 = arith.constant 0 : index
      %36 = vector.load %arg8[%c0_16, %c0_17] : memref<1x16xf32, #tpu.memory_space<vmem>>, vector<1x16xf32>
      %37 = vector.broadcast %36 : vector<1x16xf32> to vector<16x16xf32>
      %38 = arith.addf %35, %37 : vector<16x16xf32>
      %cst_18 = arith.constant 5.000000e-01 : f32
      %39 = vector.broadcast %cst_18 : f32 to vector<16x16xf32>
      %40 = arith.mulf %39, %38 : vector<16x16xf32>
      %cst_19 = arith.constant 4.471500e-02 : f32
      %41 = vector.broadcast %cst_19 : f32 to vector<16x16xf32>
      %42 = arith.mulf %41, %38 : vector<16x16xf32>
      %43 = arith.mulf %42, %38 : vector<16x16xf32>
      %44 = arith.mulf %43, %38 : vector<16x16xf32>
      %45 = arith.addf %38, %44 : vector<16x16xf32>
      %cst_20 = arith.constant 0.797884583 : f32
      %46 = vector.broadcast %cst_20 : f32 to vector<16x16xf32>
      %47 = arith.mulf %46, %45 : vector<16x16xf32>
      %48 = math.tanh %47 : vector<16x16xf32>
      %cst_21 = arith.constant 1.000000e+00 : f32
      %49 = vector.broadcast %cst_21 : f32 to vector<16x16xf32>
      %50 = arith.addf %49, %48 : vector<16x16xf32>
      %51 = arith.mulf %40, %50 : vector<16x16xf32>
      %c0_22 = arith.constant 0 : index
      %c0_23 = arith.constant 0 : index
      %c0_24 = arith.constant 0 : index
      %52 = vector.load %arg9[%c0_22, %c0_23, %c0_24] : memref<1x16x16xf32, #tpu.memory_space<vmem>>, vector<1x16x16xf32>
      %53 = vector.shape_cast %52 : vector<1x16x16xf32> to vector<16x16xf32>
      %54 = vector.shape_cast %51 : vector<16x16xf32> to vector<1x16x16xf32>
      tpu.vector_store %arg9[%c0_22, %c0_23, %c0_24], %54 {strides = array<i32>} : memref<1x16x16xf32, #tpu.memory_space<vmem>>, vector<1x16x16xf32>,
    } else {
    }
    return
  }
  func.func @transform_0(%arg0: i32, %arg1: i32, %arg2: i32) -> (i32, i32, i32) {
    %0 = arith.minsi %arg2, %arg1 : i32
    %c0_i32 = arith.constant 0 : i32
    %c0_i32_0 = arith.constant 0 : i32
    return %arg0, %c0_i32, %0 : i32, i32, i32
  }
  func.func @transform_1(%arg0: i32, %arg1: i32, %arg2: i32) -> (i32, i32, i32) {
    %0 = arith.minsi %arg2, %arg1 : i32
    %c2_i32 = arith.constant 2 : i32
    %c0_i32 = arith.constant 0 : i32
    return %arg0, %c2_i32, %0 : i32, i32, i32
  }
  func.func @transform_2(%arg0: i32, %arg1: i32, %arg2: i32) -> (i32, i32, i32) {
    %c0_i32 = arith.constant 0 : i32
    %c0_i32_0 = arith.constant 0 : i32
    return %arg0, %c0_i32, %arg1 : i32, i32, i32
  }
  func.func @transform_3(%arg0: i32, %arg1: i32, %arg2: i32) -> (i32, i32, i32, i32) {
    %0 = arith.subi %arg1, %arg2 : i32
    %c0_i32 = arith.constant 0 : i32
    %1 = arith.maxsi %0, %c0_i32 : i32
    %c0_i32_0 = arith.constant 0 : i32
    %c0_i32_1 = arith.constant 0 : i32
    %c0_i32_2 = arith.constant 0 : i32
    %c0_i32_3 = arith.constant 0 : i32
    return %1, %c0_i32_0, %c0_i32_1, %c0_i32_2 : i32, i32, i32, i32
  }
  func.func @transform_4(%arg0: i32, %arg1: i32, %arg2: i32) -> (i32, i32) {
    %c0_i32 = arith.constant 0 : i32
    %c0_i32_0 = arith.constant 0 : i32
    %c0_i32_1 = arith.constant 0 : i32
    return %c0_i32, %c0_i32_0 : i32, i32
  }
  func.func @transform_5(%arg0: i32, %arg1: i32, %arg2: i32) -> (i32, i32) {
    %c0_i32 = arith.constant 0 : i32
    %c0_i32_0 = arith.constant 0 : i32
    %c0_i32_1 = arith.constant 0 : i32
    return %c0_i32, %c0_i32_0 : i32, i32
  }
  func.func @transform_6(%arg0: i32, %arg1: i32, %arg2: i32) -> (i32, i32, i32) {
    %c0_i32 = arith.constant 0 : i32
    %c0_i32_0 = arith.constant 0 : i32
    return %arg0, %arg1, %c0_i32 : i32, i32, i32
  }
}

module attributes {stable_mosaic.version = 11 : i64} {
  func.func @_proj_kernel(%arg0: i32, %arg1: i32, %arg2: memref<1x16x32xbf16, #tpu.memory_space<vmem>>, %arg3: memref<32x16xbf16, #tpu.memory_space<vmem>>, %arg4: memref<32x16xbf16, #tpu.memory_space<vmem>>, %arg5: memref<1x16xf32, #tpu.memory_space<vmem>>, %arg6: memref<1x16xf32, #tpu.memory_space<vmem>>, %arg7: memref<48x16xbf16, #tpu.memory_space<vmem>>, %arg8: memref<48x1xf32, #tpu.memory_space<vmem>>, %arg9: memref<1x48x16xbf16, #tpu.memory_space<vmem>>) attributes {dimension_semantics = [#tpu.dimension_semantics<parallel>, #tpu.dimension_semantics<parallel>], iteration_bounds = array<i64: 2, 1>, scalar_prefetch = 0 : i64, scratch_operands = 0 : i64, tpu.core_type = #tpu.core_type<tc>, window_params = [{transform_indices = @transform_0, window_bounds = array<i64: 1, 16, 32>}, {pipeline_mode = #tpu.pipeline_mode<synchronous>, transform_indices = @transform_1, window_bounds = array<i64: 32, 16>}, {pipeline_mode = #tpu.pipeline_mode<synchronous>, transform_indices = @transform_2, window_bounds = array<i64: 32, 16>}, {pipeline_mode = #tpu.pipeline_mode<synchronous>, transform_indices = @transform_3, window_bounds = array<i64: 1, 16>}, {pipeline_mode = #tpu.pipeline_mode<synchronous>, transform_indices = @transform_4, window_bounds = array<i64: 1, 16>}, {pipeline_mode = #tpu.pipeline_mode<synchronous>, transform_indices = @transform_5, window_bounds = array<i64: 48, 16>}, {pipeline_mode = #tpu.pipeline_mode<synchronous>, transform_indices = @transform_6, window_bounds = array<i64: 48, 1>}, {transform_indices = @transform_7, window_bounds = array<i64: 1, 48, 16>}]} {
    %c0 = arith.constant 0 : index
    %c0_0 = arith.constant 0 : index
    %c0_1 = arith.constant 0 : index
    %0 = vector.load %arg2[%c0, %c0_0, %c0_1] : memref<1x16x32xbf16, #tpu.memory_space<vmem>>, vector<1x16x32xbf16>
    %1 = vector.shape_cast %0 : vector<1x16x32xbf16> to vector<16x32xbf16>
    %c0_2 = arith.constant 0 : index
    %c0_3 = arith.constant 0 : index
    %2 = vector.load %arg3[%c0_2, %c0_3] : memref<32x16xbf16, #tpu.memory_space<vmem>>, vector<32x16xbf16>
    %cst = arith.constant dense<0.000000e+00> : vector<16x16xf32>
    %3 = tpu.matmul %1, %2, %cst {dimension_numbers = #tpu.dot_dimension_numbers<[1], [0], [0], [1], [0, 0, 1, 1], [], []>} : vector<16x32xbf16>, vector<32x16xbf16>, vector<16x16xf32> -> vector<16x16xf32>
    %c0_4 = arith.constant 0 : index
    %c0_5 = arith.constant 0 : index
    %4 = vector.load %arg5[%c0_4, %c0_5] : memref<1x16xf32, #tpu.memory_space<vmem>>, vector<1x16xf32>
    %5 = vector.broadcast %4 : vector<1x16xf32> to vector<16x16xf32>
    %6 = arith.addf %3, %5 : vector<16x16xf32>
    %c0_6 = arith.constant 0 : index
    %c0_7 = arith.constant 0 : index
    %7 = vector.load %arg4[%c0_6, %c0_7] : memref<32x16xbf16, #tpu.memory_space<vmem>>, vector<32x16xbf16>
    %cst_8 = arith.constant dense<0.000000e+00> : vector<16x16xf32>
    %8 = tpu.matmul %1, %7, %cst_8 {dimension_numbers = #tpu.dot_dimension_numbers<[1], [0], [0], [1], [0, 0, 1, 1], [], []>} : vector<16x32xbf16>, vector<32x16xbf16>, vector<16x16xf32> -> vector<16x16xf32>
    %c0_9 = arith.constant 0 : index
    %c0_10 = arith.constant 0 : index
    %9 = vector.load %arg6[%c0_9, %c0_10] : memref<1x16xf32, #tpu.memory_space<vmem>>, vector<1x16xf32>
    %10 = vector.broadcast %9 : vector<1x16xf32> to vector<16x16xf32>
    %11 = arith.addf %8, %10 : vector<16x16xf32>
    %12 = arith.negf %11 : vector<16x16xf32>
    %13 = math.exp %12 : vector<16x16xf32>
    %cst_11 = arith.constant 1.000000e+00 : f32
    %14 = vector.broadcast %cst_11 : f32 to vector<16x16xf32>
    %15 = arith.addf %14, %13 : vector<16x16xf32>
    %16 = arith.divf %14, %15 : vector<16x16xf32>
    %17 = arith.mulf %6, %16 : vector<16x16xf32>
    %18 = arith.truncf %17 : vector<16x16xf32> to vector<16x16xbf16>
    %c0_12 = arith.constant 0 : index
    %c0_13 = arith.constant 0 : index
    %19 = vector.load %arg7[%c0_12, %c0_13] : memref<48x16xbf16, #tpu.memory_space<vmem>>, vector<48x16xbf16>
    %cst_14 = arith.constant dense<0.000000e+00> : vector<48x16xf32>
    %20 = tpu.matmul %19, %18, %cst_14 {dimension_numbers = #tpu.dot_dimension_numbers<[1], [1], [0], [0], [0, 0, 1, 0], [], []>} : vector<48x16xbf16>, vector<16x16xbf16>, vector<48x16xf32> -> vector<48x16xf32>
    %c0_15 = arith.constant 0 : index
    %c0_16 = arith.constant 0 : index
    %21 = vector.load %arg8[%c0_15, %c0_16] : memref<48x1xf32, #tpu.memory_space<vmem>>, vector<48x1xf32>
    %22 = vector.broadcast %21 : vector<48x1xf32> to vector<48x16xf32>
    %23 = arith.addf %20, %22 : vector<48x16xf32>
    %24 = arith.truncf %23 : vector<48x16xf32> to vector<48x16xbf16>
    %c0_17 = arith.constant 0 : index
    %c0_18 = arith.constant 0 : index
    %c0_19 = arith.constant 0 : index
    %25 = vector.load %arg9[%c0_17, %c0_18, %c0_19] : memref<1x48x16xbf16, #tpu.memory_space<vmem>>, vector<1x48x16xbf16>
    %26 = vector.shape_cast %25 : vector<1x48x16xbf16> to vector<48x16xbf16>
    %27 = vector.shape_cast %24 : vector<48x16xbf16> to vector<1x48x16xbf16>
    tpu.vector_store %arg9[%c0_17, %c0_18, %c0_19], %27 {strides = array<i32>} : memref<1x48x16xbf16, #tpu.memory_space<vmem>>, vector<1x48x16xbf16>,
    return
  }
  func.func @transform_0(%arg0: i32, %arg1: i32) -> (i32, i32, i32) {
    %c0_i32 = arith.constant 0 : i32
    %c0_i32_0 = arith.constant 0 : i32
    return %arg0, %arg1, %c0_i32 : i32, i32, i32
  }
  func.func @transform_1(%arg0: i32, %arg1: i32) -> (i32, i32) {
    %c0_i32 = arith.constant 0 : i32
    %c0_i32_0 = arith.constant 0 : i32
    %c0_i32_1 = arith.constant 0 : i32
    return %c0_i32, %c0_i32_0 : i32, i32
  }
  func.func @transform_2(%arg0: i32, %arg1: i32) -> (i32, i32) {
    %c0_i32 = arith.constant 0 : i32
    %c0_i32_0 = arith.constant 0 : i32
    %c0_i32_1 = arith.constant 0 : i32
    return %c0_i32, %c0_i32_0 : i32, i32
  }
  func.func @transform_3(%arg0: i32, %arg1: i32) -> (i32, i32) {
    %c0_i32 = arith.constant 0 : i32
    %c0_i32_0 = arith.constant 0 : i32
    %c0_i32_1 = arith.constant 0 : i32
    return %c0_i32, %c0_i32_0 : i32, i32
  }
  func.func @transform_4(%arg0: i32, %arg1: i32) -> (i32, i32) {
    %c0_i32 = arith.constant 0 : i32
    %c0_i32_0 = arith.constant 0 : i32
    %c0_i32_1 = arith.constant 0 : i32
    return %c0_i32, %c0_i32_0 : i32, i32
  }
  func.func @transform_5(%arg0: i32, %arg1: i32) -> (i32, i32) {
    %c0_i32 = arith.constant 0 : i32
    %c0_i32_0 = arith.constant 0 : i32
    %c0_i32_1 = arith.constant 0 : i32
    return %c0_i32, %c0_i32_0 : i32, i32
  }
  func.func @transform_6(%arg0: i32, %arg1: i32) -> (i32, i32) {
    %c0_i32 = arith.constant 0 : i32
    %c0_i32_0 = arith.constant 0 : i32
    %c0_i32_1 = arith.constant 0 : i32
    return %c0_i32, %c0_i32_0 : i32, i32
  }
  func.func @transform_7(%arg0: i32, %arg1: i32) -> (i32, i32, i32) {
    %c0_i32 = arith.constant 0 : i32
    %c0_i32_0 = arith.constant 0 : i32
    return %arg0, %c0_i32, %arg1 : i32, i32, i32
  }
}

module attributes {stable_mosaic.version = 11 : i64} {
  func.func @_key_conv_kernel(%arg0: i32, %arg1: i32, %arg2: i32, %arg3: memref<1x16x16xbf16, #tpu.memory_space<vmem>>, %arg4: memref<1x16x16x16xbf16, #tpu.memory_space<vmem>>, %arg5: memref<1x16x16xbf16, #tpu.memory_space<vmem>>, %arg6: memref<16x16xf32, #tpu.memory_space<vmem>>) attributes {dimension_semantics = [#tpu.dimension_semantics<parallel>, #tpu.dimension_semantics<parallel>, #tpu.dimension_semantics<arbitrary>], iteration_bounds = array<i64: 2, 1, 1>, scalar_prefetch = 0 : i64, scratch_operands = 1 : i64, tpu.core_type = #tpu.core_type<tc>, window_params = [{transform_indices = @transform_0, window_bounds = array<i64: 1, 16, 16>}, {transform_indices = @transform_1, window_bounds = array<i64: 1, 16, 16, 16>}, {transform_indices = @transform_2, window_bounds = array<i64: 1, 16, 16>}]} {
    %c0_i32 = arith.constant 0 : i32
    %0 = arith.cmpi eq, %arg2, %c0_i32 : i32
    %1 = arith.extui %0 : i1 to i32
    %c0_i32_0 = arith.constant 0 : i32
    %2 = arith.cmpi ne, %1, %c0_i32_0 : i32
    scf.if %2 {
      %cst = arith.constant 0.000000e+00 : f32
      %9 = vector.broadcast %cst : f32 to vector<16x16xf32>
      %c0 = arith.constant 0 : index
      %c0_4 = arith.constant 0 : index
      %10 = vector.load %arg6[%c0, %c0_4] : memref<16x16xf32, #tpu.memory_space<vmem>>, vector<16x16xf32>
      tpu.vector_store %arg6[%c0, %c0_4], %9 {strides = array<i32>} : memref<16x16xf32, #tpu.memory_space<vmem>>, vector<16x16xf32>,
    } else {
    }
    %3 = arith.cmpi sle, %arg2, %arg1 : i32
    %4 = arith.extui %3 : i1 to i32
    %c0_i32_1 = arith.constant 0 : i32
    %5 = arith.cmpi ne, %4, %c0_i32_1 : i32
    scf.if %5 {
      %c0 = arith.constant 0 : index
      %c0_4 = arith.constant 0 : index
      %c0_5 = arith.constant 0 : index
      %9 = vector.load %arg3[%c0, %c0_4, %c0_5] : memref<1x16x16xbf16, #tpu.memory_space<vmem>>, vector<1x16x16xbf16>
      %10 = vector.shape_cast %9 : vector<1x16x16xbf16> to vector<16x16xbf16>
      %11 = vector.shape_cast %10 : vector<16x16xbf16> to vector<16x1x16xbf16>
      %c0_6 = arith.constant 0 : index
      %c0_7 = arith.constant 0 : index
      %c0_8 = arith.constant 0 : index
      %c0_9 = arith.constant 0 : index
      %12 = vector.load %arg4[%c0_6, %c0_7, %c0_8, %c0_9] : memref<1x16x16x16xbf16, #tpu.memory_space<vmem>>, vector<1x16x16x16xbf16>
      %13 = vector.shape_cast %12 : vector<1x16x16x16xbf16> to vector<16x16x16xbf16>
      %cst = arith.constant dense<0.000000e+00> : vector<16x1x16xf32>
      %14 = tpu.matmul %11, %13, %cst {dimension_numbers = #tpu.dot_dimension_numbers<[2], [2], [1], [1], [0, 0, 0, 1, 1, 1], [0], [0]>} : vector<16x1x16xbf16>, vector<16x16x16xbf16>, vector<16x1x16xf32> -> vector<16x1x16xf32>
      %c0_10 = arith.constant 0 : index
      %c0_11 = arith.constant 0 : index
      %15 = vector.load %arg6[%c0_10, %c0_11] : memref<16x16xf32, #tpu.memory_space<vmem>>, vector<16x16xf32>
      %16 = vector.shape_cast %14 : vector<16x1x16xf32> to vector<16x16xf32>
      %17 = arith.addf %15, %16 : vector<16x16xf32>
      %c0_12 = arith.constant 0 : index
      %c0_13 = arith.constant 0 : index
      %18 = vector.load %arg6[%c0_12, %c0_13] : memref<16x16xf32, #tpu.memory_space<vmem>>, vector<16x16xf32>
      tpu.vector_store %arg6[%c0_12, %c0_13], %17 {strides = array<i32>} : memref<16x16xf32, #tpu.memory_space<vmem>>, vector<16x16xf32>,
    } else {
    }
    %c0_i32_2 = arith.constant 0 : i32
    %6 = arith.cmpi eq, %arg2, %c0_i32_2 : i32
    %7 = arith.extui %6 : i1 to i32
    %c0_i32_3 = arith.constant 0 : i32
    %8 = arith.cmpi ne, %7, %c0_i32_3 : i32
    scf.if %8 {
      %c0 = arith.constant 0 : index
      %c0_4 = arith.constant 0 : index
      %9 = vector.load %arg6[%c0, %c0_4] : memref<16x16xf32, #tpu.memory_space<vmem>>, vector<16x16xf32>
      %10 = arith.truncf %9 : vector<16x16xf32> to vector<16x16xbf16>
      %c0_5 = arith.constant 0 : index
      %c0_6 = arith.constant 0 : index
      %c0_7 = arith.constant 0 : index
      %11 = vector.load %arg5[%c0_5, %c0_6, %c0_7] : memref<1x16x16xbf16, #tpu.memory_space<vmem>>, vector<1x16x16xbf16>
      %12 = vector.shape_cast %11 : vector<1x16x16xbf16> to vector<16x16xbf16>
      %13 = vector.shape_cast %10 : vector<16x16xbf16> to vector<1x16x16xbf16>
      tpu.vector_store %arg5[%c0_5, %c0_6, %c0_7], %13 {strides = array<i32>} : memref<1x16x16xbf16, #tpu.memory_space<vmem>>, vector<1x16x16xbf16>,
    } else {
    }
    return
  }
  func.func @transform_0(%arg0: i32, %arg1: i32, %arg2: i32) -> (i32, i32, i32) {
    %0 = arith.minsi %arg2, %arg1 : i32
    %c1_i32 = arith.constant 1 : i32
    %c0_i32 = arith.constant 0 : i32
    return %arg0, %c1_i32, %0 : i32, i32, i32
  }
  func.func @transform_1(%arg0: i32, %arg1: i32, %arg2: i32) -> (i32, i32, i32, i32) {
    %0 = arith.subi %arg1, %arg2 : i32
    %c0_i32 = arith.constant 0 : i32
    %1 = arith.maxsi %0, %c0_i32 : i32
    %c0_i32_0 = arith.constant 0 : i32
    %c0_i32_1 = arith.constant 0 : i32
    %c0_i32_2 = arith.constant 0 : i32
    %c0_i32_3 = arith.constant 0 : i32
    return %1, %c0_i32_0, %c0_i32_1, %c0_i32_2 : i32, i32, i32, i32
  }
  func.func @transform_2(%arg0: i32, %arg1: i32, %arg2: i32) -> (i32, i32, i32) {
    %c0_i32 = arith.constant 0 : i32
    %c0_i32_0 = arith.constant 0 : i32
    return %arg0, %c0_i32, %arg1 : i32, i32, i32
  }
}

module attributes {stable_mosaic.version = 11 : i64} {
  func.func @_gconv_kernel(%arg0: i32, %arg1: i32, %arg2: i32, %arg3: memref<1x16x16xbf16, #tpu.memory_space<vmem>>, %arg4: memref<1x16x16xbf16, #tpu.memory_space<vmem>>, %arg5: memref<1x16x16xbf16, #tpu.memory_space<vmem>>, %arg6: memref<1x8x16x16xbf16, #tpu.memory_space<vmem>>, %arg7: memref<16x16xbf16, #tpu.memory_space<vmem>>, %arg8: memref<1x16xf32, #tpu.memory_space<vmem>>, %arg9: memref<1x16x16xf32, #tpu.memory_space<vmem>>, %arg10: memref<8x4x16xf32, #tpu.memory_space<vmem>>) attributes {dimension_semantics = [#tpu.dimension_semantics<parallel>, #tpu.dimension_semantics<parallel>, #tpu.dimension_semantics<arbitrary>], iteration_bounds = array<i64: 2, 1, 1>, scalar_prefetch = 0 : i64, scratch_operands = 1 : i64, tpu.core_type = #tpu.core_type<tc>, window_params = [{transform_indices = @transform_0, window_bounds = array<i64: 1, 16, 16>}, {transform_indices = @transform_1, window_bounds = array<i64: 1, 16, 16>}, {transform_indices = @transform_2, window_bounds = array<i64: 1, 16, 16>}, {transform_indices = @transform_3, window_bounds = array<i64: 1, 8, 16, 16>}, {pipeline_mode = #tpu.pipeline_mode<synchronous>, transform_indices = @transform_4, window_bounds = array<i64: 16, 16>}, {pipeline_mode = #tpu.pipeline_mode<synchronous>, transform_indices = @transform_5, window_bounds = array<i64: 1, 16>}, {transform_indices = @transform_6, window_bounds = array<i64: 1, 16, 16>}]} {
    %c0_i32 = arith.constant 0 : i32
    %0 = arith.cmpi eq, %arg2, %c0_i32 : i32
    %1 = arith.extui %0 : i1 to i32
    %c0_i32_0 = arith.constant 0 : i32
    %2 = arith.cmpi ne, %1, %c0_i32_0 : i32
    scf.if %2 {
      %cst = arith.constant 0.000000e+00 : f32
      %9 = vector.broadcast %cst : f32 to vector<8x4x16xf32>
      %c0 = arith.constant 0 : index
      %c0_4 = arith.constant 0 : index
      %c0_5 = arith.constant 0 : index
      %10 = vector.load %arg10[%c0, %c0_4, %c0_5] : memref<8x4x16xf32, #tpu.memory_space<vmem>>, vector<8x4x16xf32>
      tpu.vector_store %arg10[%c0, %c0_4, %c0_5], %9 {strides = array<i32>} : memref<8x4x16xf32, #tpu.memory_space<vmem>>, vector<8x4x16xf32>,
    } else {
    }
    %3 = arith.cmpi sle, %arg2, %arg1 : i32
    %4 = arith.extui %3 : i1 to i32
    %c0_i32_1 = arith.constant 0 : i32
    %5 = arith.cmpi ne, %4, %c0_i32_1 : i32
    scf.if %5 {
      %c0 = arith.constant 0 : index
      %c0_4 = arith.constant 0 : index
      %c0_5 = arith.constant 0 : index
      %9 = vector.load %arg3[%c0, %c0_4, %c0_5] : memref<1x16x16xbf16, #tpu.memory_space<vmem>>, vector<1x16x16xbf16>
      %10 = vector.shape_cast %9 : vector<1x16x16xbf16> to vector<16x16xbf16>
      %c0_6 = arith.constant 0 : index
      %c0_7 = arith.constant 0 : index
      %c0_8 = arith.constant 0 : index
      %11 = vector.load %arg4[%c0_6, %c0_7, %c0_8] : memref<1x16x16xbf16, #tpu.memory_space<vmem>>, vector<1x16x16xbf16>
      %12 = vector.shape_cast %11 : vector<1x16x16xbf16> to vector<16x16xbf16>
      %13 = vector.shape_cast %10 : vector<16x16xbf16> to vector<8x2x1x16xbf16>
      %14 = vector.shape_cast %12 : vector<16x16xbf16> to vector<8x1x2x16xbf16>
      %15 = vector.broadcast %13 : vector<8x2x1x16xbf16> to vector<8x2x2x16xbf16>
      %16 = vector.broadcast %14 : vector<8x1x2x16xbf16> to vector<8x2x2x16xbf16>
      %17 = arith.mulf %15, %16 : vector<8x2x2x16xbf16>
      %18 = vector.shape_cast %17 : vector<8x2x2x16xbf16> to vector<8x4x16xbf16>
      %c0_9 = arith.constant 0 : index
      %c0_10 = arith.constant 0 : index
      %c0_11 = arith.constant 0 : index
      %19 = vector.load %arg10[%c0_9, %c0_10, %c0_11] : memref<8x4x16xf32, #tpu.memory_space<vmem>>, vector<8x4x16xf32>
      %c0_12 = arith.constant 0 : index
      %c0_13 = arith.constant 0 : index
      %c0_14 = arith.constant 0 : index
      %c0_15 = arith.constant 0 : index
      %20 = vector.load %arg6[%c0_12, %c0_13, %c0_14, %c0_15] : memref<1x8x16x16xbf16, #tpu.memory_space<vmem>>, vector<1x8x16x16xbf16>
      %21 = vector.shape_cast %20 : vector<1x8x16x16xbf16> to vector<8x16x16xbf16>
      %cst = arith.constant dense<0.000000e+00> : vector<8x4x16xf32>
      %22 = tpu.matmul %18, %21, %cst {dimension_numbers = #tpu.dot_dimension_numbers<[2], [2], [1], [1], [0, 0, 0, 1, 1, 1], [0], [0]>} : vector<8x4x16xbf16>, vector<8x16x16xbf16>, vector<8x4x16xf32> -> vector<8x4x16xf32>
      %23 = arith.addf %19, %22 : vector<8x4x16xf32>
      %c0_16 = arith.constant 0 : index
      %c0_17 = arith.constant 0 : index
      %c0_18 = arith.constant 0 : index
      %24 = vector.load %arg10[%c0_16, %c0_17, %c0_18] : memref<8x4x16xf32, #tpu.memory_space<vmem>>, vector<8x4x16xf32>
      tpu.vector_store %arg10[%c0_16, %c0_17, %c0_18], %23 {strides = array<i32>} : memref<8x4x16xf32, #tpu.memory_space<vmem>>, vector<8x4x16xf32>,
    } else {
    }
    %c0_i32_2 = arith.constant 0 : i32
    %6 = arith.cmpi eq, %arg2, %c0_i32_2 : i32
    %7 = arith.extui %6 : i1 to i32
    %c0_i32_3 = arith.constant 0 : i32
    %8 = arith.cmpi ne, %7, %c0_i32_3 : i32
    scf.if %8 {
      %c0 = arith.constant 0 : index
      %c0_4 = arith.constant 0 : index
      %c0_5 = arith.constant 0 : index
      %9 = vector.load %arg10[%c0, %c0_4, %c0_5] : memref<8x4x16xf32, #tpu.memory_space<vmem>>, vector<8x4x16xf32>
      %10 = vector.shape_cast %9 : vector<8x4x16xf32> to vector<8x2x2x16xf32>
      %c0_6 = arith.constant 0 : index
      %c0_7 = arith.constant 0 : index
      %c0_8 = arith.constant 0 : index
      %11 = vector.load %arg5[%c0_6, %c0_7, %c0_8] : memref<1x16x16xbf16, #tpu.memory_space<vmem>>, vector<1x16x16xbf16>
      %12 = vector.shape_cast %11 : vector<1x16x16xbf16> to vector<16x16xbf16>
      %13 = arith.extf %12 : vector<16x16xbf16> to vector<16x16xf32>
      %14 = vector.shape_cast %13 : vector<16x16xf32> to vector<8x2x1x16xf32>
      %15 = vector.broadcast %14 : vector<8x2x1x16xf32> to vector<8x2x2x16xf32>
      %16 = arith.mulf %15, %10 : vector<8x2x2x16xf32>
      %cst = arith.constant dense<0.000000e+00> : vector<8x2x16xf32>
      %17 = vector.multi_reduction <add>, %16, %cst [1] : vector<8x2x2x16xf32> to vector<8x2x16xf32>
      %cst_9 = arith.constant 5.000000e-01 : f32
      %18 = vector.broadcast %cst_9 : f32 to vector<8x2x16xf32>
      %19 = arith.mulf %18, %17 : vector<8x2x16xf32>
      %cst_10 = arith.constant 4.471500e-02 : f32
      %20 = vector.broadcast %cst_10 : f32 to vector<8x2x16xf32>
      %21 = arith.mulf %20, %17 : vector<8x2x16xf32>
      %22 = arith.mulf %21, %17 : vector<8x2x16xf32>
      %23 = arith.mulf %22, %17 : vector<8x2x16xf32>
      %24 = arith.addf %17, %23 : vector<8x2x16xf32>
      %cst_11 = arith.constant 0.797884583 : f32
      %25 = vector.broadcast %cst_11 : f32 to vector<8x2x16xf32>
      %26 = arith.mulf %25, %24 : vector<8x2x16xf32>
      %27 = math.tanh %26 : vector<8x2x16xf32>
      %cst_12 = arith.constant 1.000000e+00 : f32
      %28 = vector.broadcast %cst_12 : f32 to vector<8x2x16xf32>
      %29 = arith.addf %28, %27 : vector<8x2x16xf32>
      %30 = arith.mulf %19, %29 : vector<8x2x16xf32>
      %31 = vector.shape_cast %30 : vector<8x2x16xf32> to vector<16x16xf32>
      %32 = tpu.transpose %31, [1, 0] : vector<16x16xf32> -> vector<16x16xf32>
      %33 = arith.truncf %32 : vector<16x16xf32> to vector<16x16xbf16>
      %c0_13 = arith.constant 0 : index
      %c0_14 = arith.constant 0 : index
      %34 = vector.load %arg7[%c0_13, %c0_14] : memref<16x16xbf16, #tpu.memory_space<vmem>>, vector<16x16xbf16>
      %cst_15 = arith.constant dense<0.000000e+00> : vector<16x16xf32>
      %35 = tpu.matmul %33, %34, %cst_15 {dimension_numbers = #tpu.dot_dimension_numbers<[1], [0], [0], [1], [0, 0, 1, 1], [], []>} : vector<16x16xbf16>, vector<16x16xbf16>, vector<16x16xf32> -> vector<16x16xf32>
      %c0_16 = arith.constant 0 : index
      %c0_17 = arith.constant 0 : index
      %36 = vector.load %arg8[%c0_16, %c0_17] : memref<1x16xf32, #tpu.memory_space<vmem>>, vector<1x16xf32>
      %37 = vector.broadcast %36 : vector<1x16xf32> to vector<16x16xf32>
      %38 = arith.addf %35, %37 : vector<16x16xf32>
      %cst_18 = arith.constant 5.000000e-01 : f32
      %39 = vector.broadcast %cst_18 : f32 to vector<16x16xf32>
      %40 = arith.mulf %39, %38 : vector<16x16xf32>
      %cst_19 = arith.constant 4.471500e-02 : f32
      %41 = vector.broadcast %cst_19 : f32 to vector<16x16xf32>
      %42 = arith.mulf %41, %38 : vector<16x16xf32>
      %43 = arith.mulf %42, %38 : vector<16x16xf32>
      %44 = arith.mulf %43, %38 : vector<16x16xf32>
      %45 = arith.addf %38, %44 : vector<16x16xf32>
      %cst_20 = arith.constant 0.797884583 : f32
      %46 = vector.broadcast %cst_20 : f32 to vector<16x16xf32>
      %47 = arith.mulf %46, %45 : vector<16x16xf32>
      %48 = math.tanh %47 : vector<16x16xf32>
      %cst_21 = arith.constant 1.000000e+00 : f32
      %49 = vector.broadcast %cst_21 : f32 to vector<16x16xf32>
      %50 = arith.addf %49, %48 : vector<16x16xf32>
      %51 = arith.mulf %40, %50 : vector<16x16xf32>
      %c0_22 = arith.constant 0 : index
      %c0_23 = arith.constant 0 : index
      %c0_24 = arith.constant 0 : index
      %52 = vector.load %arg9[%c0_22, %c0_23, %c0_24] : memref<1x16x16xf32, #tpu.memory_space<vmem>>, vector<1x16x16xf32>
      %53 = vector.shape_cast %52 : vector<1x16x16xf32> to vector<16x16xf32>
      %54 = vector.shape_cast %51 : vector<16x16xf32> to vector<1x16x16xf32>
      tpu.vector_store %arg9[%c0_22, %c0_23, %c0_24], %54 {strides = array<i32>} : memref<1x16x16xf32, #tpu.memory_space<vmem>>, vector<1x16x16xf32>,
    } else {
    }
    return
  }
  func.func @transform_0(%arg0: i32, %arg1: i32, %arg2: i32) -> (i32, i32, i32) {
    %0 = arith.minsi %arg2, %arg1 : i32
    %c0_i32 = arith.constant 0 : i32
    %c0_i32_0 = arith.constant 0 : i32
    return %arg0, %c0_i32, %0 : i32, i32, i32
  }
  func.func @transform_1(%arg0: i32, %arg1: i32, %arg2: i32) -> (i32, i32, i32) {
    %0 = arith.minsi %arg2, %arg1 : i32
    %c2_i32 = arith.constant 2 : i32
    %c0_i32 = arith.constant 0 : i32
    return %arg0, %c2_i32, %0 : i32, i32, i32
  }
  func.func @transform_2(%arg0: i32, %arg1: i32, %arg2: i32) -> (i32, i32, i32) {
    %c0_i32 = arith.constant 0 : i32
    %c0_i32_0 = arith.constant 0 : i32
    return %arg0, %c0_i32, %arg1 : i32, i32, i32
  }
  func.func @transform_3(%arg0: i32, %arg1: i32, %arg2: i32) -> (i32, i32, i32, i32) {
    %0 = arith.subi %arg1, %arg2 : i32
    %c0_i32 = arith.constant 0 : i32
    %1 = arith.maxsi %0, %c0_i32 : i32
    %c0_i32_0 = arith.constant 0 : i32
    %c0_i32_1 = arith.constant 0 : i32
    %c0_i32_2 = arith.constant 0 : i32
    %c0_i32_3 = arith.constant 0 : i32
    return %1, %c0_i32_0, %c0_i32_1, %c0_i32_2 : i32, i32, i32, i32
  }
  func.func @transform_4(%arg0: i32, %arg1: i32, %arg2: i32) -> (i32, i32) {
    %c0_i32 = arith.constant 0 : i32
    %c0_i32_0 = arith.constant 0 : i32
    %c0_i32_1 = arith.constant 0 : i32
    return %c0_i32, %c0_i32_0 : i32, i32
  }
  func.func @transform_5(%arg0: i32, %arg1: i32, %arg2: i32) -> (i32, i32) {
    %c0_i32 = arith.constant 0 : i32
    %c0_i32_0 = arith.constant 0 : i32
    %c0_i32_1 = arith.constant 0 : i32
    return %c0_i32, %c0_i32_0 : i32, i32
  }
  func.func @transform_6(%arg0: i32, %arg1: i32, %arg2: i32) -> (i32, i32, i32) {
    %c0_i32 = arith.constant 0 : i32
    %c0_i32_0 = arith.constant 0 : i32
    return %arg0, %arg1, %c0_i32 : i32, i32, i32
  }
}

</mosaic_0001>

<llo_original>
// kernel: sgconv3_forward.3
$region0: #{sgconv3_forward.3}
  #allocation0 [shape = 'u32[]', space=smem, size = 0x4, offset = 0x4, fixed_abs, tag = 'smem constant byte address 0x4 - core index']
  #allocation1 [shape = 'u32[72,128]{1,0:T(1,128)}', space=vmem, size = 0x9000, scoped, tag = 'internal scratch']
  %s0 = inlined_call_operand.vmem [shape: bf16[2,16,32], index: 0, kind: input, shape index: {}]
  %s1 = inlined_call_operand.vmem [shape: bf16[32,16], index: 1, kind: input, shape index: {}]
  %s2 = inlined_call_operand.vmem [shape: bf16[32,16], index: 2, kind: input, shape index: {}]
  %s3 = inlined_call_operand.vmem [shape: f32[1,16], index: 3, kind: input, shape index: {}]
  %s4 = inlined_call_operand.vmem [shape: f32[1,16], index: 4, kind: input, shape index: {}]
  %s5 = inlined_call_operand.vmem [shape: bf16[48,16], index: 5, kind: input, shape index: {}]
  %s6 = inlined_call_operand.vmem [shape: f32[48,1], index: 6, kind: input, shape index: {}]
  %s7 = inlined_call_operand.vmem [shape: bf16[2,48,16], index: 7, kind: output, shape index: {}]
  %s8 = sld [smem:[#allocation0]]
  $region61: #{sgconv3_forward.3} parent=0
    _
  %s10 = ssub.s32 1, %s8
  %s11 = scalar_select 0, %s10, %s8
  loop: start=0, step=1, limit=4
  $region2: #{sgconv3_forward.3} parent=0 // loop_pre_header
    _
  $region3: #{sgconv3_forward.3} parent=0 // loop_header
    %s13 = sphi 0, %s17
    %p14 = scmp.ge.s32.totalorder %s13, 4
    %s20 = sphi 0, %s32
    %s21 = sphi 0, %s28
    %s22 = sphi 0, %s20
    %s23 = sphi 0, %s21
    %s24 = sphi 0, %s22
    %s25 = sphi 0, %s23
    %s37 = sphi 0, %s39
    %s40 = sphi 0, %s37
    %s41 = sphi 0, %s40
    %s57 = sphi 0, %s41
    %s61 = sphi 0, %s61
    %s63 = sphi 0, %s61
    %s64 = sphi 0, %s63
    %s78 = sphi 0, %s64
    %s82 = sphi 0, %s82
    %s84 = sphi 0, %s82
    %s85 = sphi 0, %s84
    %s99 = sphi 0, %s85
    %s103 = sphi 0, %s103
    %s105 = sphi 0, %s103
    %s106 = sphi 0, %s105
    %s120 = sphi 0, %s106
    %s124 = sphi 0, %s124
    %s126 = sphi 0, %s124
    %s127 = sphi 0, %s126
    %s141 = sphi 0, %s127
    %s145 = sphi 0, %s145
    %s147 = sphi 0, %s145
    %s148 = sphi 0, %s147
    %s162 = sphi 0, %s148
    %s166 = sphi 0, %s166
    %s168 = sphi 0, %s166
    %s169 = sphi 0, %s168
    %s183 = sphi 0, %s169
    %s191 = sphi 0, %s193
    %s194 = sphi 0, %s191
    %s195 = sphi 0, %s194
    %s211 = sphi 0, %s195
  $region4: #{sgconv3_forward.3} parent=0 // loop_header_branch
    %16 = sbr.rel (%p14) target = $region8
  $region5: #{sgconv3_forward.3} parent=0 // loop_body
    %s18 = ssub.s32 %s13, 1
    %s19 = ssub.s32 %s13, 2
    %s26 = sadd.s32 1, %s21
    %p27 = scmp.ge.s32.totalorder %s26, 1
    %s28 = scalar_select %p27, 0, %s26
    %s29 = sadd.s32 1, %s20
    %s30 = scalar_select %p27, %s29, %s20
    %p31 = scmp.ge.s32.totalorder %s30, 2
    %s32 = scalar_select %p31, 0, %s30
    %s33 = ssub.s32 %s20, %s32
    %s34 = ssub.s32 %s21, %s28
    %s35 = sor.u32 %s33, %s34
    %p36 = scmp.eq.s32.totalorder %s35, 0
    %s38 = sadd.s32 %s37, 1
    %s39 = scalar_select %p36, %s37, %s38
    %p42 = pneg %p36
    %p43 = scmp.eq.s32.totalorder %s13, 1
    %p44 = por %p42, %p43
    %p45 = scmp.ne.s32.totalorder %s37, %s40
    %p46 = scmp.eq.s32.totalorder %s13, 0
    %p47 = por %p45, %p46
    %p48 = scmp.ne.s32.totalorder %s37, %s40
    %p49 = scmp.eq.s32.totalorder %s18, 1
    %p50 = por %p48, %p49
    %p51 = scmp.ne.s32.totalorder %s40, %s41
    %p52 = scmp.eq.s32.totalorder %s18, 0
    %p53 = por %p51, %p52
    %p54 = scmp.ne.s32.totalorder %s40, %s41
    %p55 = scmp.eq.s32.totalorder %s19, 1
    %p56 = por %p54, %p55
    %p58 = scmp.ne.s32.totalorder %s41, %s57
    %p59 = scmp.eq.s32.totalorder %s19, 0
    %p60 = por %p58, %p59
    %s62 = sadd.s32 %s61, 1
    %p65 = scmp.eq.s32.totalorder %s13, 1
    %p66 = scmp.ne.s32.totalorder %s61, %s63
    %p67 = scmp.eq.s32.totalorder %s13, 0
    %p68 = por %p66, %p67
    %p69 = scmp.ne.s32.totalorder %s61, %s63
    %p70 = scmp.eq.s32.totalorder %s18, 1
    %p71 = por %p69, %p70
    %p72 = scmp.ne.s32.totalorder %s63, %s64
    %p73 = scmp.eq.s32.totalorder %s18, 0
    %p74 = por %p72, %p73
    %p75 = scmp.ne.s32.totalorder %s63, %s64
    %p76 = scmp.eq.s32.totalorder %s19, 1
    %p77 = por %p75, %p76
    %p79 = scmp.ne.s32.totalorder %s64, %s78
    %p80 = scmp.eq.s32.totalorder %s19, 0
    %p81 = por %p79, %p80
    %s83 = sadd.s32 %s82, 1
    %p86 = scmp.eq.s32.totalorder %s13, 1
    %p87 = scmp.ne.s32.totalorder %s82, %s84
    %p88 = scmp.eq.s32.totalorder %s13, 0
    %p89 = por %p87, %p88
    %p90 = scmp.ne.s32.totalorder %s82, %s84
    %p91 = scmp.eq.s32.totalorder %s18, 1
    %p92 = por %p90, %p91
    %p93 = scmp.ne.s32.totalorder %s84, %s85
    %p94 = scmp.eq.s32.totalorder %s18, 0
    %p95 = por %p93, %p94
    %p96 = scmp.ne.s32.totalorder %s84, %s85
    %p97 = scmp.eq.s32.totalorder %s19, 1
    %p98 = por %p96, %p97
    %p100 = scmp.ne.s32.totalorder %s85, %s99
    %p101 = scmp.eq.s32.totalorder %s19, 0
    %p102 = por %p100, %p101
    %s104 = sadd.s32 %s103, 1
    %p107 = scmp.eq.s32.totalorder %s13, 1
    %p108 = scmp.ne.s32.totalorder %s103, %s105
    %p109 = scmp.eq.s32.totalorder %s13, 0
    %p110 = por %p108, %p109
    %p111 = scmp.ne.s32.totalorder %s103, %s105
    %p112 = scmp.eq.s32.totalorder %s18, 1
    %p113 = por %p111, %p112
    %p114 = scmp.ne.s32.totalorder %s105, %s106
    %p115 = scmp.eq.s32.totalorder %s18, 0
    %p116 = por %p114, %p115
    %p117 = scmp.ne.s32.totalorder %s105, %s106
    %p118 = scmp.eq.s32.totalorder %s19, 1
    %p119 = por %p117, %p118
    %p121 = scmp.ne.s32.totalorder %s106, %s120
    %p122 = scmp.eq.s32.totalorder %s19, 0
    %p123 = por %p121, %p122
    %s125 = sadd.s32 %s124, 1
    %p128 = scmp.eq.s32.totalorder %s13, 1
    %p129 = scmp.ne.s32.totalorder %s124, %s126
    %p130 = scmp.eq.s32.totalorder %s13, 0
    %p131 = por %p129, %p130
    %p132 = scmp.ne.s32.totalorder %s124, %s126
    %p133 = scmp.eq.s32.totalorder %s18, 1
    %p134 = por %p132, %p133
    %p135 = scmp.ne.s32.totalorder %s126, %s127
    %p136 = scmp.eq.s32.totalorder %s18, 0
    %p137 = por %p135, %p136
    %p138 = scmp.ne.s32.totalorder %s126, %s127
    %p139 = scmp.eq.s32.totalorder %s19, 1
    %p140 = por %p138, %p139
    %p142 = scmp.ne.s32.totalorder %s127, %s141
    %p143 = scmp.eq.s32.totalorder %s19, 0
    %p144 = por %p142, %p143
    %s146 = sadd.s32 %s145, 1
    %p149 = scmp.eq.s32.totalorder %s13, 1
    %p150 = scmp.ne.s32.totalorder %s145, %s147
    %p151 = scmp.eq.s32.totalorder %s13, 0
    %p152 = por %p150, %p151
    %p153 = scmp.ne.s32.totalorder %s145, %s147
    %p154 = scmp.eq.s32.totalorder %s18, 1
    %p155 = por %p153, %p154
    %p156 = scmp.ne.s32.totalorder %s147, %s148
    %p157 = scmp.eq.s32.totalorder %s18, 0
    %p158 = por %p156, %p157
    %p159 = scmp.ne.s32.totalorder %s147, %s148
    %p160 = scmp.eq.s32.totalorder %s19, 1
    %p161 = por %p159, %p160
    %p163 = scmp.ne.s32.totalorder %s148, %s162
    %p164 = scmp.eq.s32.totalorder %s19, 0
    %p165 = por %p163, %p164
    %s167 = sadd.s32 %s166, 1
    %p170 = scmp.eq.s32.totalorder %s13, 1
    %p171 = scmp.ne.s32.totalorder %s166, %s168
    %p172 = scmp.eq.s32.totalorder %s13, 0
    %p173 = por %p171, %p172
    %p174 = scmp.ne.s32.totalorder %s166, %s168
    %p175 = scmp.eq.s32.totalorder %s18, 1
    %p176 = por %p174, %p175
    %p177 = scmp.ne.s32.totalorder %s168, %s169
    %p178 = scmp.eq.s32.totalorder %s18, 0
    %p179 = por %p177, %p178
    %p180 = scmp.ne.s32.totalorder %s168, %s169
    %p181 = scmp.eq.s32.totalorder %s19, 1
    %p182 = por %p180, %p181
    %p184 = scmp.ne.s32.totalorder %s169, %s183
    %p185 = scmp.eq.s32.totalorder %s19, 0
    %p186 = por %p184, %p185
    %s187 = ssub.s32 %s20, %s32
    %s188 = ssub.s32 %s21, %s28
    %s189 = sor.u32 %s187, %s188
    %p190 = scmp.eq.s32.totalorder %s189, 0
    %s192 = sadd.s32 %s191, 1
    %s193 = scalar_select %p190, %s191, %s192
    %p196 = pneg %p190
    %p197 = scmp.eq.s32.totalorder %s13, 1
    %p198 = por %p196, %p197
    %p199 = scmp.ne.s32.totalorder %s191, %s194
    %p200 = scmp.eq.s32.totalorder %s13, 0
    %p201 = por %p199, %p200
    %p202 = scmp.ne.s32.totalorder %s191, %s194
    %p203 = scmp.eq.s32.totalorder %s18, 1
    %p204 = por %p202, %p203
    %p205 = scmp.ne.s32.totalorder %s194, %s195
    %p206 = scmp.eq.s32.totalorder %s18, 0
    %p207 = por %p205, %p206
    %p208 = scmp.ne.s32.totalorder %s194, %s195
    %p209 = scmp.eq.s32.totalorder %s19, 1
    %p210 = por %p208, %p209
    %p212 = scmp.ne.s32.totalorder %s195, %s211
    %p213 = scmp.eq.s32.totalorder %s19, 0
    %p214 = por %p212, %p213
    %p215 = scmp.le.s32.totalorder 1, %s13
    %p216 = scmp.lt.s32.totalorder %s13, 3
    %p217 = pnand %p215, %p216
    %p218 = pneg %p217
    // Predicated region
    $region9: #{sgconv3_forward.3} parent=5 // pred_check
      _
    $region10: #{sgconv3_forward.3} parent=5 // pred_check_branch
      %220 = sbr.rel (%p217) target = $region12
    $region11: #{sgconv3_forward.3} parent=5 // pred_region
      %s221 = ssub.s32 %s13, 1
      // Predicated region
      $region13: #{sgconv3_forward.3} parent=11 // pred_check
        %p222 = pneg %p74
      $region14: #{sgconv3_forward.3} parent=11 // pred_check_branch
        %224 = sbr.rel (%p222) target = $region16
      $region15: #{sgconv3_forward.3} parent=11 // pred_region
        _
      $region16: #{sgconv3_forward.3} parent=11 // pred_fallthru
        _
      // Predicated region
      $region17: #{sgconv3_forward.3} parent=11 // pred_check
        %p225 = pneg %p95
      $region18: #{sgconv3_forward.3} parent=11 // pred_check_branch
        %227 = sbr.rel (%p225) target = $region20
      $region19: #{sgconv3_forward.3} parent=11 // pred_region
        _
      $region20: #{sgconv3_forward.3} parent=11 // pred_fallthru
        _
      // Predicated region
      $region21: #{sgconv3_forward.3} parent=11 // pred_check
        %p228 = pneg %p116
      $region22: #{sgconv3_forward.3} parent=11 // pred_check_branch
        %230 = sbr.rel (%p228) target = $region24
      $region23: #{sgconv3_forward.3} parent=11 // pred_region
        _
      $region24: #{sgconv3_forward.3} parent=11 // pred_fallthru
        _
      // Predicated region
      $region25: #{sgconv3_forward.3} parent=11 // pred_check
        %p231 = pneg %p137
      $region26: #{sgconv3_forward.3} parent=11 // pred_check_branch
        %233 = sbr.rel (%p231) target = $region28
      $region27: #{sgconv3_forward.3} parent=11 // pred_region
        _
      $region28: #{sgconv3_forward.3} parent=11 // pred_fallthru
        _
      // Predicated region
      $region29: #{sgconv3_forward.3} parent=11 // pred_check
        %p234 = pneg %p158
      $region30: #{sgconv3_forward.3} parent=11 // pred_check_branch
        %236 = sbr.rel (%p234) target = $region32
      $region31: #{sgconv3_forward.3} parent=11 // pred_region
        _
      $region32: #{sgconv3_forward.3} parent=11 // pred_fallthru
        _
      // Predicated region
      $region33: #{sgconv3_forward.3} parent=11 // pred_check
        %p237 = pneg %p179
      $region34: #{sgconv3_forward.3} parent=11 // pred_check_branch
        %239 = sbr.rel (%p237) target = $region36
      $region35: #{sgconv3_forward.3} parent=11 // pred_region
        _
      $region36: #{sgconv3_forward.3} parent=11 // pred_fallthru
        _
    $region12: #{sgconv3_forward.3} parent=5 // pred_fallthru
      _
    %p240 = scmp.lt.s32.totalorder %s13, 2
    // Predicated region
    $region37: #{sgconv3_forward.3} parent=5 // pred_check
      %p241 = pneg %p240
    $region38: #{sgconv3_forward.3} parent=5 // pred_check_branch
      %243 = sbr.rel (%p241) target = $region40
    $region39: #{sgconv3_forward.3} parent=5 // pred_region
      // Predicated region
      $region41: #{sgconv3_forward.3} parent=39 // pred_check
        %p244 = pneg %p47
      $region42: #{sgconv3_forward.3} parent=39 // pred_check_branch
        %246 = sbr.rel (%p244) target = $region44
      $region43: #{sgconv3_forward.3} parent=39 // pred_region
        %s247 = smul.u32 2, %s21
        %p248 = scmp.lt.s32.totalorder %s20, 1
        %s249 = scalar_select %p248, %s20, 1
        %p250 = scmp.lt.s32.totalorder %s247, 1
        %s251 = scalar_select %p250, %s247, 1
        %s252 = smul.addr %s249, 2
        %s253 = sadd.s32 %s251, %s252
        %s254 = smul.addr %s253, 4
        %s255 = scalar_lea.vmem %s0, %s254
        %s256 = smul.u32 2, %s21
      $region44: #{sgconv3_forward.3} parent=39 // pred_fallthru
        _
    $region40: #{sgconv3_forward.3} parent=5 // pred_fallthru
      _
    %p257 = scmp.le.s32.totalorder 1, %s13
    %p258 = scmp.lt.s32.totalorder %s13, 3
    %p259 = pnand %p257, %p258
    %p260 = pneg %p259
    // Predicated region
    $region45: #{sgconv3_forward.3} parent=5 // pred_check
      _
    $region46: #{sgconv3_forward.3} parent=5 // pred_check_branch
      %262 = sbr.rel (%p259) target = $region48
    $region47: #{sgconv3_forward.3} parent=5 // pred_region
      %s263 = ssub.s32 %s13, 1
      %s264 = smul.u32 2, %s23
      %p265 = scmp.lt.s32.totalorder %s22, 1
      %s266 = scalar_select %p265, %s22, 1
      %p267 = scmp.lt.s32.totalorder %s264, 1
      %s268 = scalar_select %p267, %s264, 1
      %s269 = smul.addr %s266, 2
      %s270 = sadd.s32 %s268, %s269
      %s271 = smul.addr %s270, 4
      %s272 = scalar_lea.vmem %s0, %s271
      %p273 = pneg %p53
      %p274 = pneg %p50
      %p275 = pneg %p74
      %p276 = pneg %p71
      %p277 = pneg %p95
      %p278 = pneg %p92
      %p279 = pneg %p116
      %p280 = pneg %p113
      %p281 = pneg %p137
      %p282 = pneg %p134
      %p283 = pneg %p158
      %p284 = pneg %p155
      %p285 = pneg %p179
      %p286 = pneg %p176
      %p287 = pneg %p207
      %p288 = pneg %p204
      %p289 = scmp.lt.s32.totalorder %s22, 1
      %s290 = scalar_select %p289, %s22, 1
      %p291 = scmp.lt.s32.totalorder %s23, 0
      %s292 = scalar_select %p291, %s23, 0
      %s293 = smul.addr %s290, 6
      %s294 = sadd.s32 %s292, %s293
      %s295 = smul.addr %s294, 4
      %s296 = scalar_lea.vmem %s7, %s295
      %s297 = smul.u32 2, %s23
      %p298 = scmp.lt.s32.totalorder %s22, 1
      %s299 = scalar_select %p298, %s22, 1
      %p300 = scmp.lt.s32.totalorder %s297, 1
      %s301 = scalar_select %p300, %s297, 1
      %s302 = smul.addr %s299, 2
      %s303 = sadd.s32 %s301, %s302
      %s304 = smul.addr %s303, 4
      %s305 = scalar_lea.vmem %s0, %s304
      %s306 = smul.u32 2, %s23
      %p307 = scmp.lt.s32.totalorder %s22, 1
      %s308 = scalar_select %p307, %s22, 1
      %p309 = scmp.lt.s32.totalorder %s23, 0
      %s310 = scalar_select %p309, %s23, 0
      %s311 = smul.addr %s308, 6
      %s312 = sadd.s32 %s310, %s311
      %s313 = smul.addr %s312, 4
      %s314 = scalar_lea.vmem %s7, %s313
      %v316 = vld [vmem:[%s305] sm:$0xf]
      %v317 = vld [vmem:[%s305 + $0x4] sm:$0xf]
      %v318 = vld [vmem:[%s1] sm:$0xf]
      %v319 = vld [vmem:[%s1 + $0x4] sm:$0xf]
      %v320 = vld [vmem:[%s1 + $0x8] sm:$0xf]
      %v321 = vld [vmem:[%s1 + $0xc] sm:$0xf]
      %v322 = vld [vmem:[%s3] sm:$0x1]
      %v324 = vperm.slane %v322, 0
      %v328 = vunpack.c.l.b16 %v316
      %v329 = vunpack.c.l.b16 %v317
      %v330 = vpack.c.b16 %v329, %v328
      %v335 = vunpack.c.l.b16 %v318
      %v336 = vunpack.c.l.b16 %v319
      %v337 = vunpack.c.l.b16 %v320
      %v338 = vunpack.c.l.b16 %v321
      %v339 = vpack.c.b16 %v336, %v335
      %v340 = vpack.c.b16 %v338, %v337
      %vm343 = vcmask 261120
      %v345 = vsel %vm343, %v330, 0
      %347 = vmatpush.bf16.msra.mxu0 0
      %348 = vmatpush.bf16.msra.mxu0 0
      %349 = vmatpush.bf16.msra.mxu0 0
      %350 = vmatpush.bf16.msra.mxu0 0
      %351 = vmatpush.bf16.msra.mxu0 0
      %352 = vmatpush.bf16.msra.mxu0 0
      %353 = vmatpush.bf16.msra.mxu0 %v340
      %354 = vmatpush.bf16.msra.mxu0 %v339
      %355 = vmatmul.bf16.gmra.mxu0 %v345
      %v356 = vpop.f32.mrf.mxu0
      %v357 = vadd.f32 %v324, %v356
      %v358 = vpop.f32.mrf.mxu0
      %v359 = vadd.f32 %v324, %v358
      %360 = vdwg.mxu0
      %v361 = vld [vmem:[%s2] sm:$0xf]
      %v362 = vld [vmem:[%s2 + $0x4] sm:$0xf]
      %v363 = vld [vmem:[%s2 + $0x8] sm:$0xf]
      %v364 = vld [vmem:[%s2 + $0xc] sm:$0xf]
      %v365 = vld [vmem:[%s4] sm:$0x1]
      %v367 = vperm.slane %v365, 0
      %v373 = vunpack.c.l.b16 %v361
      %v374 = vunpack.c.l.b16 %v362
      %v375 = vunpack.c.l.b16 %v363
      %v376 = vunpack.c.l.b16 %v364
      %v377 = vpack.c.b16 %v374, %v373
      %v378 = vpack.c.b16 %v376, %v375
      %381 = vmatpush.bf16.msra.mxu0 0
      %382 = vmatpush.bf16.msra.mxu0 0
      %383 = vmatpush.bf16.msra.mxu0 0
      %384 = vmatpush.bf16.msra.mxu0 0
      %385 = vmatpush.bf16.msra.mxu0 0
      %386 = vmatpush.bf16.msra.mxu0 0
      %387 = vmatpush.bf16.msra.mxu0 %v378
      %388 = vmatpush.bf16.msra.mxu0 %v377
      %389 = vmatmul.bf16.gmra.mxu0 %v345
      %v390 = vpop.f32.mrf.mxu0
      %v391 = vadd.f32 %v367, %v390
      %v392 = vpop.f32.mrf.mxu0
      %v393 = vadd.f32 %v367, %v392
      %394 = vdwg.mxu0
      %v395 = vxor.u32 %v391, 2147483648
      %v396 = vxor.u32 %v393, 2147483648
      %v397 = vmul.f32 %v395, 1.442695
      %v398 = vpow.pop %v397
      %v399 = vmul.f32 %v396, 1.442695
      %v400 = vpow.pop %v399
      %v401 = vadd.f32 %v398, 1.0
      %v402 = vadd.f32 %v400, 1.0
      %v403 = vrcp.pop %v401
      %v404 = vmul.f32 %v401, %v403
      %v405 = vsub.f32 1.0, %v404
      %v406 = vmul.f32 %v403, %v405
      %v407 = vadd.f32 %v403, %v406
      %vm408 = vweird.f32 %v401
      %vm409 = vweird.f32 %v403
      %vm410 = vmor %vm408, %vm409
      %v411 = vsel %vm410, %v403, %v407
      %v412 = vand.u32 2147483647, %v401
      %vm413 = vcmp.eq.f32.partialorder %v412, 8.507059e+37
      %v414 = vand.u32 %v401, 2147483648
      %v415 = vor.u32 1.1754944e-38, %v414
      %v416 = vsel %vm413, %v415, %v411
      %v417 = vmul.f32 1.0, %v416
      %v418 = vrcp.pop %v402
      %v419 = vmul.f32 %v402, %v418
      %v420 = vsub.f32 1.0, %v419
      %v421 = vmul.f32 %v418, %v420
      %v422 = vadd.f32 %v418, %v421
      %vm423 = vweird.f32 %v402
      %vm424 = vweird.f32 %v418
      %vm425 = vmor %vm423, %vm424
      %v426 = vsel %vm425, %v418, %v422
      %v427 = vand.u32 2147483647, %v402
      %vm428 = vcmp.eq.f32.partialorder %v427, 8.507059e+37
      %v429 = vand.u32 %v402, 2147483648
      %v430 = vor.u32 1.1754944e-38, %v429
      %v431 = vsel %vm428, %v430, %v426
      %v432 = vmul.f32 1.0, %v431
      %v433 = vmul.f32 %v357, %v417
      %v434 = vmul.f32 %v359, %v432
      %v435 = vpack.c.bf16 %v434, %v433
      %v436 = vld [vmem:[%s5] sm:$0xf]
      %v437 = vld [vmem:[%s5 + $0x4] sm:$0xf]
      %v438 = vld [vmem:[%s5 + $0x8] sm:$0xf]
      %v439 = vld [vmem:[%s5 + $0xc] sm:$0xf]
      %v440 = vld [vmem:[%s5 + $0x10] sm:$0xf]
      %v441 = vld [vmem:[%s5 + $0x14] sm:$0xf]
      %v442 = vld [vmem:[%s6] sm:$0xff]
      %v443 = vld [vmem:[%s6 + $0x8] sm:$0xff]
      %v444 = vld [vmem:[%s6 + $0x10] sm:$0xff]
      %v445 = vld [vmem:[%s6 + $0x18] sm:$0xff]
      %v446 = vld [vmem:[%s6 + $0x20] sm:$0xff]
      %v447 = vld [vmem:[%s6 + $0x28] sm:$0xff]
      %449 = vset.pattern.permute.xlu0 0
      %450 = vperm.xlu0 %449, %v442
      %v451 = vpop.permute.xlu0 %450
      %454 = vset.pattern.permute.xlu0 0
      %455 = vperm.xlu0 %454, %v443
      %v456 = vpop.permute.xlu0 %455
      %459 = vset.pattern.permute.xlu0 0
      %460 = vperm.xlu0 %459, %v444
      %v461 = vpop.permute.xlu0 %460
      %464 = vset.pattern.permute.xlu0 0
      %465 = vperm.xlu0 %464, %v445
      %v466 = vpop.permute.xlu0 %465
      %469 = vset.pattern.permute.xlu0 0
      %470 = vperm.xlu0 %469, %v446
      %v471 = vpop.permute.xlu0 %470
      %474 = vset.pattern.permute.xlu0 0
      %475 = vperm.xlu0 %474, %v447
      %v476 = vpop.permute.xlu0 %475
      %v484 = vunpack.c.l.b16 %v436
      %v485 = vunpack.c.l.b16 %v437
      %v486 = vunpack.c.l.b16 %v438
      %v487 = vunpack.c.l.b16 %v439
      %v488 = vunpack.c.l.b16 %v440
      %v489 = vunpack.c.l.b16 %v441
      %v490 = vpack.c.b16 %v485, %v484
      %v491 = vpack.c.b16 %v487, %v486
      %v492 = vpack.c.b16 %v489, %v488
      %vm493 = vcmask 130048
      %v495 = vsel %vm493, %v490, 0
      %v498 = vsel %vm493, %v491, 0
      %v501 = vsel %vm493, %v492, 0
      %v504 = vsel %vm493, %v435, 0
      %506 = vmatpush.bf16.xpose.msra.mxu0 0
      %507 = vmatpush.bf16.xpose.msra.mxu0 0
      %508 = vmatpush.bf16.xpose.msra.mxu0 0
      %509 = vmatpush.bf16.xpose.msra.mxu0 0
      %510 = vmatpush.bf16.xpose.msra.mxu0 0
      %511 = vmatpush.bf16.xpose.msra.mxu0 0
      %512 = vmatpush.bf16.xpose.msra.mxu0 0
      %513 = vmatpush.bf16.xpose.msra.mxu0 %v504
      %514 = vmatmul.bf16.gmra.mxu0 %v495
      %v515 = vpop.f32.mrf.mxu0
      %v516 = vadd.f32 %v451, %v515
      %v517 = vpop.f32.mrf.mxu0
      %v518 = vadd.f32 %v456, %v517
      %519 = vmatmul.bf16.gmra.mxu0 %v498
      %v520 = vpop.f32.mrf.mxu0
      %v521 = vadd.f32 %v461, %v520
      %v522 = vpop.f32.mrf.mxu0
      %v523 = vadd.f32 %v466, %v522
      %524 = vmatmul.bf16.gmra.mxu0 %v501
      %v525 = vpop.f32.mrf.mxu0
      %v526 = vadd.f32 %v471, %v525
      %v527 = vpop.f32.mrf.mxu0
      %v528 = vadd.f32 %v476, %v527
      %529 = vdwg.mxu0
      %v530 = vpack.c.bf16 %v516, %v516
      %v531 = vpack.c.bf16 %v518, %v518
      %v532 = vpack.c.bf16 %v521, %v521
      %v533 = vpack.c.bf16 %v523, %v523
      %v534 = vpack.c.bf16 %v526, %v526
      %v535 = vpack.c.bf16 %v528, %v528
      %vm536 = vcmask 125952
      %537 = vst.msk [vmem:[%s314] sm:$0xf] %vm536, %v530
      %538 = vst.msk [vmem:[%s314 + $0x4] sm:$0xf] %vm536, %v531
      %539 = vst.msk [vmem:[%s314 + $0x8] sm:$0xf] %vm536, %v532
      %540 = vst.msk [vmem:[%s314 + $0xc] sm:$0xf] %vm536, %v533
      %541 = vst.msk [vmem:[%s314 + $0x10] sm:$0xf] %vm536, %v534
      %542 = vst.msk [vmem:[%s314 + $0x14] sm:$0xf] %vm536, %v535
      %p543 = scmp.lt.s32.totalorder %s22, 1
      %s544 = scalar_select %p543, %s22, 1
      %p545 = scmp.lt.s32.totalorder %s23, 0
      %s546 = scalar_select %p545, %s23, 0
      %s547 = smul.addr %s544, 6
      %s548 = sadd.s32 %s546, %s547
      %s549 = smul.addr %s548, 4
      %s550 = scalar_lea.vmem %s7, %s549
      // Predicated region
      $region49: #{sgconv3_forward.3} parent=47 // pred_check
        %p551 = pneg %p204
      $region50: #{sgconv3_forward.3} parent=47 // pred_check_branch
        %553 = sbr.rel (%p551) target = $region52
      $region51: #{sgconv3_forward.3} parent=47 // pred_region
        _
      $region52: #{sgconv3_forward.3} parent=47 // pred_fallthru
        _
    $region48: #{sgconv3_forward.3} parent=5 // pred_fallthru
      _
    %p554 = scmp.le.s32.totalorder 2, %s13
    // Predicated region
    $region53: #{sgconv3_forward.3} parent=5 // pred_check
      %p555 = pneg %p554
    $region54: #{sgconv3_forward.3} parent=5 // pred_check_branch
      %557 = sbr.rel (%p555) target = $region56
    $region55: #{sgconv3_forward.3} parent=5 // pred_region
      %s558 = ssub.s32 %s13, 2
      // Predicated region
      $region57: #{sgconv3_forward.3} parent=55 // pred_check
        %p559 = pneg %p210
      $region58: #{sgconv3_forward.3} parent=55 // pred_check_branch
        %561 = sbr.rel (%p559) target = $region60
      $region59: #{sgconv3_forward.3} parent=55 // pred_region
        %p562 = scmp.lt.s32.totalorder %s24, 1
        %s563 = scalar_select %p562, %s24, 1
        %p564 = scmp.lt.s32.totalorder %s25, 0
        %s565 = scalar_select %p564, %s25, 0
        %s566 = smul.addr %s563, 6
        %s567 = sadd.s32 %s565, %s566
        %s568 = smul.addr %s567, 4
        %s569 = scalar_lea.vmem %s7, %s568
      $region60: #{sgconv3_forward.3} parent=55 // pred_fallthru
        _
    $region56: #{sgconv3_forward.3} parent=5 // pred_fallthru
      _
  $region6: #{sgconv3_forward.3} parent=0 // loop_footer
    %s17 = sadd.s32 1, %s13
  $region7: #{sgconv3_forward.3} parent=0 // loop_footer_branch
    %12 = sbr.rel target = $region3
  $region8: #{sgconv3_forward.3} parent=0 // loop_exit
    _

// kernel: sgconv3_forward.4
$region0: #{sgconv3_forward.4}
  #allocation0 [shape = 'u32[]', space=smem, size = 0x4, offset = 0x4, fixed_abs, tag = 'smem constant byte address 0x4 - core index']
  #allocation1 [shape = 'u32[72,128]{1,0:T(1,128)}', space=vmem, size = 0x9000, scoped, tag = 'internal scratch']
  #allocation2 [shape = 'f32[16,16]{1,0:T(8,128)}', space=vmem, size = 0x2000, scoped, tag = 'scratch operand']
  %s0 = inlined_call_operand.vmem [shape: bf16[2,48,16], index: 0, kind: input, shape index: {}]
  %s1 = inlined_call_operand.hbm [shape: bf16[1,16,16,16], index: 1, kind: input, shape index: {}]
  %s2 = inlined_call_operand.vmem [shape: bf16[2,16,16], index: 2, kind: output, shape index: {}]
  %s3 = sld [smem:[#allocation0]]
  $region57: #{sgconv3_forward.4} parent=0
    _
  %s5 = ssub.s32 1, %s3
  %s6 = scalar_select 0, %s5, %s3
  $region1: #{sgconv3_forward.4} parent=0
    #allocation3 [shape = 'u8[65536]{0}', space=vmem, size = 0x10000, scoped, tag = 'input window, operand 1, single buffered']
    #allocation4 [shape = 's32[2]{0}', space=sflag, size = 0x8, scoped, tag = 'scoped memory for sgconv3_forward.4']
    %7 = vsyncpa [#allocation4], 0
    loop: start=0, step=1, limit=4
    $region2: #{sgconv3_forward.4} parent=1 // loop_pre_header
      _
    $region3: #{sgconv3_forward.4} parent=1 // loop_header
      %s9 = sphi 0, %s13
      %p10 = scmp.ge.s32.totalorder %s9, 4
      %s16 = sphi 0, %s35
      %s17 = sphi 0, %s31
      %s18 = sphi 0, %s27
      %s19 = sphi 0, %s16
      %s20 = sphi 0, %s17
      %s21 = sphi 0, %s18
      %s22 = sphi 0, %s19
      %s23 = sphi 0, %s20
      %s24 = sphi 0, %s21
      %s44 = sphi 0, %s46
      %s47 = sphi 0, %s44
      %s48 = sphi 0, %s47
      %s64 = sphi 0, %s48
      %s76 = sphi 0, %s78
      %s79 = sphi 0, %s76
      %s80 = sphi 0, %s79
      %s96 = sphi 0, %s80
      %s104 = sphi 0, %s106
      %s107 = sphi 0, %s104
      %s108 = sphi 0, %s107
      %s124 = sphi 0, %s108
    $region4: #{sgconv3_forward.4} parent=1 // loop_header_branch
      %12 = sbr.rel (%p10) target = $region8
    $region5: #{sgconv3_forward.4} parent=1 // loop_body
      %s14 = ssub.s32 %s9, 1
      %s15 = ssub.s32 %s9, 2
      %s25 = sadd.s32 1, %s18
      %p26 = scmp.ge.s32.totalorder %s25, 1
      %s27 = scalar_select %p26, 0, %s25
      %s28 = sadd.s32 1, %s17
      %s29 = scalar_select %p26, %s28, %s17
      %p30 = scmp.ge.s32.totalorder %s29, 1
      %s31 = scalar_select %p30, 0, %s29
      %s32 = sadd.s32 1, %s16
      %s33 = scalar_select %p30, %s32, %s16
      %p34 = scmp.ge.s32.totalorder %s33, 2
      %s35 = scalar_select %p34, 0, %s33
      %p36 = scmp.lt.s32.totalorder %s18, %s17
      %s37 = scalar_select %p36, %s18, %s17
      %p38 = scmp.lt.s32.totalorder %s27, %s31
      %s39 = scalar_select %p38, %s27, %s31
      %s40 = ssub.s32 %s16, %s35
      %s41 = ssub.s32 %s37, %s39
      %s42 = sor.u32 %s40, %s41
      %p43 = scmp.eq.s32.totalorder %s42, 0
      %s45 = sadd.s32 %s44, 1
      %s46 = scalar_select %p43, %s44, %s45
      %p49 = pneg %p43
      %p50 = scmp.eq.s32.totalorder %s9, 1
      %p51 = por %p49, %p50
      %p52 = scmp.ne.s32.totalorder %s44, %s47
      %p53 = scmp.eq.s32.totalorder %s9, 0
      %p54 = por %p52, %p53
      %p55 = scmp.ne.s32.totalorder %s44, %s47
      %p56 = scmp.eq.s32.totalorder %s14, 1
      %p57 = por %p55, %p56
      %p58 = scmp.ne.s32.totalorder %s47, %s48
      %p59 = scmp.eq.s32.totalorder %s14, 0
      %p60 = por %p58, %p59
      %p61 = scmp.ne.s32.totalorder %s47, %s48
      %p62 = scmp.eq.s32.totalorder %s15, 1
      %p63 = por %p61, %p62
      %p65 = scmp.ne.s32.totalorder %s48, %s64
      %p66 = scmp.eq.s32.totalorder %s15, 0
      %p67 = por %p65, %p66
      %s68 = ssub.s32 %s17, %s18
      %p69 = scmp.gt.s32.totalorder %s68, 0
      %s70 = scalar_select %p69, %s68, 0
      %s71 = ssub.s32 %s31, %s27
      %p72 = scmp.gt.s32.totalorder %s71, 0
      %s73 = scalar_select %p72, %s71, 0
      %s74 = ssub.s32 %s70, %s73
      %p75 = scmp.eq.s32.totalorder %s74, 0
      %s77 = sadd.s32 %s76, 1
      %s78 = scalar_select %p75, %s76, %s77
      %p81 = pneg %p75
      %p82 = scmp.eq.s32.totalorder %s9, 1
      %p83 = por %p81, %p82
      %p84 = scmp.ne.s32.totalorder %s76, %s79
      %p85 = scmp.eq.s32.totalorder %s9, 0
      %p86 = por %p84, %p85
      %p87 = scmp.ne.s32.totalorder %s76, %s79
      %p88 = scmp.eq.s32.totalorder %s14, 1
      %p89 = por %p87, %p88
      %p90 = scmp.ne.s32.totalorder %s79, %s80
      %p91 = scmp.eq.s32.totalorder %s14, 0
      %p92 = por %p90, %p91
      %p93 = scmp.ne.s32.totalorder %s79, %s80
      %p94 = scmp.eq.s32.totalorder %s15, 1
      %p95 = por %p93, %p94
      %p97 = scmp.ne.s32.totalorder %s80, %s96
      %p98 = scmp.eq.s32.totalorder %s15, 0
      %p99 = por %p97, %p98
      %s100 = ssub.s32 %s16, %s35
      %s101 = ssub.s32 %s17, %s31
      %s102 = sor.u32 %s100, %s101
      %p103 = scmp.eq.s32.totalorder %s102, 0
      %s105 = sadd.s32 %s104, 1
      %s106 = scalar_select %p103, %s104, %s105
      %p109 = pneg %p103
      %p110 = scmp.eq.s32.totalorder %s9, 1
      %p111 = por %p109, %p110
      %p112 = scmp.ne.s32.totalorder %s104, %s107
      %p113 = scmp.eq.s32.totalorder %s9, 0
      %p114 = por %p112, %p113
      %p115 = scmp.ne.s32.totalorder %s104, %s107
      %p116 = scmp.eq.s32.totalorder %s14, 1
      %p117 = por %p115, %p116
      %p118 = scmp.ne.s32.totalorder %s107, %s108
      %p119 = scmp.eq.s32.totalorder %s14, 0
      %p120 = por %p118, %p119
      %p121 = scmp.ne.s32.totalorder %s107, %s108
      %p122 = scmp.eq.s32.totalorder %s15, 1
      %p123 = por %p121, %p122
      %p125 = scmp.ne.s32.totalorder %s108, %s124
      %p126 = scmp.eq.s32.totalorder %s15, 0
      %p127 = por %p125, %p126
      %p128 = scmp.le.s32.totalorder 1, %s9
      %p129 = scmp.lt.s32.totalorder %s9, 3
      %p130 = pnand %p128, %p129
      %p131 = pneg %p130
      // Predicated region
      $region9: #{sgconv3_forward.4} parent=5 // pred_check
        _
      $region10: #{sgconv3_forward.4} parent=5 // pred_check_branch
        %133 = sbr.rel (%p130) target = $region12
      $region11: #{sgconv3_forward.4} parent=5 // pred_region
        %s134 = ssub.s32 %s9, 1
        // Predicated region
        $region13: #{sgconv3_forward.4} parent=11 // pred_check
          %p135 = pneg %p92
        $region14: #{sgconv3_forward.4} parent=11 // pred_check_branch
          %137 = sbr.rel (%p135) target = $region16
        $region15: #{sgconv3_forward.4} parent=11 // pred_region
          %s138 = ssub.s32 %s20, %s21
          %p139 = scmp.gt.s32.totalorder %s138, 0
          %s140 = scalar_select %p139, %s138, 0
          %142 = vsyncadd [#allocation4], 0
          %s143 = smul.addr %s140, 32
          %s144 = smul.addr %s143, 4
          %s145 = scalar_lea.hbm %s1, %s144
          %s146 = sshll.u32 %s145, 4
          %s147 = int_to_ptr.hbm [resolvable:$true] %s146
          %s148 = sshll.u32 [#allocation3], 4
          %s149 = int_to_ptr.vmem [resolvable:$true] %s148
          %154 = dma.hbm_to_vmem [thread:$0]  %s147, 2048, %s149, [#allocation4], 64, 64, 4
        $region16: #{sgconv3_forward.4} parent=11 // pred_fallthru
          _
      $region12: #{sgconv3_forward.4} parent=5 // pred_fallthru
        _
      %p155 = scmp.lt.s32.totalorder %s9, 2
      // Predicated region
      $region17: #{sgconv3_forward.4} parent=5 // pred_check
        %p156 = pneg %p155
      $region18: #{sgconv3_forward.4} parent=5 // pred_check_branch
        %158 = sbr.rel (%p156) target = $region20
      $region19: #{sgconv3_forward.4} parent=5 // pred_region
        // Predicated region
        $region21: #{sgconv3_forward.4} parent=19 // pred_check
          %p159 = pneg %p54
        $region22: #{sgconv3_forward.4} parent=19 // pred_check_branch
          %161 = sbr.rel (%p159) target = $region24
        $region23: #{sgconv3_forward.4} parent=19 // pred_region
          %p162 = scmp.lt.s32.totalorder %s18, %s17
          %s163 = scalar_select %p162, %s18, %s17
          %p164 = scmp.lt.s32.totalorder %s16, 1
          %s165 = scalar_select %p164, %s16, 1
          %p166 = scmp.lt.s32.totalorder %s163, 0
          %s167 = scalar_select %p166, %s163, 0
          %s168 = sadd.s32 %s167, 2
          %s169 = smul.addr %s165, 6
          %s170 = sadd.s32 %s168, %s169
          %s171 = smul.addr %s170, 4
          %s172 = scalar_lea.vmem %s0, %s171
          %p173 = scmp.lt.s32.totalorder %s18, %s17
          %s174 = scalar_select %p173, %s18, %s17
        $region24: #{sgconv3_forward.4} parent=19 // pred_fallthru
          _
      $region20: #{sgconv3_forward.4} parent=5 // pred_fallthru
        _
      %p175 = scmp.le.s32.totalorder 1, %s9
      %p176 = scmp.lt.s32.totalorder %s9, 3
      %p177 = pnand %p175, %p176
      %p178 = pneg %p177
      // Predicated region
      $region25: #{sgconv3_forward.4} parent=5 // pred_check
        _
      $region26: #{sgconv3_forward.4} parent=5 // pred_check_branch
        %180 = sbr.rel (%p177) target = $region28
      $region27: #{sgconv3_forward.4} parent=5 // pred_region
        %s181 = ssub.s32 %s9, 1
        // Predicated region
        $region29: #{sgconv3_forward.4} parent=27 // pred_check
          %p182 = pneg %p92
        $region30: #{sgconv3_forward.4} parent=27 // pred_check_branch
          %184 = sbr.rel (%p182) target = $region32
        $region31: #{sgconv3_forward.4} parent=27 // pred_region
          %186 = dma.done [#allocation4], 2048
        $region32: #{sgconv3_forward.4} parent=27 // pred_fallthru
          _
        %p187 = scmp.lt.s32.totalorder %s21, %s20
        %s188 = scalar_select %p187, %s21, %s20
        %p189 = scmp.lt.s32.totalorder %s19, 1
        %s190 = scalar_select %p189, %s19, 1
        %p191 = scmp.lt.s32.totalorder %s188, 0
        %s192 = scalar_select %p191, %s188, 0
        %s193 = sadd.s32 %s192, 2
        %s194 = smul.addr %s190, 6
        %s195 = sadd.s32 %s193, %s194
        %s196 = smul.addr %s195, 4
        %s197 = scalar_lea.vmem %s0, %s196
        %p198 = pneg %p60
        %p199 = pneg %p57
        %p200 = pneg %p92
        %p201 = pneg %p89
        %p202 = pneg %p120
        %p203 = pneg %p117
        %p204 = scmp.lt.s32.totalorder %s19, 1
        %s205 = scalar_select %p204, %s19, 1
        %p206 = scmp.lt.s32.totalorder %s20, 0
        %s207 = scalar_select %p206, %s20, 0
        %s208 = smul.addr %s205, 2
        %s209 = sadd.s32 %s207, %s208
        %s210 = smul.addr %s209, 4
        %s211 = scalar_lea.vmem %s2, %s210
        %p212 = scmp.lt.s32.totalorder %s21, %s20
        %s213 = scalar_select %p212, %s21, %s20
        %p214 = scmp.lt.s32.totalorder %s19, 1
        %s215 = scalar_select %p214, %s19, 1
        %p216 = scmp.lt.s32.totalorder %s213, 0
        %s217 = scalar_select %p216, %s213, 0
        %s218 = sadd.s32 %s217, 2
        %s219 = smul.addr %s215, 6
        %s220 = sadd.s32 %s218, %s219
        %s221 = smul.addr %s220, 4
        %s222 = scalar_lea.vmem %s0, %s221
        %p223 = scmp.lt.s32.totalorder %s21, %s20
        %s224 = scalar_select %p223, %s21, %s20
        %s225 = ssub.s32 %s20, %s21
        %p226 = scmp.gt.s32.totalorder %s225, 0
        %s227 = scalar_select %p226, %s225, 0
        %p228 = scmp.lt.s32.totalorder %s19, 1
        %s229 = scalar_select %p228, %s19, 1
        %p230 = scmp.lt.s32.totalorder %s20, 0
        %s231 = scalar_select %p230, %s20, 0
        %s232 = smul.addr %s229, 2
        %s233 = sadd.s32 %s231, %s232
        %s234 = smul.addr %s233, 4
        %s235 = scalar_lea.vmem %s2, %s234
        %p237 = scmp.eq.s32.totalorder %s21, 0
        // Predicated region
        $region33: #{sgconv3_forward.4} parent=27 // pred_check
          %p238 = pneg %p237
        $region34: #{sgconv3_forward.4} parent=27 // pred_check_branch
          %240 = sbr.rel (%p238) target = $region36
        $region35: #{sgconv3_forward.4} parent=27 // pred_region
          %vm241 = vcmask 130048
          %242 = vst.msk [vmem:[#allocation2] sm:$0xff] %vm241, 0.0
          %243 = vst.msk [vmem:[#allocation2 + $0x8] sm:$0xff] %vm241, 0.0
        $region36: #{sgconv3_forward.4} parent=27 // pred_fallthru
          _
        %p244 = scmp.le.s32.totalorder %s21, %s20
        // Predicated region
        $region37: #{sgconv3_forward.4} parent=27 // pred_check
          %p245 = pneg %p244
        $region38: #{sgconv3_forward.4} parent=27 // pred_check_branch
          %247 = sbr.rel (%p245) target = $region40
        $region39: #{sgconv3_forward.4} parent=27 // pred_region
          %v248 = vld [vmem:[%s222] sm:$0xf]
          %v249 = vld [vmem:[%s222 + $0x4] sm:$0xf]
          %v252 = vrot.slane %v248, 3
          %v253 = vrot.slane %v249, 3
          %vm254 = vcmask 1040384
          %v257 = vsel %vm254, %v248, %v252
          %vm259 = vcmask 1041409
          %v260 = vsel %vm259, %v248, %v252
          %v262 = vrot.slane %v260, 1
          %vm263 = vcmask 1042434
          %v264 = vsel %vm263, %v248, %v252
          %v266 = vrot.slane %v264, 2
          %vm267 = vcmask 1043459
          %v268 = vsel %vm267, %v248, %v252
          %v270 = vrot.slane %v268, 3
          %v273 = vsel %vm254, %v249, %v253
          %v275 = vsel %vm259, %v249, %v253
          %v277 = vrot.slane %v275, 1
          %v278 = vsel %vm263, %v249, %v253
          %v280 = vrot.slane %v278, 2
          %v281 = vsel %vm267, %v249, %v253
          %v283 = vrot.slane %v281, 3
          %v284 = vunpack.i.l.s16 %v257
          %v285 = vunpack.i.h.s16 %v257
          %v286 = vunpack.i.l.s16 %v262
          %v287 = vunpack.i.h.s16 %v262
          %v288 = vunpack.i.l.s16 %v266
          %v289 = vunpack.i.h.s16 %v266
          %v290 = vunpack.i.l.s16 %v270
          %v291 = vunpack.i.h.s16 %v270
          %v292 = vunpack.i.l.s16 %v273
          %v293 = vunpack.i.h.s16 %v273
          %v294 = vunpack.i.l.s16 %v277
          %v295 = vunpack.i.h.s16 %v277
          %v296 = vunpack.i.l.s16 %v280
          %v297 = vunpack.i.h.s16 %v280
          %v298 = vunpack.i.l.s16 %v283
          %v299 = vunpack.i.h.s16 %v283
          %v300 = vld [vmem:[#allocation3] sm:$0xf]
          %v301 = vld [vmem:[#allocation3 + $0x4] sm:$0xf]
          %v302 = vld [vmem:[#allocation3 + $0x8] sm:$0xf]
          %v303 = vld [vmem:[#allocation3 + $0xc] sm:$0xf]
          %v304 = vld [vmem:[#allocation3 + $0x10] sm:$0xf]
          %v305 = vld [vmem:[#allocation3 + $0x14] sm:$0xf]
          %v306 = vld [vmem:[#allocation3 + $0x18] sm:$0xf]
          %v307 = vld [vmem:[#allocation3 + $0x1c] sm:$0xf]
          %v308 = vld [vmem:[#allocation3 + $0x20] sm:$0xf]
          %v309 = vld [vmem:[#allocation3 + $0x24] sm:$0xf]
          %v310 = vld [vmem:[#allocation3 + $0x28] sm:$0xf]
          %v311 = vld [vmem:[#allocation3 + $0x2c] sm:$0xf]
          %v312 = vld [vmem:[#allocation3 + $0x30] sm:$0xf]
          %v313 = vld [vmem:[#allocation3 + $0x34] sm:$0xf]
          %v314 = vld [vmem:[#allocation3 + $0x38] sm:$0xf]
          %v315 = vld [vmem:[#allocation3 + $0x3c] sm:$0xf]
          %v316 = vld [vmem:[#allocation3 + $0x40] sm:$0xf]
          %v317 = vld [vmem:[#allocation3 + $0x44] sm:$0xf]
          %v318 = vld [vmem:[#allocation3 + $0x48] sm:$0xf]
          %v319 = vld [vmem:[#allocation3 + $0x4c] sm:$0xf]
          %v320 = vld [vmem:[#allocation3 + $0x50] sm:$0xf]
          %v321 = vld [vmem:[#allocation3 + $0x54] sm:$0xf]
          %v322 = vld [vmem:[#allocation3 + $0x58] sm:$0xf]
          %v323 = vld [vmem:[#allocation3 + $0x5c] sm:$0xf]
          %v324 = vld [vmem:[#allocation3 + $0x60] sm:$0xf]
          %v325 = vld [vmem:[#allocation3 + $0x64] sm:$0xf]
          %v326 = vld [vmem:[#allocation3 + $0x68] sm:$0xf]
          %v327 = vld [vmem:[#allocation3 + $0x6c] sm:$0xf]
          %v328 = vld [vmem:[#allocation3 + $0x70] sm:$0xf]
          %v329 = vld [vmem:[#allocation3 + $0x74] sm:$0xf]
          %v330 = vld [vmem:[#allocation3 + $0x78] sm:$0xf]
          %v331 = vld [vmem:[#allocation3 + $0x7c] sm:$0xf]
          %v332 = vpack.i.b16 %v284, %v284
          %v333 = vperm.slane %v332, 0
          %v336 = vunpack.c.l.b16 %v300
          %v337 = vunpack.c.l.b16 %v301
          %v338 = vpack.c.b16 %v337, %v336
          %vm339 = vcmask 130048
          %v341 = vsel %vm339, %v333, 0
          %v344 = vsel %vm339, %v338, 0
          %346 = vmatpush.bf16.xpose.msra.mxu0 0
          %347 = vmatpush.bf16.xpose.msra.mxu0 0
          %348 = vmatpush.bf16.xpose.msra.mxu0 0
          %349 = vmatpush.bf16.xpose.msra.mxu0 0
          %350 = vmatpush.bf16.xpose.msra.mxu0 0
          %351 = vmatpush.bf16.xpose.msra.mxu0 0
          %352 = vmatpush.bf16.xpose.msra.mxu0 0
          %353 = vmatpush.bf16.xpose.msra.mxu0 %v344
          %354 = vmatmul.bf16.gmra.mxu0 %v341
          %v355 = vpop.f32.mrf.mxu0
          %v356 = vadd.f32 0.0, %v355
          %v357 = vpop.f32.mrf.mxu0
          %358 = vdwg.mxu0
          %v359 = vpack.i.b16 %v285, %v285
          %v360 = vperm.slane %v359, 0
          %v363 = vunpack.c.l.b16 %v302
          %v364 = vunpack.c.l.b16 %v303
          %v365 = vpack.c.b16 %v364, %v363
          %v367 = vsel %vm339, %v360, 0
          %v370 = vsel %vm339, %v365, 0
          %372 = vmatpush.bf16.xpose.msra.mxu0 0
          %373 = vmatpush.bf16.xpose.msra.mxu0 0
          %374 = vmatpush.bf16.xpose.msra.mxu0 0
          %375 = vmatpush.bf16.xpose.msra.mxu0 0
          %376 = vmatpush.bf16.xpose.msra.mxu0 0
          %377 = vmatpush.bf16.xpose.msra.mxu0 0
          %378 = vmatpush.bf16.xpose.msra.mxu0 0
          %379 = vmatpush.bf16.xpose.msra.mxu0 %v370
          %380 = vmatmul.bf16.gmra.mxu0 %v367
          %v381 = vpop.f32.mrf.mxu0
          %v382 = vadd.f32 0.0, %v381
          %v383 = vpop.f32.mrf.mxu0
          %384 = vdwg.mxu0
          %v385 = vpack.i.b16 %v286, %v286
          %v386 = vperm.slane %v385, 0
          %v389 = vunpack.c.l.b16 %v304
          %v390 = vunpack.c.l.b16 %v305
          %v391 = vpack.c.b16 %v390, %v389
          %v393 = vsel %vm339, %v386, 0
          %v396 = vsel %vm339, %v391, 0
          %398 = vmatpush.bf16.xpose.msra.mxu0 0
          %399 = vmatpush.bf16.xpose.msra.mxu0 0
          %400 = vmatpush.bf16.xpose.msra.mxu0 0
          %401 = vmatpush.bf16.xpose.msra.mxu0 0
          %402 = vmatpush.bf16.xpose.msra.mxu0 0
          %403 = vmatpush.bf16.xpose.msra.mxu0 0
          %404 = vmatpush.bf16.xpose.msra.mxu0 0
          %405 = vmatpush.bf16.xpose.msra.mxu0 %v396
          %406 = vmatmul.bf16.gmra.mxu0 %v393
          %v407 = vpop.f32.mrf.mxu0
          %v408 = vadd.f32 0.0, %v407
          %v409 = vpop.f32.mrf.mxu0
          %410 = vdwg.mxu0
          %v411 = vpack.i.b16 %v287, %v287
          %v412 = vperm.slane %v411, 0
          %v415 = vunpack.c.l.b16 %v306
          %v416 = vunpack.c.l.b16 %v307
          %v417 = vpack.c.b16 %v416, %v415
          %v419 = vsel %vm339, %v412, 0
          %v422 = vsel %vm339, %v417, 0
          %424 = vmatpush.bf16.xpose.msra.mxu0 0
          %425 = vmatpush.bf16.xpose.msra.mxu0 0
          %426 = vmatpush.bf16.xpose.msra.mxu0 0
          %427 = vmatpush.bf16.xpose.msra.mxu0 0
          %428 = vmatpush.bf16.xpose.msra.mxu0 0
          %429 = vmatpush.bf16.xpose.msra.mxu0 0
          %430 = vmatpush.bf16.xpose.msra.mxu0 0
          %431 = vmatpush.bf16.xpose.msra.mxu0 %v422
          %432 = vmatmul.bf16.gmra.mxu0 %v419
          %v433 = vpop.f32.mrf.mxu0
          %v434 = vadd.f32 0.0, %v433
          %v435 = vpop.f32.mrf.mxu0
          %436 = vdwg.mxu0
          %v437 = vpack.i.b16 %v288, %v288
          %v438 = vperm.slane %v437, 0
          %v441 = vunpack.c.l.b16 %v308
          %v442 = vunpack.c.l.b16 %v309
          %v443 = vpack.c.b16 %v442, %v441
          %v445 = vsel %vm339, %v438, 0
          %v448 = vsel %vm339, %v443, 0
          %450 = vmatpush.bf16.xpose.msra.mxu0 0
          %451 = vmatpush.bf16.xpose.msra.mxu0 0
          %452 = vmatpush.bf16.xpose.msra.mxu0 0
          %453 = vmatpush.bf16.xpose.msra.mxu0 0
          %454 = vmatpush.bf16.xpose.msra.mxu0 0
          %455 = vmatpush.bf16.xpose.msra.mxu0 0
          %456 = vmatpush.bf16.xpose.msra.mxu0 0
          %457 = vmatpush.bf16.xpose.msra.mxu0 %v448
          %458 = vmatmul.bf16.gmra.mxu0 %v445
          %v459 = vpop.f32.mrf.mxu0
          %v460 = vadd.f32 0.0, %v459
          %v461 = vpop.f32.mrf.mxu0
          %462 = vdwg.mxu0
          %v463 = vpack.i.b16 %v289, %v289
          %v464 = vperm.slane %v463, 0
          %v467 = vunpack.c.l.b16 %v310
          %v468 = vunpack.c.l.b16 %v311
          %v469 = vpack.c.b16 %v468, %v467
          %v471 = vsel %vm339, %v464, 0
          %v474 = vsel %vm339, %v469, 0
          %476 = vmatpush.bf16.xpose.msra.mxu0 0
          %477 = vmatpush.bf16.xpose.msra.mxu0 0
          %478 = vmatpush.bf16.xpose.msra.mxu0 0
          %479 = vmatpush.bf16.xpose.msra.mxu0 0
          %480 = vmatpush.bf16.xpose.msra.mxu0 0
          %481 = vmatpush.bf16.xpose.msra.mxu0 0
          %482 = vmatpush.bf16.xpose.msra.mxu0 0
          %483 = vmatpush.bf16.xpose.msra.mxu0 %v474
          %484 = vmatmul.bf16.gmra.mxu0 %v471
          %v485 = vpop.f32.mrf.mxu0
          %v486 = vadd.f32 0.0, %v485
          %v487 = vpop.f32.mrf.mxu0
          %488 = vdwg.mxu0
          %v489 = vpack.i.b16 %v290, %v290
          %v490 = vperm.slane %v489, 0
          %v493 = vunpack.c.l.b16 %v312
          %v494 = vunpack.c.l.b16 %v313
          %v495 = vpack.c.b16 %v494, %v493
          %v497 = vsel %vm339, %v490, 0
          %v500 = vsel %vm339, %v495, 0
          %502 = vmatpush.bf16.xpose.msra.mxu0 0
          %503 = vmatpush.bf16.xpose.msra.mxu0 0
          %504 = vmatpush.bf16.xpose.msra.mxu0 0
          %505 = vmatpush.bf16.xpose.msra.mxu0 0
          %506 = vmatpush.bf16.xpose.msra.mxu0 0
          %507 = vmatpush.bf16.xpose.msra.mxu0 0
          %508 = vmatpush.bf16.xpose.msra.mxu0 0
          %509 = vmatpush.bf16.xpose.msra.mxu0 %v500
          %510 = vmatmul.bf16.gmra.mxu0 %v497
          %v511 = vpop.f32.mrf.mxu0
          %v512 = vadd.f32 0.0, %v511
          %v513 = vpop.f32.mrf.mxu0
          %514 = vdwg.mxu0
          %v515 = vpack.i.b16 %v291, %v291
          %v516 = vperm.slane %v515, 0
          %v519 = vunpack.c.l.b16 %v314
          %v520 = vunpack.c.l.b16 %v315
          %v521 = vpack.c.b16 %v520, %v519
          %v523 = vsel %vm339, %v516, 0
          %v526 = vsel %vm339, %v521, 0
          %528 = vmatpush.bf16.xpose.msra.mxu0 0
          %529 = vmatpush.bf16.xpose.msra.mxu0 0
          %530 = vmatpush.bf16.xpose.msra.mxu0 0
          %531 = vmatpush.bf16.xpose.msra.mxu0 0
          %532 = vmatpush.bf16.xpose.msra.mxu0 0
          %533 = vmatpush.bf16.xpose.msra.mxu0 0
          %534 = vmatpush.bf16.xpose.msra.mxu0 0
          %535 = vmatpush.bf16.xpose.msra.mxu0 %v526
          %536 = vmatmul.bf16.gmra.mxu0 %v523
          %v537 = vpop.f32.mrf.mxu0
          %v538 = vadd.f32 0.0, %v537
          %v539 = vpop.f32.mrf.mxu0
          %540 = vdwg.mxu0
          %v541 = vpack.i.b16 %v292, %v292
          %v542 = vperm.slane %v541, 0
          %v545 = vunpack.c.l.b16 %v316
          %v546 = vunpack.c.l.b16 %v317
          %v547 = vpack.c.b16 %v546, %v545
          %v549 = vsel %vm339, %v542, 0
          %v552 = vsel %vm339, %v547, 0
          %554 = vmatpush.bf16.xpose.msra.mxu0 0
          %555 = vmatpush.bf16.xpose.msra.mxu0 0
          %556 = vmatpush.bf16.xpose.msra.mxu0 0
          %557 = vmatpush.bf16.xpose.msra.mxu0 0
          %558 = vmatpush.bf16.xpose.msra.mxu0 0
          %559 = vmatpush.bf16.xpose.msra.mxu0 0
          %560 = vmatpush.bf16.xpose.msra.mxu0 0
          %561 = vmatpush.bf16.xpose.msra.mxu0 %v552
          %562 = vmatmul.bf16.gmra.mxu0 %v549
          %v563 = vpop.f32.mrf.mxu0
          %v564 = vadd.f32 0.0, %v563
          %v565 = vpop.f32.mrf.mxu0
          %566 = vdwg.mxu0
          %v567 = vpack.i.b16 %v293, %v293
          %v568 = vperm.slane %v567, 0
          %v571 = vunpack.c.l.b16 %v318
          %v572 = vunpack.c.l.b16 %v319
          %v573 = vpack.c.b16 %v572, %v571
          %v575 = vsel %vm339, %v568, 0
          %v578 = vsel %vm339, %v573, 0
          %580 = vmatpush.bf16.xpose.msra.mxu0 0
          %581 = vmatpush.bf16.xpose.msra.mxu0 0
          %582 = vmatpush.bf16.xpose.msra.mxu0 0
          %583 = vmatpush.bf16.xpose.msra.mxu0 0
          %584 = vmatpush.bf16.xpose.msra.mxu0 0
          %585 = vmatpush.bf16.xpose.msra.mxu0 0
          %586 = vmatpush.bf16.xpose.msra.mxu0 0
          %587 = vmatpush.bf16.xpose.msra.mxu0 %v578
          %588 = vmatmul.bf16.gmra.mxu0 %v575
          %v589 = vpop.f32.mrf.mxu0
          %v590 = vadd.f32 0.0, %v589
          %v591 = vpop.f32.mrf.mxu0
          %592 = vdwg.mxu0
          %v593 = vpack.i.b16 %v294, %v294
          %v594 = vperm.slane %v593, 0
          %v597 = vunpack.c.l.b16 %v320
          %v598 = vunpack.c.l.b16 %v321
          %v599 = vpack.c.b16 %v598, %v597
          %v601 = vsel %vm339, %v594, 0
          %v604 = vsel %vm339, %v599, 0
          %606 = vmatpush.bf16.xpose.msra.mxu0 0
          %607 = vmatpush.bf16.xpose.msra.mxu0 0
          %608 = vmatpush.bf16.xpose.msra.mxu0 0
          %609 = vmatpush.bf16.xpose.msra.mxu0 0
          %610 = vmatpush.bf16.xpose.msra.mxu0 0
          %611 = vmatpush.bf16.xpose.msra.mxu0 0
          %612 = vmatpush.bf16.xpose.msra.mxu0 0
          %613 = vmatpush.bf16.xpose.msra.mxu0 %v604
          %614 = vmatmul.bf16.gmra.mxu0 %v601
          %v615 = vpop.f32.mrf.mxu0
          %v616 = vadd.f32 0.0, %v615
          %v617 = vpop.f32.mrf.mxu0
          %618 = vdwg.mxu0
          %v619 = vpack.i.b16 %v295, %v295
          %v620 = vperm.slane %v619, 0
          %v623 = vunpack.c.l.b16 %v322
          %v624 = vunpack.c.l.b16 %v323
          %v625 = vpack.c.b16 %v624, %v623
          %v627 = vsel %vm339, %v620, 0
          %v630 = vsel %vm339, %v625, 0
          %632 = vmatpush.bf16.xpose.msra.mxu0 0
          %633 = vmatpush.bf16.xpose.msra.mxu0 0
          %634 = vmatpush.bf16.xpose.msra.mxu0 0
          %635 = vmatpush.bf16.xpose.msra.mxu0 0
          %636 = vmatpush.bf16.xpose.msra.mxu0 0
          %637 = vmatpush.bf16.xpose.msra.mxu0 0
          %638 = vmatpush.bf16.xpose.msra.mxu0 0
          %639 = vmatpush.bf16.xpose.msra.mxu0 %v630
          %640 = vmatmul.bf16.gmra.mxu0 %v627
          %v641 = vpop.f32.mrf.mxu0
          %v642 = vadd.f32 0.0, %v641
          %v643 = vpop.f32.mrf.mxu0
          %644 = vdwg.mxu0
          %v645 = vpack.i.b16 %v296, %v296
          %v646 = vperm.slane %v645, 0
          %v649 = vunpack.c.l.b16 %v324
          %v650 = vunpack.c.l.b16 %v325
          %v651 = vpack.c.b16 %v650, %v649
          %v653 = vsel %vm339, %v646, 0
          %v656 = vsel %vm339, %v651, 0
          %658 = vmatpush.bf16.xpose.msra.mxu0 0
          %659 = vmatpush.bf16.xpose.msra.mxu0 0
          %660 = vmatpush.bf16.xpose.msra.mxu0 0
          %661 = vmatpush.bf16.xpose.msra.mxu0 0
          %662 = vmatpush.bf16.xpose.msra.mxu0 0
          %663 = vmatpush.bf16.xpose.msra.mxu0 0
          %664 = vmatpush.bf16.xpose.msra.mxu0 0
          %665 = vmatpush.bf16.xpose.msra.mxu0 %v656
          %666 = vmatmul.bf16.gmra.mxu0 %v653
          %v667 = vpop.f32.mrf.mxu0
          %v668 = vadd.f32 0.0, %v667
          %v669 = vpop.f32.mrf.mxu0
          %670 = vdwg.mxu0
          %v671 = vpack.i.b16 %v297, %v297
          %v672 = vperm.slane %v671, 0
          %v675 = vunpack.c.l.b16 %v326
          %v676 = vunpack.c.l.b16 %v327
          %v677 = vpack.c.b16 %v676, %v675
          %v679 = vsel %vm339, %v672, 0
          %v682 = vsel %vm339, %v677, 0
          %684 = vmatpush.bf16.xpose.msra.mxu0 0
          %685 = vmatpush.bf16.xpose.msra.mxu0 0
          %686 = vmatpush.bf16.xpose.msra.mxu0 0
          %687 = vmatpush.bf16.xpose.msra.mxu0 0
          %688 = vmatpush.bf16.xpose.msra.mxu0 0
          %689 = vmatpush.bf16.xpose.msra.mxu0 0
          %690 = vmatpush.bf16.xpose.msra.mxu0 0
          %691 = vmatpush.bf16.xpose.msra.mxu0 %v682
          %692 = vmatmul.bf16.gmra.mxu0 %v679
          %v693 = vpop.f32.mrf.mxu0
          %v694 = vadd.f32 0.0, %v693
          %v695 = vpop.f32.mrf.mxu0
          %696 = vdwg.mxu0
          %v697 = vpack.i.b16 %v298, %v298
          %v698 = vperm.slane %v697, 0
          %v701 = vunpack.c.l.b16 %v328
          %v702 = vunpack.c.l.b16 %v329
          %v703 = vpack.c.b16 %v702, %v701
          %v705 = vsel %vm339, %v698, 0
          %v708 = vsel %vm339, %v703, 0
          %710 = vmatpush.bf16.xpose.msra.mxu0 0
          %711 = vmatpush.bf16.xpose.msra.mxu0 0
          %712 = vmatpush.bf16.xpose.msra.mxu0 0
          %713 = vmatpush.bf16.xpose.msra.mxu0 0
          %714 = vmatpush.bf16.xpose.msra.mxu0 0
          %715 = vmatpush.bf16.xpose.msra.mxu0 0
          %716 = vmatpush.bf16.xpose.msra.mxu0 0
          %717 = vmatpush.bf16.xpose.msra.mxu0 %v708
          %718 = vmatmul.bf16.gmra.mxu0 %v705
          %v719 = vpop.f32.mrf.mxu0
          %v720 = vadd.f32 0.0, %v719
          %v721 = vpop.f32.mrf.mxu0
          %722 = vdwg.mxu0
          %v723 = vpack.i.b16 %v299, %v299
          %v724 = vperm.slane %v723, 0
          %v727 = vunpack.c.l.b16 %v330
          %v728 = vunpack.c.l.b16 %v331
          %v729 = vpack.c.b16 %v728, %v727
          %v731 = vsel %vm339, %v724, 0
          %v734 = vsel %vm339, %v729, 0
          %736 = vmatpush.bf16.xpose.msra.mxu0 0
          %737 = vmatpush.bf16.xpose.msra.mxu0 0
          %738 = vmatpush.bf16.xpose.msra.mxu0 0
          %739 = vmatpush.bf16.xpose.msra.mxu0 0
          %740 = vmatpush.bf16.xpose.msra.mxu0 0
          %741 = vmatpush.bf16.xpose.msra.mxu0 0
          %742 = vmatpush.bf16.xpose.msra.mxu0 0
          %743 = vmatpush.bf16.xpose.msra.mxu0 %v734
          %744 = vmatmul.bf16.gmra.mxu0 %v731
          %v745 = vpop.f32.mrf.mxu0
          %v746 = vadd.f32 0.0, %v745
          %v747 = vpop.f32.mrf.mxu0
          %748 = vdwg.mxu0
          %v749 = vld [vmem:[#allocation2] sm:$0xff]
          %v750 = vld [vmem:[#allocation2 + $0x8] sm:$0xff]
          %v767 = vrot.slane %v382, 7
          %v768 = vsel %vm259, %v767, %v356
          %v769 = vrot.slane %v408, 6
          %v770 = vsel %vm263, %v769, %v768
          %v771 = vrot.slane %v434, 5
          %v772 = vsel %vm267, %v771, %v770
          %v773 = vrot.slane %v460, 4
          %vm774 = vcmask 1044484
          %v775 = vsel %vm774, %v773, %v772
          %v776 = vrot.slane %v486, 3
          %vm777 = vcmask 1045509
          %v778 = vsel %vm777, %v776, %v775
          %v779 = vrot.slane %v512, 2
          %vm780 = vcmask 1046534
          %v781 = vsel %vm780, %v779, %v778
          %v782 = vrot.slane %v538, 1
          %vm783 = vcmask 1047559
          %v784 = vsel %vm783, %v782, %v781
          %v785 = vrot.slane %v590, 7
          %v786 = vsel %vm259, %v785, %v564
          %v787 = vrot.slane %v616, 6
          %v788 = vsel %vm263, %v787, %v786
          %v789 = vrot.slane %v642, 5
          %v790 = vsel %vm267, %v789, %v788
          %v791 = vrot.slane %v668, 4
          %v792 = vsel %vm774, %v791, %v790
          %v793 = vrot.slane %v694, 3
          %v794 = vsel %vm777, %v793, %v792
          %v795 = vrot.slane %v720, 2
          %v796 = vsel %vm780, %v795, %v794
          %v797 = vrot.slane %v746, 1
          %v798 = vsel %vm783, %v797, %v796
          %v801 = vadd.f32 %v749, %v784
          %v802 = vadd.f32 %v750, %v798
          %803 = vst.msk [vmem:[#allocation2] sm:$0xff] %vm339, %v801
          %804 = vst.msk [vmem:[#allocation2 + $0x8] sm:$0xff] %vm339, %v802
        $region40: #{sgconv3_forward.4} parent=27 // pred_fallthru
          _
        // Predicated region
        $region41: #{sgconv3_forward.4} parent=27 // pred_check
          %p805 = pneg %p237
        $region42: #{sgconv3_forward.4} parent=27 // pred_check_branch
          %807 = sbr.rel (%p805) target = $region44
        $region43: #{sgconv3_forward.4} parent=27 // pred_region
          %v808 = vld [vmem:[#allocation2] sm:$0xff]
          %v809 = vld [vmem:[#allocation2 + $0x8] sm:$0xff]
          %v810 = vpack.c.bf16 %v808, %v808
          %v811 = vpack.c.bf16 %v809, %v809
          %vm812 = vcmask 125952
          %813 = vst.msk [vmem:[%s235] sm:$0xf] %vm812, %v810
          %814 = vst.msk [vmem:[%s235 + $0x4] sm:$0xf] %vm812, %v811
        $region44: #{sgconv3_forward.4} parent=27 // pred_fallthru
          _
        %p815 = scmp.lt.s32.totalorder %s19, 1
        %s816 = scalar_select %p815, %s19, 1
        %p817 = scmp.lt.s32.totalorder %s20, 0
        %s818 = scalar_select %p817, %s20, 0
        %s819 = smul.addr %s816, 2
        %s820 = sadd.s32 %s818, %s819
        %s821 = smul.addr %s820, 4
        %s822 = scalar_lea.vmem %s2, %s821
        // Predicated region
        $region45: #{sgconv3_forward.4} parent=27 // pred_check
          %p823 = pneg %p117
        $region46: #{sgconv3_forward.4} parent=27 // pred_check_branch
          %825 = sbr.rel (%p823) target = $region48
        $region47: #{sgconv3_forward.4} parent=27 // pred_region
          _
        $region48: #{sgconv3_forward.4} parent=27 // pred_fallthru
          _
      $region28: #{sgconv3_forward.4} parent=5 // pred_fallthru
        _
      %p826 = scmp.le.s32.totalorder 2, %s9
      // Predicated region
      $region49: #{sgconv3_forward.4} parent=5 // pred_check
        %p827 = pneg %p826
      $region50: #{sgconv3_forward.4} parent=5 // pred_check_branch
        %829 = sbr.rel (%p827) target = $region52
      $region51: #{sgconv3_forward.4} parent=5 // pred_region
        %s830 = ssub.s32 %s9, 2
        // Predicated region
        $region53: #{sgconv3_forward.4} parent=51 // pred_check
          %p831 = pneg %p123
        $region54: #{sgconv3_forward.4} parent=51 // pred_check_branch
          %833 = sbr.rel (%p831) target = $region56
        $region55: #{sgconv3_forward.4} parent=51 // pred_region
          %p834 = scmp.lt.s32.totalorder %s22, 1
          %s835 = scalar_select %p834, %s22, 1
          %p836 = scmp.lt.s32.totalorder %s23, 0
          %s837 = scalar_select %p836, %s23, 0
          %s838 = smul.addr %s835, 2
          %s839 = sadd.s32 %s837, %s838
          %s840 = smul.addr %s839, 4
          %s841 = scalar_lea.vmem %s2, %s840
        $region56: #{sgconv3_forward.4} parent=51 // pred_fallthru
          _
      $region52: #{sgconv3_forward.4} parent=5 // pred_fallthru
        _
    $region6: #{sgconv3_forward.4} parent=1 // loop_footer
      %s13 = sadd.s32 1, %s9
    $region7: #{sgconv3_forward.4} parent=1 // loop_footer_branch
      %8 = sbr.rel target = $region3
    $region8: #{sgconv3_forward.4} parent=1 // loop_exit
      _
    %842 = vsyncpa [#allocation4], 1
    %s843 = scalar_lea.sflag [#allocation4], 1
    %844 = vsyncpa %s843, 1

// kernel: sgconv3_forward.5
$region0: #{sgconv3_forward.5}
  #allocation0 [shape = 'u32[]', space=smem, size = 0x4, offset = 0x4, fixed_abs, tag = 'smem constant byte address 0x4 - core index']
  #allocation1 [shape = 'u32[72,128]{1,0:T(1,128)}', space=vmem, size = 0x9000, scoped, tag = 'internal scratch']
  #allocation2 [shape = 'f32[8,4,16]{2,1,0:T(4,128)}', space=vmem, size = 0x4000, scoped, tag = 'scratch operand']
  %s0 = inlined_call_operand.vmem [shape: bf16[2,16,16], index: 0, kind: input, shape index: {}]
  %s1 = inlined_call_operand.vmem [shape: bf16[2,48,16], index: 1, kind: input, shape index: {}, may-alias: {1,2}]
  %s2 = inlined_call_operand.vmem [shape: bf16[2,48,16], index: 2, kind: input, shape index: {}, may-alias: {1,2}]
  %s3 = inlined_call_operand.vmem [shape: bf16[1,8,16,16], index: 3, kind: input, shape index: {}]
  %s4 = inlined_call_operand.vmem [shape: bf16[16,16], index: 4, kind: input, shape index: {}]
  %s5 = inlined_call_operand.vmem [shape: f32[1,16], index: 5, kind: input, shape index: {}]
  %s6 = inlined_call_operand.hbm [shape: f32[2,16,16], index: 6, kind: output, shape index: {}]
  %s7 = sld [smem:[#allocation0]]
  $region69: #{sgconv3_forward.5} parent=0
    _
  %s9 = ssub.s32 1, %s7
  %s10 = scalar_select 0, %s9, %s7
  $region1: #{sgconv3_forward.5} parent=0
    #allocation3 [shape = 'u8[16384]{0}', space=vmem, size = 0x4000, scoped, tag = 'output window, operand 0']
    #allocation4 [shape = 's32[2]{0}', space=sflag, size = 0x8, scoped, tag = 'scoped memory for sgconv3_forward.5']
    %11 = vsyncpa [#allocation4], 0
    %s12 = scalar_lea.sflag [#allocation4], 1
    %13 = vsyncpa %s12, 0
    loop: start=0, step=1, limit=4
    $region2: #{sgconv3_forward.5} parent=1 // loop_pre_header
      _
    $region3: #{sgconv3_forward.5} parent=1 // loop_header
      %s15 = sphi 0, %s19
      %p16 = scmp.ge.s32.totalorder %s15, 4
      %s22 = sphi 0, %s41
      %s23 = sphi 0, %s37
      %s24 = sphi 0, %s33
      %s25 = sphi 0, %s22
      %s26 = sphi 0, %s23
      %s27 = sphi 0, %s24
      %s28 = sphi 0, %s25
      %s29 = sphi 0, %s26
      %s30 = sphi 0, %s27
      %s50 = sphi 0, %s52
      %s53 = sphi 0, %s50
      %s54 = sphi 0, %s53
      %s70 = sphi 0, %s54
      %s82 = sphi 0, %s84
      %s85 = sphi 0, %s82
      %s86 = sphi 0, %s85
      %s102 = sphi 0, %s86
      %s110 = sphi 0, %s112
      %s113 = sphi 0, %s110
      %s114 = sphi 0, %s113
      %s130 = sphi 0, %s114
      %s142 = sphi 0, %s144
      %s145 = sphi 0, %s142
      %s146 = sphi 0, %s145
      %s162 = sphi 0, %s146
      %s166 = sphi 0, %s166
      %s168 = sphi 0, %s166
      %s169 = sphi 0, %s168
      %s183 = sphi 0, %s169
      %s187 = sphi 0, %s187
      %s189 = sphi 0, %s187
      %s190 = sphi 0, %s189
      %s204 = sphi 0, %s190
      %s212 = sphi 0, %s214
      %s215 = sphi 0, %s212
      %s216 = sphi 0, %s215
      %s232 = sphi 0, %s216
    $region4: #{sgconv3_forward.5} parent=1 // loop_header_branch
      %18 = sbr.rel (%p16) target = $region8
    $region5: #{sgconv3_forward.5} parent=1 // loop_body
      %s20 = ssub.s32 %s15, 1
      %s21 = ssub.s32 %s15, 2
      %s31 = sadd.s32 1, %s24
      %p32 = scmp.ge.s32.totalorder %s31, 1
      %s33 = scalar_select %p32, 0, %s31
      %s34 = sadd.s32 1, %s23
      %s35 = scalar_select %p32, %s34, %s23
      %p36 = scmp.ge.s32.totalorder %s35, 1
      %s37 = scalar_select %p36, 0, %s35
      %s38 = sadd.s32 1, %s22
      %s39 = scalar_select %p36, %s38, %s22
      %p40 = scmp.ge.s32.totalorder %s39, 2
      %s41 = scalar_select %p40, 0, %s39
      %p42 = scmp.lt.s32.totalorder %s24, %s23
      %s43 = scalar_select %p42, %s24, %s23
      %p44 = scmp.lt.s32.totalorder %s33, %s37
      %s45 = scalar_select %p44, %s33, %s37
      %s46 = ssub.s32 %s22, %s41
      %s47 = ssub.s32 %s43, %s45
      %s48 = sor.u32 %s46, %s47
      %p49 = scmp.eq.s32.totalorder %s48, 0
      %s51 = sadd.s32 %s50, 1
      %s52 = scalar_select %p49, %s50, %s51
      %p55 = pneg %p49
      %p56 = scmp.eq.s32.totalorder %s15, 1
      %p57 = por %p55, %p56
      %p58 = scmp.ne.s32.totalorder %s50, %s53
      %p59 = scmp.eq.s32.totalorder %s15, 0
      %p60 = por %p58, %p59
      %p61 = scmp.ne.s32.totalorder %s50, %s53
      %p62 = scmp.eq.s32.totalorder %s20, 1
      %p63 = por %p61, %p62
      %p64 = scmp.ne.s32.totalorder %s53, %s54
      %p65 = scmp.eq.s32.totalorder %s20, 0
      %p66 = por %p64, %p65
      %p67 = scmp.ne.s32.totalorder %s53, %s54
      %p68 = scmp.eq.s32.totalorder %s21, 1
      %p69 = por %p67, %p68
      %p71 = scmp.ne.s32.totalorder %s54, %s70
      %p72 = scmp.eq.s32.totalorder %s21, 0
      %p73 = por %p71, %p72
      %p74 = scmp.lt.s32.totalorder %s24, %s23
      %s75 = scalar_select %p74, %s24, %s23
      %p76 = scmp.lt.s32.totalorder %s33, %s37
      %s77 = scalar_select %p76, %s33, %s37
      %s78 = ssub.s32 %s22, %s41
      %s79 = ssub.s32 %s75, %s77
      %s80 = sor.u32 %s78, %s79
      %p81 = scmp.eq.s32.totalorder %s80, 0
      %s83 = sadd.s32 %s82, 1
      %s84 = scalar_select %p81, %s82, %s83
      %p87 = pneg %p81
      %p88 = scmp.eq.s32.totalorder %s15, 1
      %p89 = por %p87, %p88
      %p90 = scmp.ne.s32.totalorder %s82, %s85
      %p91 = scmp.eq.s32.totalorder %s15, 0
      %p92 = por %p90, %p91
      %p93 = scmp.ne.s32.totalorder %s82, %s85
      %p94 = scmp.eq.s32.totalorder %s20, 1
      %p95 = por %p93, %p94
      %p96 = scmp.ne.s32.totalorder %s85, %s86
      %p97 = scmp.eq.s32.totalorder %s20, 0
      %p98 = por %p96, %p97
      %p99 = scmp.ne.s32.totalorder %s85, %s86
      %p100 = scmp.eq.s32.totalorder %s21, 1
      %p101 = por %p99, %p100
      %p103 = scmp.ne.s32.totalorder %s86, %s102
      %p104 = scmp.eq.s32.totalorder %s21, 0
      %p105 = por %p103, %p104
      %s106 = ssub.s32 %s22, %s41
      %s107 = ssub.s32 %s23, %s37
      %s108 = sor.u32 %s106, %s107
      %p109 = scmp.eq.s32.totalorder %s108, 0
      %s111 = sadd.s32 %s110, 1
      %s112 = scalar_select %p109, %s110, %s111
      %p115 = pneg %p109
      %p116 = scmp.eq.s32.totalorder %s15, 1
      %p117 = por %p115, %p116
      %p118 = scmp.ne.s32.totalorder %s110, %s113
      %p119 = scmp.eq.s32.totalorder %s15, 0
      %p120 = por %p118, %p119
      %p121 = scmp.ne.s32.totalorder %s110, %s113
      %p122 = scmp.eq.s32.totalorder %s20, 1
      %p123 = por %p121, %p122
      %p124 = scmp.ne.s32.totalorder %s113, %s114
      %p125 = scmp.eq.s32.totalorder %s20, 0
      %p126 = por %p124, %p125
      %p127 = scmp.ne.s32.totalorder %s113, %s114
      %p128 = scmp.eq.s32.totalorder %s21, 1
      %p129 = por %p127, %p128
      %p131 = scmp.ne.s32.totalorder %s114, %s130
      %p132 = scmp.eq.s32.totalorder %s21, 0
      %p133 = por %p131, %p132
      %s134 = ssub.s32 %s23, %s24
      %p135 = scmp.gt.s32.totalorder %s134, 0
      %s136 = scalar_select %p135, %s134, 0
      %s137 = ssub.s32 %s37, %s33
      %p138 = scmp.gt.s32.totalorder %s137, 0
      %s139 = scalar_select %p138, %s137, 0
      %s140 = ssub.s32 %s136, %s139
      %p141 = scmp.eq.s32.totalorder %s140, 0
      %s143 = sadd.s32 %s142, 1
      %s144 = scalar_select %p141, %s142, %s143
      %p147 = pneg %p141
      %p148 = scmp.eq.s32.totalorder %s15, 1
      %p149 = por %p147, %p148
      %p150 = scmp.ne.s32.totalorder %s142, %s145
      %p151 = scmp.eq.s32.totalorder %s15, 0
      %p152 = por %p150, %p151
      %p153 = scmp.ne.s32.totalorder %s142, %s145
      %p154 = scmp.eq.s32.totalorder %s20, 1
      %p155 = por %p153, %p154
      %p156 = scmp.ne.s32.totalorder %s145, %s146
      %p157 = scmp.eq.s32.totalorder %s20, 0
      %p158 = por %p156, %p157
      %p159 = scmp.ne.s32.totalorder %s145, %s146
      %p160 = scmp.eq.s32.totalorder %s21, 1
      %p161 = por %p159, %p160
      %p163 = scmp.ne.s32.totalorder %s146, %s162
      %p164 = scmp.eq.s32.totalorder %s21, 0
      %p165 = por %p163, %p164
      %s167 = sadd.s32 %s166, 1
      %p170 = scmp.eq.s32.totalorder %s15, 1
      %p171 = scmp.ne.s32.totalorder %s166, %s168
      %p172 = scmp.eq.s32.totalorder %s15, 0
      %p173 = por %p171, %p172
      %p174 = scmp.ne.s32.totalorder %s166, %s168
      %p175 = scmp.eq.s32.totalorder %s20, 1
      %p176 = por %p174, %p175
      %p177 = scmp.ne.s32.totalorder %s168, %s169
      %p178 = scmp.eq.s32.totalorder %s20, 0
      %p179 = por %p177, %p178
      %p180 = scmp.ne.s32.totalorder %s168, %s169
      %p181 = scmp.eq.s32.totalorder %s21, 1
      %p182 = por %p180, %p181
      %p184 = scmp.ne.s32.totalorder %s169, %s183
      %p185 = scmp.eq.s32.totalorder %s21, 0
      %p186 = por %p184, %p185
      %s188 = sadd.s32 %s187, 1
      %p191 = scmp.eq.s32.totalorder %s15, 1
      %p192 = scmp.ne.s32.totalorder %s187, %s189
      %p193 = scmp.eq.s32.totalorder %s15, 0
      %p194 = por %p192, %p193
      %p195 = scmp.ne.s32.totalorder %s187, %s189
      %p196 = scmp.eq.s32.totalorder %s20, 1
      %p197 = por %p195, %p196
      %p198 = scmp.ne.s32.totalorder %s189, %s190
      %p199 = scmp.eq.s32.totalorder %s20, 0
      %p200 = por %p198, %p199
      %p201 = scmp.ne.s32.totalorder %s189, %s190
      %p202 = scmp.eq.s32.totalorder %s21, 1
      %p203 = por %p201, %p202
      %p205 = scmp.ne.s32.totalorder %s190, %s204
      %p206 = scmp.eq.s32.totalorder %s21, 0
      %p207 = por %p205, %p206
      %s208 = ssub.s32 %s22, %s41
      %s209 = ssub.s32 %s23, %s37
      %s210 = sor.u32 %s208, %s209
      %p211 = scmp.eq.s32.totalorder %s210, 0
      %s213 = sadd.s32 %s212, 1
      %s214 = scalar_select %p211, %s212, %s213
      %p217 = pneg %p211
      %p218 = scmp.eq.s32.totalorder %s15, 1
      %p219 = por %p217, %p218
      %p220 = scmp.ne.s32.totalorder %s212, %s215
      %p221 = scmp.eq.s32.totalorder %s15, 0
      %p222 = por %p220, %p221
      %p223 = scmp.ne.s32.totalorder %s212, %s215
      %p224 = scmp.eq.s32.totalorder %s20, 1
      %p225 = por %p223, %p224
      %p226 = scmp.ne.s32.totalorder %s215, %s216
      %p227 = scmp.eq.s32.totalorder %s20, 0
      %p228 = por %p226, %p227
      %p229 = scmp.ne.s32.totalorder %s215, %s216
      %p230 = scmp.eq.s32.totalorder %s21, 1
      %p231 = por %p229, %p230
      %p233 = scmp.ne.s32.totalorder %s216, %s232
      %p234 = scmp.eq.s32.totalorder %s21, 0
      %p235 = por %p233, %p234
      %p236 = scmp.le.s32.totalorder 1, %s15
      %p237 = scmp.lt.s32.totalorder %s15, 3
      %p238 = pnand %p236, %p237
      %p239 = pneg %p238
      // Predicated region
      $region9: #{sgconv3_forward.5} parent=5 // pred_check
        _
      $region10: #{sgconv3_forward.5} parent=5 // pred_check_branch
        %241 = sbr.rel (%p238) target = $region12
      $region11: #{sgconv3_forward.5} parent=5 // pred_region
        %s242 = ssub.s32 %s15, 1
        // Predicated region
        $region13: #{sgconv3_forward.5} parent=11 // pred_check
          %p243 = pneg %p158
        $region14: #{sgconv3_forward.5} parent=11 // pred_check_branch
          %245 = sbr.rel (%p243) target = $region16
        $region15: #{sgconv3_forward.5} parent=11 // pred_region
          %s246 = ssub.s32 %s26, %s27
          %p247 = scmp.gt.s32.totalorder %s246, 0
          %s248 = scalar_select %p247, %s246, 0
          %p249 = scmp.lt.s32.totalorder %s248, 0
          %s250 = scalar_select %p249, %s248, 0
          %s251 = smul.addr %s250, 16
          %s252 = smul.addr %s251, 4
          %s253 = scalar_lea.vmem %s3, %s252
          %s254 = ssub.s32 %s26, %s27
          %p255 = scmp.gt.s32.totalorder %s254, 0
          %s256 = scalar_select %p255, %s254, 0
        $region16: #{sgconv3_forward.5} parent=11 // pred_fallthru
          _
        // Predicated region
        $region17: #{sgconv3_forward.5} parent=11 // pred_check
          %p257 = pneg %p179
        $region18: #{sgconv3_forward.5} parent=11 // pred_check_branch
          %259 = sbr.rel (%p257) target = $region20
        $region19: #{sgconv3_forward.5} parent=11 // pred_region
          _
        $region20: #{sgconv3_forward.5} parent=11 // pred_fallthru
          _
        // Predicated region
        $region21: #{sgconv3_forward.5} parent=11 // pred_check
          %p260 = pneg %p200
        $region22: #{sgconv3_forward.5} parent=11 // pred_check_branch
          %262 = sbr.rel (%p260) target = $region24
        $region23: #{sgconv3_forward.5} parent=11 // pred_region
          _
        $region24: #{sgconv3_forward.5} parent=11 // pred_fallthru
          _
      $region12: #{sgconv3_forward.5} parent=5 // pred_fallthru
        _
      %p263 = scmp.lt.s32.totalorder %s15, 2
      // Predicated region
      $region25: #{sgconv3_forward.5} parent=5 // pred_check
        %p264 = pneg %p263
      $region26: #{sgconv3_forward.5} parent=5 // pred_check_branch
        %266 = sbr.rel (%p264) target = $region28
      $region27: #{sgconv3_forward.5} parent=5 // pred_region
        // Predicated region
        $region29: #{sgconv3_forward.5} parent=27 // pred_check
          %p267 = pneg %p60
        $region30: #{sgconv3_forward.5} parent=27 // pred_check_branch
          %269 = sbr.rel (%p267) target = $region32
        $region31: #{sgconv3_forward.5} parent=27 // pred_region
          %p270 = scmp.lt.s32.totalorder %s24, %s23
          %s271 = scalar_select %p270, %s24, %s23
          %p272 = scmp.lt.s32.totalorder %s22, 1
          %s273 = scalar_select %p272, %s22, 1
          %p274 = scmp.lt.s32.totalorder %s271, 0
          %s275 = scalar_select %p274, %s271, 0
          %s276 = smul.addr %s273, 2
          %s277 = sadd.s32 %s275, %s276
          %s278 = smul.addr %s277, 4
          %s279 = scalar_lea.vmem %s0, %s278
          %p280 = scmp.lt.s32.totalorder %s24, %s23
          %s281 = scalar_select %p280, %s24, %s23
        $region32: #{sgconv3_forward.5} parent=27 // pred_fallthru
          _
        // Predicated region
        $region33: #{sgconv3_forward.5} parent=27 // pred_check
          %p282 = pneg %p92
        $region34: #{sgconv3_forward.5} parent=27 // pred_check_branch
          %284 = sbr.rel (%p282) target = $region36
        $region35: #{sgconv3_forward.5} parent=27 // pred_region
          %p285 = scmp.lt.s32.totalorder %s24, %s23
          %s286 = scalar_select %p285, %s24, %s23
          %p287 = scmp.lt.s32.totalorder %s22, 1
          %s288 = scalar_select %p287, %s22, 1
          %p289 = scmp.lt.s32.totalorder %s286, 0
          %s290 = scalar_select %p289, %s286, 0
          %s291 = sadd.s32 %s290, 4
          %s292 = smul.addr %s288, 6
          %s293 = sadd.s32 %s291, %s292
          %s294 = smul.addr %s293, 4
          %s295 = scalar_lea.vmem %s1, %s294
          %p296 = scmp.lt.s32.totalorder %s24, %s23
          %s297 = scalar_select %p296, %s24, %s23
        $region36: #{sgconv3_forward.5} parent=27 // pred_fallthru
          _
        // Predicated region
        $region37: #{sgconv3_forward.5} parent=27 // pred_check
          %p298 = pneg %p120
        $region38: #{sgconv3_forward.5} parent=27 // pred_check_branch
          %300 = sbr.rel (%p298) target = $region40
        $region39: #{sgconv3_forward.5} parent=27 // pred_region
          %p301 = scmp.lt.s32.totalorder %s22, 1
          %s302 = scalar_select %p301, %s22, 1
          %p303 = scmp.lt.s32.totalorder %s23, 0
          %s304 = scalar_select %p303, %s23, 0
          %s305 = smul.addr %s302, 6
          %s306 = sadd.s32 %s304, %s305
          %s307 = smul.addr %s306, 4
          %s308 = scalar_lea.vmem %s2, %s307
        $region40: #{sgconv3_forward.5} parent=27 // pred_fallthru
          _
      $region28: #{sgconv3_forward.5} parent=5 // pred_fallthru
        _
      %p309 = scmp.le.s32.totalorder 1, %s15
      %p310 = scmp.lt.s32.totalorder %s15, 3
      %p311 = pnand %p309, %p310
      %p312 = pneg %p311
      // Predicated region
      $region41: #{sgconv3_forward.5} parent=5 // pred_check
        _
      $region42: #{sgconv3_forward.5} parent=5 // pred_check_branch
        %314 = sbr.rel (%p311) target = $region44
      $region43: #{sgconv3_forward.5} parent=5 // pred_region
        %s315 = ssub.s32 %s15, 1
        %p316 = scmp.lt.s32.totalorder %s27, %s26
        %s317 = scalar_select %p316, %s27, %s26
        %p318 = scmp.lt.s32.totalorder %s25, 1
        %s319 = scalar_select %p318, %s25, 1
        %p320 = scmp.lt.s32.totalorder %s317, 0
        %s321 = scalar_select %p320, %s317, 0
        %s322 = smul.addr %s319, 2
        %s323 = sadd.s32 %s321, %s322
        %s324 = smul.addr %s323, 4
        %s325 = scalar_lea.vmem %s0, %s324
        %p326 = pneg %p66
        %p327 = pneg %p63
        %p328 = scmp.lt.s32.totalorder %s27, %s26
        %s329 = scalar_select %p328, %s27, %s26
        %p330 = scmp.lt.s32.totalorder %s25, 1
        %s331 = scalar_select %p330, %s25, 1
        %p332 = scmp.lt.s32.totalorder %s329, 0
        %s333 = scalar_select %p332, %s329, 0
        %s334 = sadd.s32 %s333, 4
        %s335 = smul.addr %s331, 6
        %s336 = sadd.s32 %s334, %s335
        %s337 = smul.addr %s336, 4
        %s338 = scalar_lea.vmem %s1, %s337
        %p339 = pneg %p98
        %p340 = pneg %p95
        %p341 = scmp.lt.s32.totalorder %s25, 1
        %s342 = scalar_select %p341, %s25, 1
        %p343 = scmp.lt.s32.totalorder %s26, 0
        %s344 = scalar_select %p343, %s26, 0
        %s345 = smul.addr %s342, 6
        %s346 = sadd.s32 %s344, %s345
        %s347 = smul.addr %s346, 4
        %s348 = scalar_lea.vmem %s2, %s347
        %p349 = pneg %p126
        %p350 = pneg %p123
        %s351 = ssub.s32 %s26, %s27
        %p352 = scmp.gt.s32.totalorder %s351, 0
        %s353 = scalar_select %p352, %s351, 0
        %p354 = scmp.lt.s32.totalorder %s353, 0
        %s355 = scalar_select %p354, %s353, 0
        %s356 = smul.addr %s355, 16
        %s357 = smul.addr %s356, 4
        %s358 = scalar_lea.vmem %s3, %s357
        %p359 = pneg %p158
        %p360 = pneg %p155
        %p361 = pneg %p179
        %p362 = pneg %p176
        %p363 = pneg %p200
        %p364 = pneg %p197
        %p365 = pneg %p228
        %p366 = pneg %p225
        %s367 = sand.u32 %s215, 1
        %s368 = scalar_lea.sflag [#allocation4], %s367
        %s369 = sand.u32 %s215, 1
        %s370 = smul.addr %s369, 16
        %s371 = scalar_lea.vmem [#allocation3], %s370
        %p372 = scmp.lt.s32.totalorder %s27, %s26
        %s373 = scalar_select %p372, %s27, %s26
        %p374 = scmp.lt.s32.totalorder %s25, 1
        %s375 = scalar_select %p374, %s25, 1
        %p376 = scmp.lt.s32.totalorder %s373, 0
        %s377 = scalar_select %p376, %s373, 0
        %s378 = smul.addr %s375, 2
        %s379 = sadd.s32 %s377, %s378
        %s380 = smul.addr %s379, 4
        %s381 = scalar_lea.vmem %s0, %s380
        %p382 = scmp.lt.s32.totalorder %s27, %s26
        %s383 = scalar_select %p382, %s27, %s26
        %p384 = scmp.lt.s32.totalorder %s27, %s26
        %s385 = scalar_select %p384, %s27, %s26
        %p386 = scmp.lt.s32.totalorder %s25, 1
        %s387 = scalar_select %p386, %s25, 1
        %p388 = scmp.lt.s32.totalorder %s385, 0
        %s389 = scalar_select %p388, %s385, 0
        %s390 = sadd.s32 %s389, 4
        %s391 = smul.addr %s387, 6
        %s392 = sadd.s32 %s390, %s391
        %s393 = smul.addr %s392, 4
        %s394 = scalar_lea.vmem %s1, %s393
        %p395 = scmp.lt.s32.totalorder %s27, %s26
        %s396 = scalar_select %p395, %s27, %s26
        %p397 = scmp.lt.s32.totalorder %s25, 1
        %s398 = scalar_select %p397, %s25, 1
        %p399 = scmp.lt.s32.totalorder %s26, 0
        %s400 = scalar_select %p399, %s26, 0
        %s401 = smul.addr %s398, 6
        %s402 = sadd.s32 %s400, %s401
        %s403 = smul.addr %s402, 4
        %s404 = scalar_lea.vmem %s2, %s403
        %s405 = ssub.s32 %s26, %s27
        %p406 = scmp.gt.s32.totalorder %s405, 0
        %s407 = scalar_select %p406, %s405, 0
        %p408 = scmp.lt.s32.totalorder %s407, 0
        %s409 = scalar_select %p408, %s407, 0
        %s410 = smul.addr %s409, 16
        %s411 = smul.addr %s410, 4
        %s412 = scalar_lea.vmem %s3, %s411
        %s413 = ssub.s32 %s26, %s27
        %p414 = scmp.gt.s32.totalorder %s413, 0
        %s415 = scalar_select %p414, %s413, 0
        %s416 = smul.u32 2, %s26
        %p418 = scmp.eq.s32.totalorder %s27, 0
        // Predicated region
        $region45: #{sgconv3_forward.5} parent=43 // pred_check
          %p419 = pneg %p418
        $region46: #{sgconv3_forward.5} parent=43 // pred_check_branch
          %421 = sbr.rel (%p419) target = $region48
        $region47: #{sgconv3_forward.5} parent=43 // pred_region
          %vm422 = vcmask 125952
          %423 = vst.msk [vmem:[#allocation2] sm:$0xf] %vm422, 0.0
          %424 = vst.msk [vmem:[#allocation2 + $0x4] sm:$0xf] %vm422, 0.0
          %425 = vst.msk [vmem:[#allocation2 + $0x8] sm:$0xf] %vm422, 0.0
          %426 = vst.msk [vmem:[#allocation2 + $0xc] sm:$0xf] %vm422, 0.0
          %427 = vst.msk [vmem:[#allocation2 + $0x10] sm:$0xf] %vm422, 0.0
          %428 = vst.msk [vmem:[#allocation2 + $0x14] sm:$0xf] %vm422, 0.0
          %429 = vst.msk [vmem:[#allocation2 + $0x18] sm:$0xf] %vm422, 0.0
          %430 = vst.msk [vmem:[#allocation2 + $0x1c] sm:$0xf] %vm422, 0.0
        $region48: #{sgconv3_forward.5} parent=43 // pred_fallthru
          _
        %p431 = scmp.le.s32.totalorder %s27, %s26
        // Predicated region
        $region49: #{sgconv3_forward.5} parent=43 // pred_check
          %p432 = pneg %p431
        $region50: #{sgconv3_forward.5} parent=43 // pred_check_branch
          %434 = sbr.rel (%p432) target = $region52
        $region51: #{sgconv3_forward.5} parent=43 // pred_region
          %v435 = vld [vmem:[%s381] sm:$0xf]
          %v436 = vld [vmem:[%s381 + $0x4] sm:$0xf]
          %v437 = vld [vmem:[%s394] sm:$0xf]
          %v438 = vld [vmem:[%s394 + $0x4] sm:$0xf]
          %v441 = vrot.slane %v435, 3
          %v442 = vrot.slane %v436, 3
          %vm443 = vcmask 1040384
          %v446 = vsel %vm443, %v435, %v441
          %vm448 = vcmask 1041409
          %v449 = vsel %vm448, %v435, %v441
          %v451 = vrot.slane %v449, 1
          %vm452 = vcmask 1042434
          %v453 = vsel %vm452, %v435, %v441
          %v455 = vrot.slane %v453, 2
          %vm456 = vcmask 1043459
          %v457 = vsel %vm456, %v435, %v441
          %v459 = vrot.slane %v457, 3
          %v462 = vsel %vm443, %v436, %v442
          %v464 = vsel %vm448, %v436, %v442
          %v466 = vrot.slane %v464, 1
          %v467 = vsel %vm452, %v436, %v442
          %v469 = vrot.slane %v467, 2
          %v470 = vsel %vm456, %v436, %v442
          %v472 = vrot.slane %v470, 3
          %v473 = vunpack.i.l.s16 %v446
          %v474 = vunpack.i.h.s16 %v446
          %v475 = vunpack.i.l.s16 %v451
          %v476 = vunpack.i.h.s16 %v451
          %v477 = vunpack.i.l.s16 %v455
          %v478 = vunpack.i.h.s16 %v455
          %v479 = vunpack.i.l.s16 %v459
          %v480 = vunpack.i.h.s16 %v459
          %v481 = vunpack.i.l.s16 %v462
          %v482 = vunpack.i.h.s16 %v462
          %v483 = vunpack.i.l.s16 %v466
          %v484 = vunpack.i.h.s16 %v466
          %v485 = vunpack.i.l.s16 %v469
          %v486 = vunpack.i.h.s16 %v469
          %v487 = vunpack.i.l.s16 %v472
          %v488 = vunpack.i.h.s16 %v472
          %v491 = vrot.slane %v437, 3
          %v492 = vrot.slane %v438, 3
          %v495 = vsel %vm443, %v437, %v491
          %v496 = vsel %vm448, %v437, %v491
          %v498 = vrot.slane %v496, 1
          %v499 = vsel %vm452, %v437, %v491
          %v501 = vrot.slane %v499, 2
          %v502 = vsel %vm456, %v437, %v491
          %v504 = vrot.slane %v502, 3
          %v507 = vsel %vm443, %v438, %v492
          %v508 = vsel %vm448, %v438, %v492
          %v510 = vrot.slane %v508, 1
          %v511 = vsel %vm452, %v438, %v492
          %v513 = vrot.slane %v511, 2
          %v514 = vsel %vm456, %v438, %v492
          %v516 = vrot.slane %v514, 3
          %v525 = vpack.i.b16 %v473, %v473
          %v526 = vpack.i.b16 %v474, %v474
          %v527 = vpack.i.b16 %v475, %v475
          %v528 = vpack.i.b16 %v476, %v476
          %v529 = vpack.i.b16 %v477, %v477
          %v530 = vpack.i.b16 %v478, %v478
          %v531 = vpack.i.b16 %v479, %v479
          %v532 = vpack.i.b16 %v480, %v480
          %v533 = vpack.i.b16 %v481, %v481
          %v534 = vpack.i.b16 %v482, %v482
          %v535 = vpack.i.b16 %v483, %v483
          %v536 = vpack.i.b16 %v484, %v484
          %v537 = vpack.i.b16 %v485, %v485
          %v538 = vpack.i.b16 %v486, %v486
          %v539 = vpack.i.b16 %v487, %v487
          %v540 = vpack.i.b16 %v488, %v488
          %v541 = vperm.slane %v525, 0
          %v542 = vperm.slane %v526, 0
          %v543 = vperm.slane %v527, 0
          %v544 = vperm.slane %v528, 0
          %v545 = vperm.slane %v529, 0
          %v546 = vperm.slane %v530, 0
          %v547 = vperm.slane %v531, 0
          %v548 = vperm.slane %v532, 0
          %v549 = vperm.slane %v533, 0
          %v550 = vperm.slane %v534, 0
          %v551 = vperm.slane %v535, 0
          %v552 = vperm.slane %v536, 0
          %v553 = vperm.slane %v537, 0
          %v554 = vperm.slane %v538, 0
          %v555 = vperm.slane %v539, 0
          %v556 = vperm.slane %v540, 0
          %v558 = vpack.i.b16 %v541, %v541
          %v560 = vperm.slane %v558, 0
          %v562 = vpack.i.b16 %v542, %v542
          %v564 = vperm.slane %v562, 0
          %v566 = vpack.i.b16 %v543, %v543
          %v568 = vperm.slane %v566, 0
          %v570 = vpack.i.b16 %v544, %v544
          %v572 = vperm.slane %v570, 0
          %v574 = vpack.i.b16 %v545, %v545
          %v576 = vperm.slane %v574, 0
          %v578 = vpack.i.b16 %v546, %v546
          %v580 = vperm.slane %v578, 0
          %v582 = vpack.i.b16 %v547, %v547
          %v584 = vperm.slane %v582, 0
          %v586 = vpack.i.b16 %v548, %v548
          %v588 = vperm.slane %v586, 0
          %v590 = vpack.i.b16 %v549, %v549
          %v592 = vperm.slane %v590, 0
          %v594 = vpack.i.b16 %v550, %v550
          %v596 = vperm.slane %v594, 0
          %v598 = vpack.i.b16 %v551, %v551
          %v600 = vperm.slane %v598, 0
          %v602 = vpack.i.b16 %v552, %v552
          %v604 = vperm.slane %v602, 0
          %v606 = vpack.i.b16 %v553, %v553
          %v608 = vperm.slane %v606, 0
          %v610 = vpack.i.b16 %v554, %v554
          %v612 = vperm.slane %v610, 0
          %v614 = vpack.i.b16 %v555, %v555
          %v616 = vperm.slane %v614, 0
          %v618 = vpack.i.b16 %v556, %v556
          %v620 = vperm.slane %v618, 0
          %v621 = vunpack.c.l.bf16 %v560
          %v622 = vunpack.c.l.bf16 %v564
          %v623 = vunpack.c.l.bf16 %v568
          %v624 = vunpack.c.l.bf16 %v572
          %v625 = vunpack.c.l.bf16 %v576
          %v626 = vunpack.c.l.bf16 %v580
          %v627 = vunpack.c.l.bf16 %v584
          %v628 = vunpack.c.l.bf16 %v588
          %v629 = vunpack.c.l.bf16 %v592
          %v630 = vunpack.c.l.bf16 %v596
          %v631 = vunpack.c.l.bf16 %v600
          %v632 = vunpack.c.l.bf16 %v604
          %v633 = vunpack.c.l.bf16 %v608
          %v634 = vunpack.c.l.bf16 %v612
          %v635 = vunpack.c.l.bf16 %v616
          %v636 = vunpack.c.l.bf16 %v620
          %v637 = vunpack.c.l.bf16 %v495
          %v638 = vunpack.c.l.bf16 %v498
          %v639 = vunpack.c.l.bf16 %v501
          %v640 = vunpack.c.l.bf16 %v504
          %v641 = vunpack.c.l.bf16 %v507
          %v642 = vunpack.c.l.bf16 %v510
          %v643 = vunpack.c.l.bf16 %v513
          %v644 = vunpack.c.l.bf16 %v516
          %v645 = vmul.f32 %v621, %v637
          %v646 = vmul.f32 %v622, %v637
          %v647 = vmul.f32 %v623, %v638
          %v648 = vmul.f32 %v624, %v638
          %v649 = vmul.f32 %v625, %v639
          %v650 = vmul.f32 %v626, %v639
          %v651 = vmul.f32 %v627, %v640
          %v652 = vmul.f32 %v628, %v640
          %v653 = vmul.f32 %v629, %v641
          %v654 = vmul.f32 %v630, %v641
          %v655 = vmul.f32 %v631, %v642
          %v656 = vmul.f32 %v632, %v642
          %v657 = vmul.f32 %v633, %v643
          %v658 = vmul.f32 %v634, %v643
          %v659 = vmul.f32 %v635, %v644
          %v660 = vmul.f32 %v636, %v644
          %v661 = vpack.c.bf16 %v645, %v645
          %v662 = vpack.c.bf16 %v646, %v646
          %v663 = vpack.c.bf16 %v647, %v647
          %v664 = vpack.c.bf16 %v648, %v648
          %v665 = vpack.c.bf16 %v649, %v649
          %v666 = vpack.c.bf16 %v650, %v650
          %v667 = vpack.c.bf16 %v651, %v651
          %v668 = vpack.c.bf16 %v652, %v652
          %v669 = vpack.c.bf16 %v653, %v653
          %v670 = vpack.c.bf16 %v654, %v654
          %v671 = vpack.c.bf16 %v655, %v655
          %v672 = vpack.c.bf16 %v656, %v656
          %v673 = vpack.c.bf16 %v657, %v657
          %v674 = vpack.c.bf16 %v658, %v658
          %v675 = vpack.c.bf16 %v659, %v659
          %v676 = vpack.c.bf16 %v660, %v660
          %v677 = vld [vmem:[#allocation2] sm:$0xf]
          %v678 = vld [vmem:[#allocation2 + $0x4] sm:$0xf]
          %v679 = vld [vmem:[#allocation2 + $0x8] sm:$0xf]
          %v680 = vld [vmem:[#allocation2 + $0xc] sm:$0xf]
          %v681 = vld [vmem:[#allocation2 + $0x10] sm:$0xf]
          %v682 = vld [vmem:[#allocation2 + $0x14] sm:$0xf]
          %v683 = vld [vmem:[#allocation2 + $0x18] sm:$0xf]
          %v684 = vld [vmem:[#allocation2 + $0x1c] sm:$0xf]
          %v685 = vld [vmem:[%s412] sm:$0xf]
          %v686 = vld [vmem:[%s412 + $0x4] sm:$0xf]
          %v687 = vld [vmem:[%s412 + $0x8] sm:$0xf]
          %v688 = vld [vmem:[%s412 + $0xc] sm:$0xf]
          %v689 = vld [vmem:[%s412 + $0x10] sm:$0xf]
          %v690 = vld [vmem:[%s412 + $0x14] sm:$0xf]
          %v691 = vld [vmem:[%s412 + $0x18] sm:$0xf]
          %v692 = vld [vmem:[%s412 + $0x1c] sm:$0xf]
          %v693 = vld [vmem:[%s412 + $0x20] sm:$0xf]
          %v694 = vld [vmem:[%s412 + $0x24] sm:$0xf]
          %v695 = vld [vmem:[%s412 + $0x28] sm:$0xf]
          %v696 = vld [vmem:[%s412 + $0x2c] sm:$0xf]
          %v697 = vld [vmem:[%s412 + $0x30] sm:$0xf]
          %v698 = vld [vmem:[%s412 + $0x34] sm:$0xf]
          %v699 = vld [vmem:[%s412 + $0x38] sm:$0xf]
          %v700 = vld [vmem:[%s412 + $0x3c] sm:$0xf]
          %702 = vst [vmem:[#allocation1] ss:$9 sm:$0xff] %v661
          %s704 = scalar_lea.vmem [#allocation1], 1
          %705 = vst [vmem:[%s704] ss:$9 sm:$0xff] %v662
          %v706 = vld [vmem:[#allocation1] sm:$0xff]
          %v709 = vunpack.c.l.b16 %v685
          %v710 = vunpack.c.l.b16 %v686
          %v711 = vpack.c.b16 %v710, %v709
          %vm712 = vcmask 130048
          %v713 = vsel %vm712, %v706, 0
          %v716 = vsel %vm712, %v711, 0
          %718 = vmatpush.bf16.xpose.msra.mxu0 0
          %719 = vmatpush.bf16.xpose.msra.mxu0 0
          %720 = vmatpush.bf16.xpose.msra.mxu0 0
          %721 = vmatpush.bf16.xpose.msra.mxu0 0
          %722 = vmatpush.bf16.xpose.msra.mxu0 0
          %723 = vmatpush.bf16.xpose.msra.mxu0 0
          %724 = vmatpush.bf16.xpose.msra.mxu0 0
          %725 = vmatpush.bf16.xpose.msra.mxu0 %v716
          %726 = vmatmul.bf16.gmra.mxu0 %v713
          %v727 = vpop.f32.mrf.mxu0
          %v728 = vadd.f32 0.0, %v727
          %v729 = vpop.f32.mrf.mxu0
          %730 = vdwg.mxu0
          %732 = vst [vmem:[#allocation1] ss:$9 sm:$0xff] %v663
          %s734 = scalar_lea.vmem [#allocation1], 1
          %735 = vst [vmem:[%s734] ss:$9 sm:$0xff] %v664
          %v736 = vld [vmem:[#allocation1] sm:$0xff]
          %v739 = vunpack.c.l.b16 %v687
          %v740 = vunpack.c.l.b16 %v688
          %v741 = vpack.c.b16 %v740, %v739
          %v742 = vsel %vm712, %v736, 0
          %v745 = vsel %vm712, %v741, 0
          %747 = vmatpush.bf16.xpose.msra.mxu0 0
          %748 = vmatpush.bf16.xpose.msra.mxu0 0
          %749 = vmatpush.bf16.xpose.msra.mxu0 0
          %750 = vmatpush.bf16.xpose.msra.mxu0 0
          %751 = vmatpush.bf16.xpose.msra.mxu0 0
          %752 = vmatpush.bf16.xpose.msra.mxu0 0
          %753 = vmatpush.bf16.xpose.msra.mxu0 0
          %754 = vmatpush.bf16.xpose.msra.mxu0 %v745
          %755 = vmatmul.bf16.gmra.mxu0 %v742
          %v756 = vpop.f32.mrf.mxu0
          %v757 = vadd.f32 0.0, %v756
          %v758 = vpop.f32.mrf.mxu0
          %759 = vdwg.mxu0
          %761 = vst [vmem:[#allocation1] ss:$9 sm:$0xff] %v665
          %s763 = scalar_lea.vmem [#allocation1], 1
          %764 = vst [vmem:[%s763] ss:$9 sm:$0xff] %v666
          %v765 = vld [vmem:[#allocation1] sm:$0xff]
          %v768 = vunpack.c.l.b16 %v689
          %v769 = vunpack.c.l.b16 %v690
          %v770 = vpack.c.b16 %v769, %v768
          %v771 = vsel %vm712, %v765, 0
          %v774 = vsel %vm712, %v770, 0
          %776 = vmatpush.bf16.xpose.msra.mxu0 0
          %777 = vmatpush.bf16.xpose.msra.mxu0 0
          %778 = vmatpush.bf16.xpose.msra.mxu0 0
          %779 = vmatpush.bf16.xpose.msra.mxu0 0
          %780 = vmatpush.bf16.xpose.msra.mxu0 0
          %781 = vmatpush.bf16.xpose.msra.mxu0 0
          %782 = vmatpush.bf16.xpose.msra.mxu0 0
          %783 = vmatpush.bf16.xpose.msra.mxu0 %v774
          %784 = vmatmul.bf16.gmra.mxu0 %v771
          %v785 = vpop.f32.mrf.mxu0
          %v786 = vadd.f32 0.0, %v785
          %v787 = vpop.f32.mrf.mxu0
          %788 = vdwg.mxu0
          %790 = vst [vmem:[#allocation1] ss:$9 sm:$0xff] %v667
          %s792 = scalar_lea.vmem [#allocation1], 1
          %793 = vst [vmem:[%s792] ss:$9 sm:$0xff] %v668
          %v794 = vld [vmem:[#allocation1] sm:$0xff]
          %v797 = vunpack.c.l.b16 %v691
          %v798 = vunpack.c.l.b16 %v692
          %v799 = vpack.c.b16 %v798, %v797
          %v800 = vsel %vm712, %v794, 0
          %v803 = vsel %vm712, %v799, 0
          %805 = vmatpush.bf16.xpose.msra.mxu0 0
          %806 = vmatpush.bf16.xpose.msra.mxu0 0
          %807 = vmatpush.bf16.xpose.msra.mxu0 0
          %808 = vmatpush.bf16.xpose.msra.mxu0 0
          %809 = vmatpush.bf16.xpose.msra.mxu0 0
          %810 = vmatpush.bf16.xpose.msra.mxu0 0
          %811 = vmatpush.bf16.xpose.msra.mxu0 0
          %812 = vmatpush.bf16.xpose.msra.mxu0 %v803
          %813 = vmatmul.bf16.gmra.mxu0 %v800
          %v814 = vpop.f32.mrf.mxu0
          %v815 = vadd.f32 0.0, %v814
          %v816 = vpop.f32.mrf.mxu0
          %817 = vdwg.mxu0
          %819 = vst [vmem:[#allocation1] ss:$9 sm:$0xff] %v669
          %s821 = scalar_lea.vmem [#allocation1], 1
          %822 = vst [vmem:[%s821] ss:$9 sm:$0xff] %v670
          %v823 = vld [vmem:[#allocation1] sm:$0xff]
          %v826 = vunpack.c.l.b16 %v693
          %v827 = vunpack.c.l.b16 %v694
          %v828 = vpack.c.b16 %v827, %v826
          %v829 = vsel %vm712, %v823, 0
          %v832 = vsel %vm712, %v828, 0
          %834 = vmatpush.bf16.xpose.msra.mxu0 0
          %835 = vmatpush.bf16.xpose.msra.mxu0 0
          %836 = vmatpush.bf16.xpose.msra.mxu0 0
          %837 = vmatpush.bf16.xpose.msra.mxu0 0
          %838 = vmatpush.bf16.xpose.msra.mxu0 0
          %839 = vmatpush.bf16.xpose.msra.mxu0 0
          %840 = vmatpush.bf16.xpose.msra.mxu0 0
          %841 = vmatpush.bf16.xpose.msra.mxu0 %v832
          %842 = vmatmul.bf16.gmra.mxu0 %v829
          %v843 = vpop.f32.mrf.mxu0
          %v844 = vadd.f32 0.0, %v843
          %v845 = vpop.f32.mrf.mxu0
          %846 = vdwg.mxu0
          %848 = vst [vmem:[#allocation1] ss:$9 sm:$0xff] %v671
          %s850 = scalar_lea.vmem [#allocation1], 1
          %851 = vst [vmem:[%s850] ss:$9 sm:$0xff] %v672
          %v852 = vld [vmem:[#allocation1] sm:$0xff]
          %v855 = vunpack.c.l.b16 %v695
          %v856 = vunpack.c.l.b16 %v696
          %v857 = vpack.c.b16 %v856, %v855
          %v858 = vsel %vm712, %v852, 0
          %v861 = vsel %vm712, %v857, 0
          %863 = vmatpush.bf16.xpose.msra.mxu0 0
          %864 = vmatpush.bf16.xpose.msra.mxu0 0
          %865 = vmatpush.bf16.xpose.msra.mxu0 0
          %866 = vmatpush.bf16.xpose.msra.mxu0 0
          %867 = vmatpush.bf16.xpose.msra.mxu0 0
          %868 = vmatpush.bf16.xpose.msra.mxu0 0
          %869 = vmatpush.bf16.xpose.msra.mxu0 0
          %870 = vmatpush.bf16.xpose.msra.mxu0 %v861
          %871 = vmatmul.bf16.gmra.mxu0 %v858
          %v872 = vpop.f32.mrf.mxu0
          %v873 = vadd.f32 0.0, %v872
          %v874 = vpop.f32.mrf.mxu0
          %875 = vdwg.mxu0
          %877 = vst [vmem:[#allocation1] ss:$9 sm:$0xff] %v673
          %s879 = scalar_lea.vmem [#allocation1], 1
          %880 = vst [vmem:[%s879] ss:$9 sm:$0xff] %v674
          %v881 = vld [vmem:[#allocation1] sm:$0xff]
          %v884 = vunpack.c.l.b16 %v697
          %v885 = vunpack.c.l.b16 %v698
          %v886 = vpack.c.b16 %v885, %v884
          %v887 = vsel %vm712, %v881, 0
          %v890 = vsel %vm712, %v886, 0
          %892 = vmatpush.bf16.xpose.msra.mxu0 0
          %893 = vmatpush.bf16.xpose.msra.mxu0 0
          %894 = vmatpush.bf16.xpose.msra.mxu0 0
          %895 = vmatpush.bf16.xpose.msra.mxu0 0
          %896 = vmatpush.bf16.xpose.msra.mxu0 0
          %897 = vmatpush.bf16.xpose.msra.mxu0 0
          %898 = vmatpush.bf16.xpose.msra.mxu0 0
          %899 = vmatpush.bf16.xpose.msra.mxu0 %v890
          %900 = vmatmul.bf16.gmra.mxu0 %v887
          %v901 = vpop.f32.mrf.mxu0
          %v902 = vadd.f32 0.0, %v901
          %v903 = vpop.f32.mrf.mxu0
          %904 = vdwg.mxu0
          %906 = vst [vmem:[#allocation1] ss:$9 sm:$0xff] %v675
          %s908 = scalar_lea.vmem [#allocation1], 1
          %909 = vst [vmem:[%s908] ss:$9 sm:$0xff] %v676
          %v910 = vld [vmem:[#allocation1] sm:$0xff]
          %v913 = vunpack.c.l.b16 %v699
          %v914 = vunpack.c.l.b16 %v700
          %v915 = vpack.c.b16 %v914, %v913
          %v916 = vsel %vm712, %v910, 0
          %v919 = vsel %vm712, %v915, 0
          %921 = vmatpush.bf16.xpose.msra.mxu0 0
          %922 = vmatpush.bf16.xpose.msra.mxu0 0
          %923 = vmatpush.bf16.xpose.msra.mxu0 0
          %924 = vmatpush.bf16.xpose.msra.mxu0 0
          %925 = vmatpush.bf16.xpose.msra.mxu0 0
          %926 = vmatpush.bf16.xpose.msra.mxu0 0
          %927 = vmatpush.bf16.xpose.msra.mxu0 0
          %928 = vmatpush.bf16.xpose.msra.mxu0 %v919
          %929 = vmatmul.bf16.gmra.mxu0 %v916
          %v930 = vpop.f32.mrf.mxu0
          %v931 = vadd.f32 0.0, %v930
          %v932 = vpop.f32.mrf.mxu0
          %933 = vdwg.mxu0
          %v934 = vadd.f32 %v677, %v728
          %v935 = vadd.f32 %v678, %v757
          %v936 = vadd.f32 %v679, %v786
          %v937 = vadd.f32 %v680, %v815
          %v938 = vadd.f32 %v681, %v844
          %v939 = vadd.f32 %v682, %v873
          %v940 = vadd.f32 %v683, %v902
          %v941 = vadd.f32 %v684, %v931
          %vm942 = vcmask 125952
          %943 = vst.msk [vmem:[#allocation2] sm:$0xf] %vm942, %v934
          %944 = vst.msk [vmem:[#allocation2 + $0x4] sm:$0xf] %vm942, %v935
          %945 = vst.msk [vmem:[#allocation2 + $0x8] sm:$0xf] %vm942, %v936
          %946 = vst.msk [vmem:[#allocation2 + $0xc] sm:$0xf] %vm942, %v937
          %947 = vst.msk [vmem:[#allocation2 + $0x10] sm:$0xf] %vm942, %v938
          %948 = vst.msk [vmem:[#allocation2 + $0x14] sm:$0xf] %vm942, %v939
          %949 = vst.msk [vmem:[#allocation2 + $0x18] sm:$0xf] %vm942, %v940
          %950 = vst.msk [vmem:[#allocation2 + $0x1c] sm:$0xf] %vm942, %v941
        $region52: #{sgconv3_forward.5} parent=43 // pred_fallthru
          _
        // Predicated region
        $region53: #{sgconv3_forward.5} parent=43 // pred_check
          %p951 = pneg %p418
        $region54: #{sgconv3_forward.5} parent=43 // pred_check_branch
          %953 = sbr.rel (%p951) target = $region56
        $region55: #{sgconv3_forward.5} parent=43 // pred_region
          %v954 = vld [vmem:[#allocation2] sm:$0xf]
          %v955 = vld [vmem:[#allocation2 + $0x4] sm:$0xf]
          %v956 = vld [vmem:[#allocation2 + $0x8] sm:$0xf]
          %v957 = vld [vmem:[#allocation2 + $0xc] sm:$0xf]
          %v958 = vld [vmem:[#allocation2 + $0x10] sm:$0xf]
          %v959 = vld [vmem:[#allocation2 + $0x14] sm:$0xf]
          %v960 = vld [vmem:[#allocation2 + $0x18] sm:$0xf]
          %v961 = vld [vmem:[#allocation2 + $0x1c] sm:$0xf]
          %v970 = vrot.slane %v954, 2
          %v971 = vrot.slane %v955, 2
          %v972 = vrot.slane %v956, 2
          %v973 = vrot.slane %v957, 2
          %v974 = vrot.slane %v958, 2
          %v975 = vrot.slane %v959, 2
          %v976 = vrot.slane %v960, 2
          %v977 = vrot.slane %v961, 2
          %v986 = vld [vmem:[%s404] sm:$0xf]
          %v987 = vld [vmem:[%s404 + $0x4] sm:$0xf]
          %v988 = vunpack.c.l.bf16 %v986
          %v989 = vunpack.c.l.bf16 %v987
          %v992 = vrot.slane %v988, 1
          %v993 = vrot.slane %v988, 2
          %v994 = vrot.slane %v988, 3
          %v995 = vrot.slane %v988, 4
          %v996 = vrot.slane %v988, 5
          %v997 = vrot.slane %v988, 6
          %v998 = vrot.slane %v988, 7
          %v999 = vrot.slane %v989, 1
          %v1000 = vrot.slane %v989, 2
          %v1001 = vrot.slane %v989, 3
          %v1002 = vrot.slane %v989, 4
          %v1003 = vrot.slane %v989, 5
          %v1004 = vrot.slane %v989, 6
          %v1005 = vrot.slane %v989, 7
          %v1006 = vperm.slane %v988, 0
          %v1007 = vperm.slane %v992, 0
          %v1008 = vperm.slane %v993, 0
          %v1009 = vperm.slane %v994, 0
          %v1010 = vperm.slane %v995, 0
          %v1011 = vperm.slane %v996, 0
          %v1012 = vperm.slane %v997, 0
          %v1013 = vperm.slane %v998, 0
          %v1014 = vperm.slane %v989, 0
          %v1015 = vperm.slane %v999, 0
          %v1016 = vperm.slane %v1000, 0
          %v1017 = vperm.slane %v1001, 0
          %v1018 = vperm.slane %v1002, 0
          %v1019 = vperm.slane %v1003, 0
          %v1020 = vperm.slane %v1004, 0
          %v1021 = vperm.slane %v1005, 0
          %v1038 = vmul.f32 %v1006, %v954
          %v1039 = vmul.f32 %v1007, %v970
          %v1040 = vmul.f32 %v1008, %v955
          %v1041 = vmul.f32 %v1009, %v971
          %v1042 = vmul.f32 %v1010, %v956
          %v1043 = vmul.f32 %v1011, %v972
          %v1044 = vmul.f32 %v1012, %v957
          %v1045 = vmul.f32 %v1013, %v973
          %v1046 = vmul.f32 %v1014, %v958
          %v1047 = vmul.f32 %v1015, %v974
          %v1048 = vmul.f32 %v1016, %v959
          %v1049 = vmul.f32 %v1017, %v975
          %v1050 = vmul.f32 %v1018, %v960
          %v1051 = vmul.f32 %v1019, %v976
          %v1052 = vmul.f32 %v1020, %v961
          %v1053 = vmul.f32 %v1021, %v977
          %vm1054 = vcmask 123904
          %v1055 = vsel %vm1054, %v1038, 0.0
          %v1056 = vsel %vm1054, %v1039, 0.0
          %v1057 = vadd.f32 %v1055, %v1056
          %v1058 = vsel %vm1054, %v1040, 0.0
          %v1059 = vsel %vm1054, %v1041, 0.0
          %v1060 = vadd.f32 %v1058, %v1059
          %v1061 = vsel %vm1054, %v1042, 0.0
          %v1062 = vsel %vm1054, %v1043, 0.0
          %v1063 = vadd.f32 %v1061, %v1062
          %v1064 = vsel %vm1054, %v1044, 0.0
          %v1065 = vsel %vm1054, %v1045, 0.0
          %v1066 = vadd.f32 %v1064, %v1065
          %v1067 = vsel %vm1054, %v1046, 0.0
          %v1068 = vsel %vm1054, %v1047, 0.0
          %v1069 = vadd.f32 %v1067, %v1068
          %v1070 = vsel %vm1054, %v1048, 0.0
          %v1071 = vsel %vm1054, %v1049, 0.0
          %v1072 = vadd.f32 %v1070, %v1071
          %v1073 = vsel %vm1054, %v1050, 0.0
          %v1074 = vsel %vm1054, %v1051, 0.0
          %v1075 = vadd.f32 %v1073, %v1074
          %v1076 = vsel %vm1054, %v1052, 0.0
          %v1077 = vsel %vm1054, %v1053, 0.0
          %v1078 = vadd.f32 %v1076, %v1077
          %v1079 = vmul.f32 %v1057, 0.5
          %v1080 = vmul.f32 %v1060, 0.5
          %v1081 = vmul.f32 %v1063, 0.5
          %v1082 = vmul.f32 %v1066, 0.5
          %v1083 = vmul.f32 %v1069, 0.5
          %v1084 = vmul.f32 %v1072, 0.5
          %v1085 = vmul.f32 %v1075, 0.5
          %v1086 = vmul.f32 %v1078, 0.5
          %v1087 = vmul.f32 %v1057, 0.044715
          %v1088 = vmul.f32 %v1060, 0.044715
          %v1089 = vmul.f32 %v1063, 0.044715
          %v1090 = vmul.f32 %v1066, 0.044715
          %v1091 = vmul.f32 %v1069, 0.044715
          %v1092 = vmul.f32 %v1072, 0.044715
          %v1093 = vmul.f32 %v1075, 0.044715
          %v1094 = vmul.f32 %v1078, 0.044715
          %v1095 = vmul.f32 %v1087, %v1057
          %v1096 = vmul.f32 %v1088, %v1060
          %v1097 = vmul.f32 %v1089, %v1063
          %v1098 = vmul.f32 %v1090, %v1066
          %v1099 = vmul.f32 %v1091, %v1069
          %v1100 = vmul.f32 %v1092, %v1072
          %v1101 = vmul.f32 %v1093, %v1075
          %v1102 = vmul.f32 %v1094, %v1078
          %v1103 = vmul.f32 %v1095, %v1057
          %v1104 = vmul.f32 %v1096, %v1060
          %v1105 = vmul.f32 %v1097, %v1063
          %v1106 = vmul.f32 %v1098, %v1066
          %v1107 = vmul.f32 %v1099, %v1069
          %v1108 = vmul.f32 %v1100, %v1072
          %v1109 = vmul.f32 %v1101, %v1075
          %v1110 = vmul.f32 %v1102, %v1078
          %v1111 = vadd.f32 %v1057, %v1103
          %v1112 = vadd.f32 %v1060, %v1104
          %v1113 = vadd.f32 %v1063, %v1105
          %v1114 = vadd.f32 %v1066, %v1106
          %v1115 = vadd.f32 %v1069, %v1107
          %v1116 = vadd.f32 %v1072, %v1108
          %v1117 = vadd.f32 %v1075, %v1109
          %v1118 = vadd.f32 %v1078, %v1110
          %v1119 = vmul.f32 %v1111, 0.7978846
          %v1120 = vmul.f32 %v1112, 0.7978846
          %v1121 = vmul.f32 %v1113, 0.7978846
          %v1122 = vmul.f32 %v1114, 0.7978846
          %v1123 = vmul.f32 %v1115, 0.7978846
          %v1124 = vmul.f32 %v1116, 0.7978846
          %v1125 = vmul.f32 %v1117, 0.7978846
          %v1126 = vmul.f32 %v1118, 0.7978846
          %v1127 = vtanh.pop %v1119
          %v1128 = vtanh.pop %v1120
          %v1129 = vtanh.pop %v1121
          %v1130 = vtanh.pop %v1122
          %v1131 = vtanh.pop %v1123
          %v1132 = vtanh.pop %v1124
          %v1133 = vtanh.pop %v1125
          %v1134 = vtanh.pop %v1126
          %v1135 = vadd.f32 %v1127, 1.0
          %v1136 = vadd.f32 %v1128, 1.0
          %v1137 = vadd.f32 %v1129, 1.0
          %v1138 = vadd.f32 %v1130, 1.0
          %v1139 = vadd.f32 %v1131, 1.0
          %v1140 = vadd.f32 %v1132, 1.0
          %v1141 = vadd.f32 %v1133, 1.0
          %v1142 = vadd.f32 %v1134, 1.0
          %v1143 = vmul.f32 %v1079, %v1135
          %v1144 = vmul.f32 %v1080, %v1136
          %v1145 = vmul.f32 %v1081, %v1137
          %v1146 = vmul.f32 %v1082, %v1138
          %v1147 = vmul.f32 %v1083, %v1139
          %v1148 = vmul.f32 %v1084, %v1140
          %v1149 = vmul.f32 %v1085, %v1141
          %v1150 = vmul.f32 %v1086, %v1142
          %1159 = vst [vmem:[#allocation1] ss:$4 sm:$0xff] %v1143
          %s1160 = scalar_lea.vmem [#allocation1], 1
          %1161 = vst [vmem:[%s1160] ss:$4 sm:$0xff] %v1144
          %s1162 = scalar_lea.vmem [#allocation1], 2
          %1163 = vst [vmem:[%s1162] ss:$4 sm:$0xff] %v1145
          %s1164 = scalar_lea.vmem [#allocation1], 3
          %1165 = vst [vmem:[%s1164] ss:$4 sm:$0xff] %v1146
          %s1166 = scalar_lea.vmem [#allocation1], 32
          %1167 = vst [vmem:[%s1166] ss:$4 sm:$0xff] %v1147
          %s1168 = scalar_lea.vmem [#allocation1], 33
          %1169 = vst [vmem:[%s1168] ss:$4 sm:$0xff] %v1148
          %s1170 = scalar_lea.vmem [#allocation1], 34
          %1171 = vst [vmem:[%s1170] ss:$4 sm:$0xff] %v1149
          %s1172 = scalar_lea.vmem [#allocation1], 35
          %1173 = vst [vmem:[%s1172] ss:$4 sm:$0xff] %v1150
          %v1174 = vld.sshfl [vmem:[#allocation1] sm:$0xff pattern:$0x73625140]
          %v1175 = vld.sshfl [vmem:[#allocation1 + $0x20] sm:$0xff pattern:$0x73625140]
          %1178 = vxpose.xlu0.b32.start [1/16] %v1174, 128
          %1179 = vxpose.xlu0.b32.cont [2/16] %v1175, 128
          %1180 = vxpose.xlu0.b32.cont [3/16] 0.0, 128
          %1181 = vxpose.xlu0.b32.cont [4/16] 0.0, 128
          %1182 = vxpose.xlu0.b32.cont [5/16] 0.0, 128
          %1183 = vxpose.xlu0.b32.cont [6/16] 0.0, 128
          %1184 = vxpose.xlu0.b32.cont [7/16] 0.0, 128
          %1185 = vxpose.xlu0.b32.cont [8/16] 0.0, 128
          %1186 = vxpose.xlu0.b32.cont [9/16] 0.0, 128
          %1187 = vxpose.xlu0.b32.cont [10/16] 0.0, 128
          %1188 = vxpose.xlu0.b32.cont [11/16] 0.0, 128
          %1189 = vxpose.xlu0.b32.cont [12/16] 0.0, 128
          %1190 = vxpose.xlu0.b32.cont [13/16] 0.0, 128
          %1191 = vxpose.xlu0.b32.cont [14/16] 0.0, 128
          %1192 = vxpose.xlu0.b32.cont [15/16] 0.0, 128
          %1193 = vxpose.xlu0.b32.end [16/16] 0.0, 128
          %v1194 = vpop.trf.xlu0
          %v1195 = vpop.trf.xlu0
          %v1196 = vpop.trf.xlu0
          %v1197 = vpop.trf.xlu0
          %v1198 = vpop.trf.xlu0
          %v1199 = vpop.trf.xlu0
          %v1200 = vpop.trf.xlu0
          %v1201 = vpop.trf.xlu0
          %v1202 = vpop.trf.xlu0
          %v1203 = vpop.trf.xlu0
          %v1204 = vpop.trf.xlu0
          %v1205 = vpop.trf.xlu0
          %v1206 = vpop.trf.xlu0
          %v1207 = vpop.trf.xlu0
          %v1208 = vpop.trf.xlu0
          %v1209 = vpop.trf.xlu0
          %v1210 = vpack.c.bf16 %v1195, %v1194
          %v1211 = vld [vmem:[%s4] sm:$0xf]
          %v1212 = vld [vmem:[%s4 + $0x4] sm:$0xf]
          %v1213 = vld [vmem:[%s5] sm:$0x1]
          %v1215 = vperm.slane %v1213, 0
          %v1219 = vunpack.c.l.b16 %v1211
          %v1220 = vunpack.c.l.b16 %v1212
          %v1221 = vpack.c.b16 %v1220, %v1219
          %vm1223 = vcmask 130048
          %v1225 = vsel %vm1223, %v1210, 0
          %1227 = vmatpush.bf16.msra.mxu0 0
          %1228 = vmatpush.bf16.msra.mxu0 0
          %1229 = vmatpush.bf16.msra.mxu0 0
          %1230 = vmatpush.bf16.msra.mxu0 0
          %1231 = vmatpush.bf16.msra.mxu0 0
          %1232 = vmatpush.bf16.msra.mxu0 0
          %1233 = vmatpush.bf16.msra.mxu0 0
          %1234 = vmatpush.bf16.msra.mxu0 %v1221
          %1235 = vmatmul.bf16.gmra.mxu0 %v1225
          %v1236 = vpop.f32.mrf.mxu0
          %v1237 = vadd.f32 %v1215, %v1236
          %v1238 = vpop.f32.mrf.mxu0
          %v1239 = vadd.f32 %v1215, %v1238
          %1240 = vdwg.mxu0
          %v1241 = vmul.f32 %v1237, 0.5
          %v1242 = vmul.f32 %v1239, 0.5
          %v1243 = vmul.f32 %v1237, 0.044715
          %v1244 = vmul.f32 %v1239, 0.044715
          %v1245 = vmul.f32 %v1243, %v1237
          %v1246 = vmul.f32 %v1244, %v1239
          %v1247 = vmul.f32 %v1245, %v1237
          %v1248 = vmul.f32 %v1246, %v1239
          %v1249 = vadd.f32 %v1237, %v1247
          %v1250 = vadd.f32 %v1239, %v1248
          %v1251 = vmul.f32 %v1249, 0.7978846
          %v1252 = vmul.f32 %v1250, 0.7978846
          %v1253 = vtanh.pop %v1251
          %v1254 = vtanh.pop %v1252
          %v1255 = vadd.f32 %v1253, 1.0
          %v1256 = vadd.f32 %v1254, 1.0
          %v1257 = vmul.f32 %v1241, %v1255
          %v1258 = vmul.f32 %v1242, %v1256
          %1259 = vst.msk [vmem:[%s371] sm:$0xff] %vm1223, %v1257
          %1260 = vst.msk [vmem:[%s371 + $0x8] sm:$0xff] %vm1223, %v1258
        $region56: #{sgconv3_forward.5} parent=43 // pred_fallthru
          _
        %s1261 = sand.u32 %s215, 1
        %s1262 = scalar_lea.sflag [#allocation4], %s1261
        %s1263 = sand.u32 %s215, 1
        %s1264 = smul.addr %s1263, 16
        %s1265 = scalar_lea.vmem [#allocation3], %s1264
        // Predicated region
        $region57: #{sgconv3_forward.5} parent=43 // pred_check
          %p1266 = pneg %p225
        $region58: #{sgconv3_forward.5} parent=43 // pred_check_branch
          %1268 = sbr.rel (%p1266) target = $region60
        $region59: #{sgconv3_forward.5} parent=43 // pred_region
          %s1269 = smul.u32 2, %s26
          %1271 = vsyncadd %s1262, 0
          %s1272 = smul.addr %s25, 2
          %s1273 = sadd.s32 %s1269, %s1272
          %s1274 = smul.addr %s1273, 8
          %s1275 = scalar_lea.hbm %s6, %s1274
          %s1276 = sshll.u32 %s1265, 4
          %s1277 = int_to_ptr.vmem [resolvable:$true] %s1276
          %s1278 = sshll.u32 %s1275, 4
          %s1279 = int_to_ptr.hbm [resolvable:$true] %s1278
          %1284 = dma.vmem_to_hbm [thread:$0]  %s1277, 256, %s1279, %s1262, 128, 128, 8
        $region60: #{sgconv3_forward.5} parent=43 // pred_fallthru
          _
      $region44: #{sgconv3_forward.5} parent=5 // pred_fallthru
        _
      %p1285 = scmp.le.s32.totalorder 2, %s15
      // Predicated region
      $region61: #{sgconv3_forward.5} parent=5 // pred_check
        %p1286 = pneg %p1285
      $region62: #{sgconv3_forward.5} parent=5 // pred_check_branch
        %1288 = sbr.rel (%p1286) target = $region64
      $region63: #{sgconv3_forward.5} parent=5 // pred_region
        %s1289 = ssub.s32 %s15, 2
        // Predicated region
        $region65: #{sgconv3_forward.5} parent=63 // pred_check
          %p1290 = pneg %p231
        $region66: #{sgconv3_forward.5} parent=63 // pred_check_branch
          %1292 = sbr.rel (%p1290) target = $region68
        $region67: #{sgconv3_forward.5} parent=63 // pred_region
          %s1293 = sand.u32 %s216, 1
          %s1294 = scalar_lea.sflag [#allocation4], %s1293
          %s1295 = sand.u32 %s216, 1
          %s1296 = smul.addr %s1295, 16
          %s1297 = scalar_lea.vmem [#allocation3], %s1296
          %1299 = dma.done %s1294, 256
        $region68: #{sgconv3_forward.5} parent=63 // pred_fallthru
          _
      $region64: #{sgconv3_forward.5} parent=5 // pred_fallthru
        _
    $region6: #{sgconv3_forward.5} parent=1 // loop_footer
      %s19 = sadd.s32 1, %s15
    $region7: #{sgconv3_forward.5} parent=1 // loop_footer_branch
      %14 = sbr.rel target = $region3
    $region8: #{sgconv3_forward.5} parent=1 // loop_exit
      _
    %1300 = vsyncpa [#allocation4], 1
    %s1301 = scalar_lea.sflag [#allocation4], 1
    %1302 = vsyncpa %s1301, 1

// kernel: sgconv3_forward.3
$region0: #{sgconv3_forward.3}
  #allocation0 [shape = 'u32[]', space=smem, size = 0x4, offset = 0x4, fixed_abs, tag = 'smem constant byte address 0x4 - core index']
  #allocation1 [shape = 'u32[72,128]{1,0:T(1,128)}', space=vmem, size = 0x9000, scoped, tag = 'internal scratch']
  %s0 = inlined_call_operand.vmem [shape: bf16[2,16,32], index: 0, kind: input, shape index: {}]
  %s1 = inlined_call_operand.vmem [shape: bf16[32,16], index: 1, kind: input, shape index: {}]
  %s2 = inlined_call_operand.vmem [shape: bf16[32,16], index: 2, kind: input, shape index: {}]
  %s3 = inlined_call_operand.vmem [shape: f32[1,16], index: 3, kind: input, shape index: {}]
  %s4 = inlined_call_operand.vmem [shape: f32[1,16], index: 4, kind: input, shape index: {}]
  %s5 = inlined_call_operand.vmem [shape: bf16[48,16], index: 5, kind: input, shape index: {}]
  %s6 = inlined_call_operand.vmem [shape: f32[48,1], index: 6, kind: input, shape index: {}]
  %s7 = inlined_call_operand.vmem [shape: bf16[2,48,16], index: 7, kind: output, shape index: {}]
  %s8 = sld [smem:[#allocation0]]
  $region61: #{sgconv3_forward.3} parent=0
    _
  %s10 = ssub.s32 1, %s8
  %s11 = scalar_select 0, %s10, %s8
  loop: start=0, step=1, limit=4
  $region2: #{sgconv3_forward.3} parent=0 // loop_pre_header
    _
  $region3: #{sgconv3_forward.3} parent=0 // loop_header
    %s13 = sphi 0, %s17
    %p14 = scmp.ge.s32.totalorder %s13, 4
    %s20 = sphi 0, %s32
    %s21 = sphi 0, %s28
    %s22 = sphi 0, %s20
    %s23 = sphi 0, %s21
    %s24 = sphi 0, %s22
    %s25 = sphi 0, %s23
    %s37 = sphi 0, %s39
    %s40 = sphi 0, %s37
    %s41 = sphi 0, %s40
    %s57 = sphi 0, %s41
    %s61 = sphi 0, %s61
    %s63 = sphi 0, %s61
    %s64 = sphi 0, %s63
    %s78 = sphi 0, %s64
    %s82 = sphi 0, %s82
    %s84 = sphi 0, %s82
    %s85 = sphi 0, %s84
    %s99 = sphi 0, %s85
    %s103 = sphi 0, %s103
    %s105 = sphi 0, %s103
    %s106 = sphi 0, %s105
    %s120 = sphi 0, %s106
    %s124 = sphi 0, %s124
    %s126 = sphi 0, %s124
    %s127 = sphi 0, %s126
    %s141 = sphi 0, %s127
    %s145 = sphi 0, %s145
    %s147 = sphi 0, %s145
    %s148 = sphi 0, %s147
    %s162 = sphi 0, %s148
    %s166 = sphi 0, %s166
    %s168 = sphi 0, %s166
    %s169 = sphi 0, %s168
    %s183 = sphi 0, %s169
    %s191 = sphi 0, %s193
    %s194 = sphi 0, %s191
    %s195 = sphi 0, %s194
    %s211 = sphi 0, %s195
  $region4: #{sgconv3_forward.3} parent=0 // loop_header_branch
    %16 = sbr.rel (%p14) target = $region8
  $region5: #{sgconv3_forward.3} parent=0 // loop_body
    %s18 = ssub.s32 %s13, 1
    %s19 = ssub.s32 %s13, 2
    %s26 = sadd.s32 1, %s21
    %p27 = scmp.ge.s32.totalorder %s26, 1
    %s28 = scalar_select %p27, 0, %s26
    %s29 = sadd.s32 1, %s20
    %s30 = scalar_select %p27, %s29, %s20
    %p31 = scmp.ge.s32.totalorder %s30, 2
    %s32 = scalar_select %p31, 0, %s30
    %s33 = ssub.s32 %s20, %s32
    %s34 = ssub.s32 %s21, %s28
    %s35 = sor.u32 %s33, %s34
    %p36 = scmp.eq.s32.totalorder %s35, 0
    %s38 = sadd.s32 %s37, 1
    %s39 = scalar_select %p36, %s37, %s38
    %p42 = pneg %p36
    %p43 = scmp.eq.s32.totalorder %s13, 1
    %p44 = por %p42, %p43
    %p45 = scmp.ne.s32.totalorder %s37, %s40
    %p46 = scmp.eq.s32.totalorder %s13, 0
    %p47 = por %p45, %p46
    %p48 = scmp.ne.s32.totalorder %s37, %s40
    %p49 = scmp.eq.s32.totalorder %s18, 1
    %p50 = por %p48, %p49
    %p51 = scmp.ne.s32.totalorder %s40, %s41
    %p52 = scmp.eq.s32.totalorder %s18, 0
    %p53 = por %p51, %p52
    %p54 = scmp.ne.s32.totalorder %s40, %s41
    %p55 = scmp.eq.s32.totalorder %s19, 1
    %p56 = por %p54, %p55
    %p58 = scmp.ne.s32.totalorder %s41, %s57
    %p59 = scmp.eq.s32.totalorder %s19, 0
    %p60 = por %p58, %p59
    %s62 = sadd.s32 %s61, 1
    %p65 = scmp.eq.s32.totalorder %s13, 1
    %p66 = scmp.ne.s32.totalorder %s61, %s63
    %p67 = scmp.eq.s32.totalorder %s13, 0
    %p68 = por %p66, %p67
    %p69 = scmp.ne.s32.totalorder %s61, %s63
    %p70 = scmp.eq.s32.totalorder %s18, 1
    %p71 = por %p69, %p70
    %p72 = scmp.ne.s32.totalorder %s63, %s64
    %p73 = scmp.eq.s32.totalorder %s18, 0
    %p74 = por %p72, %p73
    %p75 = scmp.ne.s32.totalorder %s63, %s64
    %p76 = scmp.eq.s32.totalorder %s19, 1
    %p77 = por %p75, %p76
    %p79 = scmp.ne.s32.totalorder %s64, %s78
    %p80 = scmp.eq.s32.totalorder %s19, 0
    %p81 = por %p79, %p80
    %s83 = sadd.s32 %s82, 1
    %p86 = scmp.eq.s32.totalorder %s13, 1
    %p87 = scmp.ne.s32.totalorder %s82, %s84
    %p88 = scmp.eq.s32.totalorder %s13, 0
    %p89 = por %p87, %p88
    %p90 = scmp.ne.s32.totalorder %s82, %s84
    %p91 = scmp.eq.s32.totalorder %s18, 1
    %p92 = por %p90, %p91
    %p93 = scmp.ne.s32.totalorder %s84, %s85
    %p94 = scmp.eq.s32.totalorder %s18, 0
    %p95 = por %p93, %p94
    %p96 = scmp.ne.s32.totalorder %s84, %s85
    %p97 = scmp.eq.s32.totalorder %s19, 1
    %p98 = por %p96, %p97
    %p100 = scmp.ne.s32.totalorder %s85, %s99
    %p101 = scmp.eq.s32.totalorder %s19, 0
    %p102 = por %p100, %p101
    %s104 = sadd.s32 %s103, 1
    %p107 = scmp.eq.s32.totalorder %s13, 1
    %p108 = scmp.ne.s32.totalorder %s103, %s105
    %p109 = scmp.eq.s32.totalorder %s13, 0
    %p110 = por %p108, %p109
    %p111 = scmp.ne.s32.totalorder %s103, %s105
    %p112 = scmp.eq.s32.totalorder %s18, 1
    %p113 = por %p111, %p112
    %p114 = scmp.ne.s32.totalorder %s105, %s106
    %p115 = scmp.eq.s32.totalorder %s18, 0
    %p116 = por %p114, %p115
    %p117 = scmp.ne.s32.totalorder %s105, %s106
    %p118 = scmp.eq.s32.totalorder %s19, 1
    %p119 = por %p117, %p118
    %p121 = scmp.ne.s32.totalorder %s106, %s120
    %p122 = scmp.eq.s32.totalorder %s19, 0
    %p123 = por %p121, %p122
    %s125 = sadd.s32 %s124, 1
    %p128 = scmp.eq.s32.totalorder %s13, 1
    %p129 = scmp.ne.s32.totalorder %s124, %s126
    %p130 = scmp.eq.s32.totalorder %s13, 0
    %p131 = por %p129, %p130
    %p132 = scmp.ne.s32.totalorder %s124, %s126
    %p133 = scmp.eq.s32.totalorder %s18, 1
    %p134 = por %p132, %p133
    %p135 = scmp.ne.s32.totalorder %s126, %s127
    %p136 = scmp.eq.s32.totalorder %s18, 0
    %p137 = por %p135, %p136
    %p138 = scmp.ne.s32.totalorder %s126, %s127
    %p139 = scmp.eq.s32.totalorder %s19, 1
    %p140 = por %p138, %p139
    %p142 = scmp.ne.s32.totalorder %s127, %s141
    %p143 = scmp.eq.s32.totalorder %s19, 0
    %p144 = por %p142, %p143
    %s146 = sadd.s32 %s145, 1
    %p149 = scmp.eq.s32.totalorder %s13, 1
    %p150 = scmp.ne.s32.totalorder %s145, %s147
    %p151 = scmp.eq.s32.totalorder %s13, 0
    %p152 = por %p150, %p151
    %p153 = scmp.ne.s32.totalorder %s145, %s147
    %p154 = scmp.eq.s32.totalorder %s18, 1
    %p155 = por %p153, %p154
    %p156 = scmp.ne.s32.totalorder %s147, %s148
    %p157 = scmp.eq.s32.totalorder %s18, 0
    %p158 = por %p156, %p157
    %p159 = scmp.ne.s32.totalorder %s147, %s148
    %p160 = scmp.eq.s32.totalorder %s19, 1
    %p161 = por %p159, %p160
    %p163 = scmp.ne.s32.totalorder %s148, %s162
    %p164 = scmp.eq.s32.totalorder %s19, 0
    %p165 = por %p163, %p164
    %s167 = sadd.s32 %s166, 1
    %p170 = scmp.eq.s32.totalorder %s13, 1
    %p171 = scmp.ne.s32.totalorder %s166, %s168
    %p172 = scmp.eq.s32.totalorder %s13, 0
    %p173 = por %p171, %p172
    %p174 = scmp.ne.s32.totalorder %s166, %s168
    %p175 = scmp.eq.s32.totalorder %s18, 1
    %p176 = por %p174, %p175
    %p177 = scmp.ne.s32.totalorder %s168, %s169
    %p178 = scmp.eq.s32.totalorder %s18, 0
    %p179 = por %p177, %p178
    %p180 = scmp.ne.s32.totalorder %s168, %s169
    %p181 = scmp.eq.s32.totalorder %s19, 1
    %p182 = por %p180, %p181
    %p184 = scmp.ne.s32.totalorder %s169, %s183
    %p185 = scmp.eq.s32.totalorder %s19, 0
    %p186 = por %p184, %p185
    %s187 = ssub.s32 %s20, %s32
    %s188 = ssub.s32 %s21, %s28
    %s189 = sor.u32 %s187, %s188
    %p190 = scmp.eq.s32.totalorder %s189, 0
    %s192 = sadd.s32 %s191, 1
    %s193 = scalar_select %p190, %s191, %s192
    %p196 = pneg %p190
    %p197 = scmp.eq.s32.totalorder %s13, 1
    %p198 = por %p196, %p197
    %p199 = scmp.ne.s32.totalorder %s191, %s194
    %p200 = scmp.eq.s32.totalorder %s13, 0
    %p201 = por %p199, %p200
    %p202 = scmp.ne.s32.totalorder %s191, %s194
    %p203 = scmp.eq.s32.totalorder %s18, 1
    %p204 = por %p202, %p203
    %p205 = scmp.ne.s32.totalorder %s194, %s195
    %p206 = scmp.eq.s32.totalorder %s18, 0
    %p207 = por %p205, %p206
    %p208 = scmp.ne.s32.totalorder %s194, %s195
    %p209 = scmp.eq.s32.totalorder %s19, 1
    %p210 = por %p208, %p209
    %p212 = scmp.ne.s32.totalorder %s195, %s211
    %p213 = scmp.eq.s32.totalorder %s19, 0
    %p214 = por %p212, %p213
    %p215 = scmp.le.s32.totalorder 1, %s13
    %p216 = scmp.lt.s32.totalorder %s13, 3
    %p217 = pnand %p215, %p216
    %p218 = pneg %p217
    // Predicated region
    $region9: #{sgconv3_forward.3} parent=5 // pred_check
      _
    $region10: #{sgconv3_forward.3} parent=5 // pred_check_branch
      %220 = sbr.rel (%p217) target = $region12
    $region11: #{sgconv3_forward.3} parent=5 // pred_region
      %s221 = ssub.s32 %s13, 1
      // Predicated region
      $region13: #{sgconv3_forward.3} parent=11 // pred_check
        %p222 = pneg %p74
      $region14: #{sgconv3_forward.3} parent=11 // pred_check_branch
        %224 = sbr.rel (%p222) target = $region16
      $region15: #{sgconv3_forward.3} parent=11 // pred_region
        _
      $region16: #{sgconv3_forward.3} parent=11 // pred_fallthru
        _
      // Predicated region
      $region17: #{sgconv3_forward.3} parent=11 // pred_check
        %p225 = pneg %p95
      $region18: #{sgconv3_forward.3} parent=11 // pred_check_branch
        %227 = sbr.rel (%p225) target = $region20
      $region19: #{sgconv3_forward.3} parent=11 // pred_region
        _
      $region20: #{sgconv3_forward.3} parent=11 // pred_fallthru
        _
      // Predicated region
      $region21: #{sgconv3_forward.3} parent=11 // pred_check
        %p228 = pneg %p116
      $region22: #{sgconv3_forward.3} parent=11 // pred_check_branch
        %230 = sbr.rel (%p228) target = $region24
      $region23: #{sgconv3_forward.3} parent=11 // pred_region
        _
      $region24: #{sgconv3_forward.3} parent=11 // pred_fallthru
        _
      // Predicated region
      $region25: #{sgconv3_forward.3} parent=11 // pred_check
        %p231 = pneg %p137
      $region26: #{sgconv3_forward.3} parent=11 // pred_check_branch
        %233 = sbr.rel (%p231) target = $region28
      $region27: #{sgconv3_forward.3} parent=11 // pred_region
        _
      $region28: #{sgconv3_forward.3} parent=11 // pred_fallthru
        _
      // Predicated region
      $region29: #{sgconv3_forward.3} parent=11 // pred_check
        %p234 = pneg %p158
      $region30: #{sgconv3_forward.3} parent=11 // pred_check_branch
        %236 = sbr.rel (%p234) target = $region32
      $region31: #{sgconv3_forward.3} parent=11 // pred_region
        _
      $region32: #{sgconv3_forward.3} parent=11 // pred_fallthru
        _
      // Predicated region
      $region33: #{sgconv3_forward.3} parent=11 // pred_check
        %p237 = pneg %p179
      $region34: #{sgconv3_forward.3} parent=11 // pred_check_branch
        %239 = sbr.rel (%p237) target = $region36
      $region35: #{sgconv3_forward.3} parent=11 // pred_region
        _
      $region36: #{sgconv3_forward.3} parent=11 // pred_fallthru
        _
    $region12: #{sgconv3_forward.3} parent=5 // pred_fallthru
      _
    %p240 = scmp.lt.s32.totalorder %s13, 2
    // Predicated region
    $region37: #{sgconv3_forward.3} parent=5 // pred_check
      %p241 = pneg %p240
    $region38: #{sgconv3_forward.3} parent=5 // pred_check_branch
      %243 = sbr.rel (%p241) target = $region40
    $region39: #{sgconv3_forward.3} parent=5 // pred_region
      // Predicated region
      $region41: #{sgconv3_forward.3} parent=39 // pred_check
        %p244 = pneg %p47
      $region42: #{sgconv3_forward.3} parent=39 // pred_check_branch
        %246 = sbr.rel (%p244) target = $region44
      $region43: #{sgconv3_forward.3} parent=39 // pred_region
        %s247 = smul.u32 2, %s21
        %p248 = scmp.lt.s32.totalorder %s20, 1
        %s249 = scalar_select %p248, %s20, 1
        %p250 = scmp.lt.s32.totalorder %s247, 1
        %s251 = scalar_select %p250, %s247, 1
        %s252 = smul.addr %s249, 2
        %s253 = sadd.s32 %s251, %s252
        %s254 = smul.addr %s253, 4
        %s255 = scalar_lea.vmem %s0, %s254
        %s256 = smul.u32 2, %s21
      $region44: #{sgconv3_forward.3} parent=39 // pred_fallthru
        _
    $region40: #{sgconv3_forward.3} parent=5 // pred_fallthru
      _
    %p257 = scmp.le.s32.totalorder 1, %s13
    %p258 = scmp.lt.s32.totalorder %s13, 3
    %p259 = pnand %p257, %p258
    %p260 = pneg %p259
    // Predicated region
    $region45: #{sgconv3_forward.3} parent=5 // pred_check
      _
    $region46: #{sgconv3_forward.3} parent=5 // pred_check_branch
      %262 = sbr.rel (%p259) target = $region48
    $region47: #{sgconv3_forward.3} parent=5 // pred_region
      %s263 = ssub.s32 %s13, 1
      %s264 = smul.u32 2, %s23
      %p265 = scmp.lt.s32.totalorder %s22, 1
      %s266 = scalar_select %p265, %s22, 1
      %p267 = scmp.lt.s32.totalorder %s264, 1
      %s268 = scalar_select %p267, %s264, 1
      %s269 = smul.addr %s266, 2
      %s270 = sadd.s32 %s268, %s269
      %s271 = smul.addr %s270, 4
      %s272 = scalar_lea.vmem %s0, %s271
      %p273 = pneg %p53
      %p274 = pneg %p50
      %p275 = pneg %p74
      %p276 = pneg %p71
      %p277 = pneg %p95
      %p278 = pneg %p92
      %p279 = pneg %p116
      %p280 = pneg %p113
      %p281 = pneg %p137
      %p282 = pneg %p134
      %p283 = pneg %p158
      %p284 = pneg %p155
      %p285 = pneg %p179
      %p286 = pneg %p176
      %p287 = pneg %p207
      %p288 = pneg %p204
      %p289 = scmp.lt.s32.totalorder %s22, 1
      %s290 = scalar_select %p289, %s22, 1
      %p291 = scmp.lt.s32.totalorder %s23, 0
      %s292 = scalar_select %p291, %s23, 0
      %s293 = smul.addr %s290, 6
      %s294 = sadd.s32 %s292, %s293
      %s295 = smul.addr %s294, 4
      %s296 = scalar_lea.vmem %s7, %s295
      %s297 = smul.u32 2, %s23
      %p298 = scmp.lt.s32.totalorder %s22, 1
      %s299 = scalar_select %p298, %s22, 1
      %p300 = scmp.lt.s32.totalorder %s297, 1
      %s301 = scalar_select %p300, %s297, 1
      %s302 = smul.addr %s299, 2
      %s303 = sadd.s32 %s301, %s302
      %s304 = smul.addr %s303, 4
      %s305 = scalar_lea.vmem %s0, %s304
      %s306 = smul.u32 2, %s23
      %p307 = scmp.lt.s32.totalorder %s22, 1
      %s308 = scalar_select %p307, %s22, 1
      %p309 = scmp.lt.s32.totalorder %s23, 0
      %s310 = scalar_select %p309, %s23, 0
      %s311 = smul.addr %s308, 6
      %s312 = sadd.s32 %s310, %s311
      %s313 = smul.addr %s312, 4
      %s314 = scalar_lea.vmem %s7, %s313
      %v316 = vld [vmem:[%s305] sm:$0xf]
      %v317 = vld [vmem:[%s305 + $0x4] sm:$0xf]
      %v318 = vld [vmem:[%s1] sm:$0xf]
      %v319 = vld [vmem:[%s1 + $0x4] sm:$0xf]
      %v320 = vld [vmem:[%s1 + $0x8] sm:$0xf]
      %v321 = vld [vmem:[%s1 + $0xc] sm:$0xf]
      %v322 = vld [vmem:[%s3] sm:$0x1]
      %v324 = vperm.slane %v322, 0
      %v328 = vunpack.c.l.b16 %v316
      %v329 = vunpack.c.l.b16 %v317
      %v330 = vpack.c.b16 %v329, %v328
      %v335 = vunpack.c.l.b16 %v318
      %v336 = vunpack.c.l.b16 %v319
      %v337 = vunpack.c.l.b16 %v320
      %v338 = vunpack.c.l.b16 %v321
      %v339 = vpack.c.b16 %v336, %v335
      %v340 = vpack.c.b16 %v338, %v337
      %vm343 = vcmask 261120
      %v345 = vsel %vm343, %v330, 0
      %347 = vmatpush.bf16.msra.mxu0 0
      %348 = vmatpush.bf16.msra.mxu0 0
      %349 = vmatpush.bf16.msra.mxu0 0
      %350 = vmatpush.bf16.msra.mxu0 0
      %351 = vmatpush.bf16.msra.mxu0 0
      %352 = vmatpush.bf16.msra.mxu0 0
      %353 = vmatpush.bf16.msra.mxu0 %v340
      %354 = vmatpush.bf16.msra.mxu0 %v339
      %355 = vmatmul.bf16.gmra.mxu0 %v345
      %v356 = vpop.f32.mrf.mxu0
      %v357 = vadd.f32 %v324, %v356
      %v358 = vpop.f32.mrf.mxu0
      %v359 = vadd.f32 %v324, %v358
      %360 = vdwg.mxu0
      %v361 = vld [vmem:[%s2] sm:$0xf]
      %v362 = vld [vmem:[%s2 + $0x4] sm:$0xf]
      %v363 = vld [vmem:[%s2 + $0x8] sm:$0xf]
      %v364 = vld [vmem:[%s2 + $0xc] sm:$0xf]
      %v365 = vld [vmem:[%s4] sm:$0x1]
      %v367 = vperm.slane %v365, 0
      %v373 = vunpack.c.l.b16 %v361
      %v374 = vunpack.c.l.b16 %v362
      %v375 = vunpack.c.l.b16 %v363
      %v376 = vunpack.c.l.b16 %v364
      %v377 = vpack.c.b16 %v374, %v373
      %v378 = vpack.c.b16 %v376, %v375
      %381 = vmatpush.bf16.msra.mxu0 0
      %382 = vmatpush.bf16.msra.mxu0 0
      %383 = vmatpush.bf16.msra.mxu0 0
      %384 = vmatpush.bf16.msra.mxu0 0
      %385 = vmatpush.bf16.msra.mxu0 0
      %386 = vmatpush.bf16.msra.mxu0 0
      %387 = vmatpush.bf16.msra.mxu0 %v378
      %388 = vmatpush.bf16.msra.mxu0 %v377
      %389 = vmatmul.bf16.gmra.mxu0 %v345
      %v390 = vpop.f32.mrf.mxu0
      %v391 = vadd.f32 %v367, %v390
      %v392 = vpop.f32.mrf.mxu0
      %v393 = vadd.f32 %v367, %v392
      %394 = vdwg.mxu0
      %v395 = vxor.u32 %v391, 2147483648
      %v396 = vxor.u32 %v393, 2147483648
      %v397 = vmul.f32 %v395, 1.442695
      %v398 = vpow.pop %v397
      %v399 = vmul.f32 %v396, 1.442695
      %v400 = vpow.pop %v399
      %v401 = vadd.f32 %v398, 1.0
      %v402 = vadd.f32 %v400, 1.0
      %v403 = vrcp.pop %v401
      %v404 = vmul.f32 %v401, %v403
      %v405 = vsub.f32 1.0, %v404
      %v406 = vmul.f32 %v403, %v405
      %v407 = vadd.f32 %v403, %v406
      %vm408 = vweird.f32 %v401
      %vm409 = vweird.f32 %v403
      %vm410 = vmor %vm408, %vm409
      %v411 = vsel %vm410, %v403, %v407
      %v412 = vand.u32 2147483647, %v401
      %vm413 = vcmp.eq.f32.partialorder %v412, 8.507059e+37
      %v414 = vand.u32 %v401, 2147483648
      %v415 = vor.u32 1.1754944e-38, %v414
      %v416 = vsel %vm413, %v415, %v411
      %v417 = vmul.f32 1.0, %v416
      %v418 = vrcp.pop %v402
      %v419 = vmul.f32 %v402, %v418
      %v420 = vsub.f32 1.0, %v419
      %v421 = vmul.f32 %v418, %v420
      %v422 = vadd.f32 %v418, %v421
      %vm423 = vweird.f32 %v402
      %vm424 = vweird.f32 %v418
      %vm425 = vmor %vm423, %vm424
      %v426 = vsel %vm425, %v418, %v422
      %v427 = vand.u32 2147483647, %v402
      %vm428 = vcmp.eq.f32.partialorder %v427, 8.507059e+37
      %v429 = vand.u32 %v402, 2147483648
      %v430 = vor.u32 1.1754944e-38, %v429
      %v431 = vsel %vm428, %v430, %v426
      %v432 = vmul.f32 1.0, %v431
      %v433 = vmul.f32 %v357, %v417
      %v434 = vmul.f32 %v359, %v432
      %v435 = vpack.c.bf16 %v434, %v433
      %v436 = vld [vmem:[%s5] sm:$0xf]
      %v437 = vld [vmem:[%s5 + $0x4] sm:$0xf]
      %v438 = vld [vmem:[%s5 + $0x8] sm:$0xf]
      %v439 = vld [vmem:[%s5 + $0xc] sm:$0xf]
      %v440 = vld [vmem:[%s5 + $0x10] sm:$0xf]
      %v441 = vld [vmem:[%s5 + $0x14] sm:$0xf]
      %v442 = vld [vmem:[%s6] sm:$0xff]
      %v443 = vld [vmem:[%s6 + $0x8] sm:$0xff]
      %v444 = vld [vmem:[%s6 + $0x10] sm:$0xff]
      %v445 = vld [vmem:[%s6 + $0x18] sm:$0xff]
      %v446 = vld [vmem:[%s6 + $0x20] sm:$0xff]
      %v447 = vld [vmem:[%s6 + $0x28] sm:$0xff]
      %449 = vset.pattern.permute.xlu0 0
      %450 = vperm.xlu0 %449, %v442
      %v451 = vpop.permute.xlu0 %450
      %454 = vset.pattern.permute.xlu0 0
      %455 = vperm.xlu0 %454, %v443
      %v456 = vpop.permute.xlu0 %455
      %459 = vset.pattern.permute.xlu0 0
      %460 = vperm.xlu0 %459, %v444
      %v461 = vpop.permute.xlu0 %460
      %464 = vset.pattern.permute.xlu0 0
      %465 = vperm.xlu0 %464, %v445
      %v466 = vpop.permute.xlu0 %465
      %469 = vset.pattern.permute.xlu0 0
      %470 = vperm.xlu0 %469, %v446
      %v471 = vpop.permute.xlu0 %470
      %474 = vset.pattern.permute.xlu0 0
      %475 = vperm.xlu0 %474, %v447
      %v476 = vpop.permute.xlu0 %475
      %v484 = vunpack.c.l.b16 %v436
      %v485 = vunpack.c.l.b16 %v437
      %v486 = vunpack.c.l.b16 %v438
      %v487 = vunpack.c.l.b16 %v439
      %v488 = vunpack.c.l.b16 %v440
      %v489 = vunpack.c.l.b16 %v441
      %v490 = vpack.c.b16 %v485, %v484
      %v491 = vpack.c.b16 %v487, %v486
      %v492 = vpack.c.b16 %v489, %v488
      %vm493 = vcmask 130048
      %v495 = vsel %vm493, %v490, 0
      %v498 = vsel %vm493, %v491, 0
      %v501 = vsel %vm493, %v492, 0
      %v504 = vsel %vm493, %v435, 0
      %506 = vmatpush.bf16.xpose.msra.mxu0 0
      %507 = vmatpush.bf16.xpose.msra.mxu0 0
      %508 = vmatpush.bf16.xpose.msra.mxu0 0
      %509 = vmatpush.bf16.xpose.msra.mxu0 0
      %510 = vmatpush.bf16.xpose.msra.mxu0 0
      %511 = vmatpush.bf16.xpose.msra.mxu0 0
      %512 = vmatpush.bf16.xpose.msra.mxu0 0
      %513 = vmatpush.bf16.xpose.msra.mxu0 %v504
      %514 = vmatmul.bf16.gmra.mxu0 %v495
      %v515 = vpop.f32.mrf.mxu0
      %v516 = vadd.f32 %v451, %v515
      %v517 = vpop.f32.mrf.mxu0
      %v518 = vadd.f32 %v456, %v517
      %519 = vmatmul.bf16.gmra.mxu0 %v498
      %v520 = vpop.f32.mrf.mxu0
      %v521 = vadd.f32 %v461, %v520
      %v522 = vpop.f32.mrf.mxu0
      %v523 = vadd.f32 %v466, %v522
      %524 = vmatmul.bf16.gmra.mxu0 %v501
      %v525 = vpop.f32.mrf.mxu0
      %v526 = vadd.f32 %v471, %v525
      %v527 = vpop.f32.mrf.mxu0
      %v528 = vadd.f32 %v476, %v527
      %529 = vdwg.mxu0
      %v530 = vpack.c.bf16 %v516, %v516
      %v531 = vpack.c.bf16 %v518, %v518
      %v532 = vpack.c.bf16 %v521, %v521
      %v533 = vpack.c.bf16 %v523, %v523
      %v534 = vpack.c.bf16 %v526, %v526
      %v535 = vpack.c.bf16 %v528, %v528
      %vm536 = vcmask 125952
      %537 = vst.msk [vmem:[%s314] sm:$0xf] %vm536, %v530
      %538 = vst.msk [vmem:[%s314 + $0x4] sm:$0xf] %vm536, %v531
      %539 = vst.msk [vmem:[%s314 + $0x8] sm:$0xf] %vm536, %v532
      %540 = vst.msk [vmem:[%s314 + $0xc] sm:$0xf] %vm536, %v533
      %541 = vst.msk [vmem:[%s314 + $0x10] sm:$0xf] %vm536, %v534
      %542 = vst.msk [vmem:[%s314 + $0x14] sm:$0xf] %vm536, %v535
      %p543 = scmp.lt.s32.totalorder %s22, 1
      %s544 = scalar_select %p543, %s22, 1
      %p545 = scmp.lt.s32.totalorder %s23, 0
      %s546 = scalar_select %p545, %s23, 0
      %s547 = smul.addr %s544, 6
      %s548 = sadd.s32 %s546, %s547
      %s549 = smul.addr %s548, 4
      %s550 = scalar_lea.vmem %s7, %s549
      // Predicated region
      $region49: #{sgconv3_forward.3} parent=47 // pred_check
        %p551 = pneg %p204
      $region50: #{sgconv3_forward.3} parent=47 // pred_check_branch
        %553 = sbr.rel (%p551) target = $region52
      $region51: #{sgconv3_forward.3} parent=47 // pred_region
        _
      $region52: #{sgconv3_forward.3} parent=47 // pred_fallthru
        _
    $region48: #{sgconv3_forward.3} parent=5 // pred_fallthru
      _
    %p554 = scmp.le.s32.totalorder 2, %s13
    // Predicated region
    $region53: #{sgconv3_forward.3} parent=5 // pred_check
      %p555 = pneg %p554
    $region54: #{sgconv3_forward.3} parent=5 // pred_check_branch
      %557 = sbr.rel (%p555) target = $region56
    $region55: #{sgconv3_forward.3} parent=5 // pred_region
      %s558 = ssub.s32 %s13, 2
      // Predicated region
      $region57: #{sgconv3_forward.3} parent=55 // pred_check
        %p559 = pneg %p210
      $region58: #{sgconv3_forward.3} parent=55 // pred_check_branch
        %561 = sbr.rel (%p559) target = $region60
      $region59: #{sgconv3_forward.3} parent=55 // pred_region
        %p562 = scmp.lt.s32.totalorder %s24, 1
        %s563 = scalar_select %p562, %s24, 1
        %p564 = scmp.lt.s32.totalorder %s25, 0
        %s565 = scalar_select %p564, %s25, 0
        %s566 = smul.addr %s563, 6
        %s567 = sadd.s32 %s565, %s566
        %s568 = smul.addr %s567, 4
        %s569 = scalar_lea.vmem %s7, %s568
      $region60: #{sgconv3_forward.3} parent=55 // pred_fallthru
        _
    $region56: #{sgconv3_forward.3} parent=5 // pred_fallthru
      _
  $region6: #{sgconv3_forward.3} parent=0 // loop_footer
    %s17 = sadd.s32 1, %s13
  $region7: #{sgconv3_forward.3} parent=0 // loop_footer_branch
    %12 = sbr.rel target = $region3
  $region8: #{sgconv3_forward.3} parent=0 // loop_exit
    _

// kernel: sgconv3_forward.4
$region0: #{sgconv3_forward.4}
  #allocation0 [shape = 'u32[]', space=smem, size = 0x4, offset = 0x4, fixed_abs, tag = 'smem constant byte address 0x4 - core index']
  #allocation1 [shape = 'u32[72,128]{1,0:T(1,128)}', space=vmem, size = 0x9000, scoped, tag = 'internal scratch']
  #allocation2 [shape = 'f32[16,16]{1,0:T(8,128)}', space=vmem, size = 0x2000, scoped, tag = 'scratch operand']
  %s0 = inlined_call_operand.vmem [shape: bf16[2,48,16], index: 0, kind: input, shape index: {}]
  %s1 = inlined_call_operand.hbm [shape: bf16[1,16,16,16], index: 1, kind: input, shape index: {}]
  %s2 = inlined_call_operand.vmem [shape: bf16[2,16,16], index: 2, kind: output, shape index: {}]
  %s3 = sld [smem:[#allocation0]]
  $region57: #{sgconv3_forward.4} parent=0
    _
  %s5 = ssub.s32 1, %s3
  %s6 = scalar_select 0, %s5, %s3
  $region1: #{sgconv3_forward.4} parent=0
    #allocation3 [shape = 'u8[65536]{0}', space=vmem, size = 0x10000, scoped, tag = 'input window, operand 1, single buffered']
    #allocation4 [shape = 's32[2]{0}', space=sflag, size = 0x8, scoped, tag = 'scoped memory for sgconv3_forward.4']
    %7 = vsyncpa [#allocation4], 0
    loop: start=0, step=1, limit=4
    $region2: #{sgconv3_forward.4} parent=1 // loop_pre_header
      _
    $region3: #{sgconv3_forward.4} parent=1 // loop_header
      %s9 = sphi 0, %s13
      %p10 = scmp.ge.s32.totalorder %s9, 4
      %s16 = sphi 0, %s35
      %s17 = sphi 0, %s31
      %s18 = sphi 0, %s27
      %s19 = sphi 0, %s16
      %s20 = sphi 0, %s17
      %s21 = sphi 0, %s18
      %s22 = sphi 0, %s19
      %s23 = sphi 0, %s20
      %s24 = sphi 0, %s21
      %s44 = sphi 0, %s46
      %s47 = sphi 0, %s44
      %s48 = sphi 0, %s47
      %s64 = sphi 0, %s48
      %s76 = sphi 0, %s78
      %s79 = sphi 0, %s76
      %s80 = sphi 0, %s79
      %s96 = sphi 0, %s80
      %s104 = sphi 0, %s106
      %s107 = sphi 0, %s104
      %s108 = sphi 0, %s107
      %s124 = sphi 0, %s108
    $region4: #{sgconv3_forward.4} parent=1 // loop_header_branch
      %12 = sbr.rel (%p10) target = $region8
    $region5: #{sgconv3_forward.4} parent=1 // loop_body
      %s14 = ssub.s32 %s9, 1
      %s15 = ssub.s32 %s9, 2
      %s25 = sadd.s32 1, %s18
      %p26 = scmp.ge.s32.totalorder %s25, 1
      %s27 = scalar_select %p26, 0, %s25
      %s28 = sadd.s32 1, %s17
      %s29 = scalar_select %p26, %s28, %s17
      %p30 = scmp.ge.s32.totalorder %s29, 1
      %s31 = scalar_select %p30, 0, %s29
      %s32 = sadd.s32 1, %s16
      %s33 = scalar_select %p30, %s32, %s16
      %p34 = scmp.ge.s32.totalorder %s33, 2
      %s35 = scalar_select %p34, 0, %s33
      %p36 = scmp.lt.s32.totalorder %s18, %s17
      %s37 = scalar_select %p36, %s18, %s17
      %p38 = scmp.lt.s32.totalorder %s27, %s31
      %s39 = scalar_select %p38, %s27, %s31
      %s40 = ssub.s32 %s16, %s35
      %s41 = ssub.s32 %s37, %s39
      %s42 = sor.u32 %s40, %s41
      %p43 = scmp.eq.s32.totalorder %s42, 0
      %s45 = sadd.s32 %s44, 1
      %s46 = scalar_select %p43, %s44, %s45
      %p49 = pneg %p43
      %p50 = scmp.eq.s32.totalorder %s9, 1
      %p51 = por %p49, %p50
      %p52 = scmp.ne.s32.totalorder %s44, %s47
      %p53 = scmp.eq.s32.totalorder %s9, 0
      %p54 = por %p52, %p53
      %p55 = scmp.ne.s32.totalorder %s44, %s47
      %p56 = scmp.eq.s32.totalorder %s14, 1
      %p57 = por %p55, %p56
      %p58 = scmp.ne.s32.totalorder %s47, %s48
      %p59 = scmp.eq.s32.totalorder %s14, 0
      %p60 = por %p58, %p59
      %p61 = scmp.ne.s32.totalorder %s47, %s48
      %p62 = scmp.eq.s32.totalorder %s15, 1
      %p63 = por %p61, %p62
      %p65 = scmp.ne.s32.totalorder %s48, %s64
      %p66 = scmp.eq.s32.totalorder %s15, 0
      %p67 = por %p65, %p66
      %s68 = ssub.s32 %s17, %s18
      %p69 = scmp.gt.s32.totalorder %s68, 0
      %s70 = scalar_select %p69, %s68, 0
      %s71 = ssub.s32 %s31, %s27
      %p72 = scmp.gt.s32.totalorder %s71, 0
      %s73 = scalar_select %p72, %s71, 0
      %s74 = ssub.s32 %s70, %s73
      %p75 = scmp.eq.s32.totalorder %s74, 0
      %s77 = sadd.s32 %s76, 1
      %s78 = scalar_select %p75, %s76, %s77
      %p81 = pneg %p75
      %p82 = scmp.eq.s32.totalorder %s9, 1
      %p83 = por %p81, %p82
      %p84 = scmp.ne.s32.totalorder %s76, %s79
      %p85 = scmp.eq.s32.totalorder %s9, 0
      %p86 = por %p84, %p85
      %p87 = scmp.ne.s32.totalorder %s76, %s79
      %p88 = scmp.eq.s32.totalorder %s14, 1
      %p89 = por %p87, %p88
      %p90 = scmp.ne.s32.totalorder %s79, %s80
      %p91 = scmp.eq.s32.totalorder %s14, 0
      %p92 = por %p90, %p91
      %p93 = scmp.ne.s32.totalorder %s79, %s80
      %p94 = scmp.eq.s32.totalorder %s15, 1
      %p95 = por %p93, %p94
      %p97 = scmp.ne.s32.totalorder %s80, %s96
      %p98 = scmp.eq.s32.totalorder %s15, 0
      %p99 = por %p97, %p98
      %s100 = ssub.s32 %s16, %s35
      %s101 = ssub.s32 %s17, %s31
      %s102 = sor.u32 %s100, %s101
      %p103 = scmp.eq.s32.totalorder %s102, 0
      %s105 = sadd.s32 %s104, 1
      %s106 = scalar_select %p103, %s104, %s105
      %p109 = pneg %p103
      %p110 = scmp.eq.s32.totalorder %s9, 1
      %p111 = por %p109, %p110
      %p112 = scmp.ne.s32.totalorder %s104, %s107
      %p113 = scmp.eq.s32.totalorder %s9, 0
      %p114 = por %p112, %p113
      %p115 = scmp.ne.s32.totalorder %s104, %s107
      %p116 = scmp.eq.s32.totalorder %s14, 1
      %p117 = por %p115, %p116
      %p118 = scmp.ne.s32.totalorder %s107, %s108
      %p119 = scmp.eq.s32.totalorder %s14, 0
      %p120 = por %p118, %p119
      %p121 = scmp.ne.s32.totalorder %s107, %s108
      %p122 = scmp.eq.s32.totalorder %s15, 1
      %p123 = por %p121, %p122
      %p125 = scmp.ne.s32.totalorder %s108, %s124
      %p126 = scmp.eq.s32.totalorder %s15, 0
      %p127 = por %p125, %p126
      %p128 = scmp.le.s32.totalorder 1, %s9
      %p129 = scmp.lt.s32.totalorder %s9, 3
      %p130 = pnand %p128, %p129
      %p131 = pneg %p130
      // Predicated region
      $region9: #{sgconv3_forward.4} parent=5 // pred_check
        _
      $region10: #{sgconv3_forward.4} parent=5 // pred_check_branch
        %133 = sbr.rel (%p130) target = $region12
      $region11: #{sgconv3_forward.4} parent=5 // pred_region
        %s134 = ssub.s32 %s9, 1
        // Predicated region
        $region13: #{sgconv3_forward.4} parent=11 // pred_check
          %p135 = pneg %p92
        $region14: #{sgconv3_forward.4} parent=11 // pred_check_branch
          %137 = sbr.rel (%p135) target = $region16
        $region15: #{sgconv3_forward.4} parent=11 // pred_region
          %s138 = ssub.s32 %s20, %s21
          %p139 = scmp.gt.s32.totalorder %s138, 0
          %s140 = scalar_select %p139, %s138, 0
          %142 = vsyncadd [#allocation4], 0
          %s143 = smul.addr %s140, 32
          %s144 = smul.addr %s143, 4
          %s145 = scalar_lea.hbm %s1, %s144
          %s146 = sshll.u32 %s145, 4
          %s147 = int_to_ptr.hbm [resolvable:$true] %s146
          %s148 = sshll.u32 [#allocation3], 4
          %s149 = int_to_ptr.vmem [resolvable:$true] %s148
          %154 = dma.hbm_to_vmem [thread:$0]  %s147, 2048, %s149, [#allocation4], 64, 64, 4
        $region16: #{sgconv3_forward.4} parent=11 // pred_fallthru
          _
      $region12: #{sgconv3_forward.4} parent=5 // pred_fallthru
        _
      %p155 = scmp.lt.s32.totalorder %s9, 2
      // Predicated region
      $region17: #{sgconv3_forward.4} parent=5 // pred_check
        %p156 = pneg %p155
      $region18: #{sgconv3_forward.4} parent=5 // pred_check_branch
        %158 = sbr.rel (%p156) target = $region20
      $region19: #{sgconv3_forward.4} parent=5 // pred_region
        // Predicated region
        $region21: #{sgconv3_forward.4} parent=19 // pred_check
          %p159 = pneg %p54
        $region22: #{sgconv3_forward.4} parent=19 // pred_check_branch
          %161 = sbr.rel (%p159) target = $region24
        $region23: #{sgconv3_forward.4} parent=19 // pred_region
          %p162 = scmp.lt.s32.totalorder %s18, %s17
          %s163 = scalar_select %p162, %s18, %s17
          %p164 = scmp.lt.s32.totalorder %s16, 1
          %s165 = scalar_select %p164, %s16, 1
          %p166 = scmp.lt.s32.totalorder %s163, 0
          %s167 = scalar_select %p166, %s163, 0
          %s168 = sadd.s32 %s167, 2
          %s169 = smul.addr %s165, 6
          %s170 = sadd.s32 %s168, %s169
          %s171 = smul.addr %s170, 4
          %s172 = scalar_lea.vmem %s0, %s171
          %p173 = scmp.lt.s32.totalorder %s18, %s17
          %s174 = scalar_select %p173, %s18, %s17
        $region24: #{sgconv3_forward.4} parent=19 // pred_fallthru
          _
      $region20: #{sgconv3_forward.4} parent=5 // pred_fallthru
        _
      %p175 = scmp.le.s32.totalorder 1, %s9
      %p176 = scmp.lt.s32.totalorder %s9, 3
      %p177 = pnand %p175, %p176
      %p178 = pneg %p177
      // Predicated region
      $region25: #{sgconv3_forward.4} parent=5 // pred_check
        _
      $region26: #{sgconv3_forward.4} parent=5 // pred_check_branch
        %180 = sbr.rel (%p177) target = $region28
      $region27: #{sgconv3_forward.4} parent=5 // pred_region
        %s181 = ssub.s32 %s9, 1
        // Predicated region
        $region29: #{sgconv3_forward.4} parent=27 // pred_check
          %p182 = pneg %p92
        $region30: #{sgconv3_forward.4} parent=27 // pred_check_branch
          %184 = sbr.rel (%p182) target = $region32
        $region31: #{sgconv3_forward.4} parent=27 // pred_region
          %186 = dma.done [#allocation4], 2048
        $region32: #{sgconv3_forward.4} parent=27 // pred_fallthru
          _
        %p187 = scmp.lt.s32.totalorder %s21, %s20
        %s188 = scalar_select %p187, %s21, %s20
        %p189 = scmp.lt.s32.totalorder %s19, 1
        %s190 = scalar_select %p189, %s19, 1
        %p191 = scmp.lt.s32.totalorder %s188, 0
        %s192 = scalar_select %p191, %s188, 0
        %s193 = sadd.s32 %s192, 2
        %s194 = smul.addr %s190, 6
        %s195 = sadd.s32 %s193, %s194
        %s196 = smul.addr %s195, 4
        %s197 = scalar_lea.vmem %s0, %s196
        %p198 = pneg %p60
        %p199 = pneg %p57
        %p200 = pneg %p92
        %p201 = pneg %p89
        %p202 = pneg %p120
        %p203 = pneg %p117
        %p204 = scmp.lt.s32.totalorder %s19, 1
        %s205 = scalar_select %p204, %s19, 1
        %p206 = scmp.lt.s32.totalorder %s20, 0
        %s207 = scalar_select %p206, %s20, 0
        %s208 = smul.addr %s205, 2
        %s209 = sadd.s32 %s207, %s208
        %s210 = smul.addr %s209, 4
        %s211 = scalar_lea.vmem %s2, %s210
        %p212 = scmp.lt.s32.totalorder %s21, %s20
        %s213 = scalar_select %p212, %s21, %s20
        %p214 = scmp.lt.s32.totalorder %s19, 1
        %s215 = scalar_select %p214, %s19, 1
        %p216 = scmp.lt.s32.totalorder %s213, 0
        %s217 = scalar_select %p216, %s213, 0
        %s218 = sadd.s32 %s217, 2
        %s219 = smul.addr %s215, 6
        %s220 = sadd.s32 %s218, %s219
        %s221 = smul.addr %s220, 4
        %s222 = scalar_lea.vmem %s0, %s221
        %p223 = scmp.lt.s32.totalorder %s21, %s20
        %s224 = scalar_select %p223, %s21, %s20
        %s225 = ssub.s32 %s20, %s21
        %p226 = scmp.gt.s32.totalorder %s225, 0
        %s227 = scalar_select %p226, %s225, 0
        %p228 = scmp.lt.s32.totalorder %s19, 1
        %s229 = scalar_select %p228, %s19, 1
        %p230 = scmp.lt.s32.totalorder %s20, 0
        %s231 = scalar_select %p230, %s20, 0
        %s232 = smul.addr %s229, 2
        %s233 = sadd.s32 %s231, %s232
        %s234 = smul.addr %s233, 4
        %s235 = scalar_lea.vmem %s2, %s234
        %p237 = scmp.eq.s32.totalorder %s21, 0
        // Predicated region
        $region33: #{sgconv3_forward.4} parent=27 // pred_check
          %p238 = pneg %p237
        $region34: #{sgconv3_forward.4} parent=27 // pred_check_branch
          %240 = sbr.rel (%p238) target = $region36
        $region35: #{sgconv3_forward.4} parent=27 // pred_region
          %vm241 = vcmask 130048
          %242 = vst.msk [vmem:[#allocation2] sm:$0xff] %vm241, 0.0
          %243 = vst.msk [vmem:[#allocation2 + $0x8] sm:$0xff] %vm241, 0.0
        $region36: #{sgconv3_forward.4} parent=27 // pred_fallthru
          _
        %p244 = scmp.le.s32.totalorder %s21, %s20
        // Predicated region
        $region37: #{sgconv3_forward.4} parent=27 // pred_check
          %p245 = pneg %p244
        $region38: #{sgconv3_forward.4} parent=27 // pred_check_branch
          %247 = sbr.rel (%p245) target = $region40
        $region39: #{sgconv3_forward.4} parent=27 // pred_region
          %v248 = vld [vmem:[%s222] sm:$0xf]
          %v249 = vld [vmem:[%s222 + $0x4] sm:$0xf]
          %v252 = vrot.slane %v248, 3
          %v253 = vrot.slane %v249, 3
          %vm254 = vcmask 1040384
          %v257 = vsel %vm254, %v248, %v252
          %vm259 = vcmask 1041409
          %v260 = vsel %vm259, %v248, %v252
          %v262 = vrot.slane %v260, 1
          %vm263 = vcmask 1042434
          %v264 = vsel %vm263, %v248, %v252
          %v266 = vrot.slane %v264, 2
          %vm267 = vcmask 1043459
          %v268 = vsel %vm267, %v248, %v252
          %v270 = vrot.slane %v268, 3
          %v273 = vsel %vm254, %v249, %v253
          %v275 = vsel %vm259, %v249, %v253
          %v277 = vrot.slane %v275, 1
          %v278 = vsel %vm263, %v249, %v253
          %v280 = vrot.slane %v278, 2
          %v281 = vsel %vm267, %v249, %v253
          %v283 = vrot.slane %v281, 3
          %v284 = vunpack.i.l.s16 %v257
          %v285 = vunpack.i.h.s16 %v257
          %v286 = vunpack.i.l.s16 %v262
          %v287 = vunpack.i.h.s16 %v262
          %v288 = vunpack.i.l.s16 %v266
          %v289 = vunpack.i.h.s16 %v266
          %v290 = vunpack.i.l.s16 %v270
          %v291 = vunpack.i.h.s16 %v270
          %v292 = vunpack.i.l.s16 %v273
          %v293 = vunpack.i.h.s16 %v273
          %v294 = vunpack.i.l.s16 %v277
          %v295 = vunpack.i.h.s16 %v277
          %v296 = vunpack.i.l.s16 %v280
          %v297 = vunpack.i.h.s16 %v280
          %v298 = vunpack.i.l.s16 %v283
          %v299 = vunpack.i.h.s16 %v283
          %v300 = vld [vmem:[#allocation3] sm:$0xf]
          %v301 = vld [vmem:[#allocation3 + $0x4] sm:$0xf]
          %v302 = vld [vmem:[#allocation3 + $0x8] sm:$0xf]
          %v303 = vld [vmem:[#allocation3 + $0xc] sm:$0xf]
          %v304 = vld [vmem:[#allocation3 + $0x10] sm:$0xf]
          %v305 = vld [vmem:[#allocation3 + $0x14] sm:$0xf]
          %v306 = vld [vmem:[#allocation3 + $0x18] sm:$0xf]
          %v307 = vld [vmem:[#allocation3 + $0x1c] sm:$0xf]
          %v308 = vld [vmem:[#allocation3 + $0x20] sm:$0xf]
          %v309 = vld [vmem:[#allocation3 + $0x24] sm:$0xf]
          %v310 = vld [vmem:[#allocation3 + $0x28] sm:$0xf]
          %v311 = vld [vmem:[#allocation3 + $0x2c] sm:$0xf]
          %v312 = vld [vmem:[#allocation3 + $0x30] sm:$0xf]
          %v313 = vld [vmem:[#allocation3 + $0x34] sm:$0xf]
          %v314 = vld [vmem:[#allocation3 + $0x38] sm:$0xf]
          %v315 = vld [vmem:[#allocation3 + $0x3c] sm:$0xf]
          %v316 = vld [vmem:[#allocation3 + $0x40] sm:$0xf]
          %v317 = vld [vmem:[#allocation3 + $0x44] sm:$0xf]
          %v318 = vld [vmem:[#allocation3 + $0x48] sm:$0xf]
          %v319 = vld [vmem:[#allocation3 + $0x4c] sm:$0xf]
          %v320 = vld [vmem:[#allocation3 + $0x50] sm:$0xf]
          %v321 = vld [vmem:[#allocation3 + $0x54] sm:$0xf]
          %v322 = vld [vmem:[#allocation3 + $0x58] sm:$0xf]
          %v323 = vld [vmem:[#allocation3 + $0x5c] sm:$0xf]
          %v324 = vld [vmem:[#allocation3 + $0x60] sm:$0xf]
          %v325 = vld [vmem:[#allocation3 + $0x64] sm:$0xf]
          %v326 = vld [vmem:[#allocation3 + $0x68] sm:$0xf]
          %v327 = vld [vmem:[#allocation3 + $0x6c] sm:$0xf]
          %v328 = vld [vmem:[#allocation3 + $0x70] sm:$0xf]
          %v329 = vld [vmem:[#allocation3 + $0x74] sm:$0xf]
          %v330 = vld [vmem:[#allocation3 + $0x78] sm:$0xf]
          %v331 = vld [vmem:[#allocation3 + $0x7c] sm:$0xf]
          %v332 = vpack.i.b16 %v284, %v284
          %v333 = vperm.slane %v332, 0
          %v336 = vunpack.c.l.b16 %v300
          %v337 = vunpack.c.l.b16 %v301
          %v338 = vpack.c.b16 %v337, %v336
          %vm339 = vcmask 130048
          %v341 = vsel %vm339, %v333, 0
          %v344 = vsel %vm339, %v338, 0
          %346 = vmatpush.bf16.xpose.msra.mxu0 0
          %347 = vmatpush.bf16.xpose.msra.mxu0 0
          %348 = vmatpush.bf16.xpose.msra.mxu0 0
          %349 = vmatpush.bf16.xpose.msra.mxu0 0
          %350 = vmatpush.bf16.xpose.msra.mxu0 0
          %351 = vmatpush.bf16.xpose.msra.mxu0 0
          %352 = vmatpush.bf16.xpose.msra.mxu0 0
          %353 = vmatpush.bf16.xpose.msra.mxu0 %v344
          %354 = vmatmul.bf16.gmra.mxu0 %v341
          %v355 = vpop.f32.mrf.mxu0
          %v356 = vadd.f32 0.0, %v355
          %v357 = vpop.f32.mrf.mxu0
          %358 = vdwg.mxu0
          %v359 = vpack.i.b16 %v285, %v285
          %v360 = vperm.slane %v359, 0
          %v363 = vunpack.c.l.b16 %v302
          %v364 = vunpack.c.l.b16 %v303
          %v365 = vpack.c.b16 %v364, %v363
          %v367 = vsel %vm339, %v360, 0
          %v370 = vsel %vm339, %v365, 0
          %372 = vmatpush.bf16.xpose.msra.mxu0 0
          %373 = vmatpush.bf16.xpose.msra.mxu0 0
          %374 = vmatpush.bf16.xpose.msra.mxu0 0
          %375 = vmatpush.bf16.xpose.msra.mxu0 0
          %376 = vmatpush.bf16.xpose.msra.mxu0 0
          %377 = vmatpush.bf16.xpose.msra.mxu0 0
          %378 = vmatpush.bf16.xpose.msra.mxu0 0
          %379 = vmatpush.bf16.xpose.msra.mxu0 %v370
          %380 = vmatmul.bf16.gmra.mxu0 %v367
          %v381 = vpop.f32.mrf.mxu0
          %v382 = vadd.f32 0.0, %v381
          %v383 = vpop.f32.mrf.mxu0
          %384 = vdwg.mxu0
          %v385 = vpack.i.b16 %v286, %v286
          %v386 = vperm.slane %v385, 0
          %v389 = vunpack.c.l.b16 %v304
          %v390 = vunpack.c.l.b16 %v305
          %v391 = vpack.c.b16 %v390, %v389
          %v393 = vsel %vm339, %v386, 0
          %v396 = vsel %vm339, %v391, 0
          %398 = vmatpush.bf16.xpose.msra.mxu0 0
          %399 = vmatpush.bf16.xpose.msra.mxu0 0
          %400 = vmatpush.bf16.xpose.msra.mxu0 0
          %401 = vmatpush.bf16.xpose.msra.mxu0 0
          %402 = vmatpush.bf16.xpose.msra.mxu0 0
          %403 = vmatpush.bf16.xpose.msra.mxu0 0
          %404 = vmatpush.bf16.xpose.msra.mxu0 0
          %405 = vmatpush.bf16.xpose.msra.mxu0 %v396
          %406 = vmatmul.bf16.gmra.mxu0 %v393
          %v407 = vpop.f32.mrf.mxu0
          %v408 = vadd.f32 0.0, %v407
          %v409 = vpop.f32.mrf.mxu0
          %410 = vdwg.mxu0
          %v411 = vpack.i.b16 %v287, %v287
          %v412 = vperm.slane %v411, 0
          %v415 = vunpack.c.l.b16 %v306
          %v416 = vunpack.c.l.b16 %v307
          %v417 = vpack.c.b16 %v416, %v415
          %v419 = vsel %vm339, %v412, 0
          %v422 = vsel %vm339, %v417, 0
          %424 = vmatpush.bf16.xpose.msra.mxu0 0
          %425 = vmatpush.bf16.xpose.msra.mxu0 0
          %426 = vmatpush.bf16.xpose.msra.mxu0 0
          %427 = vmatpush.bf16.xpose.msra.mxu0 0
          %428 = vmatpush.bf16.xpose.msra.mxu0 0
          %429 = vmatpush.bf16.xpose.msra.mxu0 0
          %430 = vmatpush.bf16.xpose.msra.mxu0 0
          %431 = vmatpush.bf16.xpose.msra.mxu0 %v422
          %432 = vmatmul.bf16.gmra.mxu0 %v419
          %v433 = vpop.f32.mrf.mxu0
          %v434 = vadd.f32 0.0, %v433
          %v435 = vpop.f32.mrf.mxu0
          %436 = vdwg.mxu0
          %v437 = vpack.i.b16 %v288, %v288
          %v438 = vperm.slane %v437, 0
          %v441 = vunpack.c.l.b16 %v308
          %v442 = vunpack.c.l.b16 %v309
          %v443 = vpack.c.b16 %v442, %v441
          %v445 = vsel %vm339, %v438, 0
          %v448 = vsel %vm339, %v443, 0
          %450 = vmatpush.bf16.xpose.msra.mxu0 0
          %451 = vmatpush.bf16.xpose.msra.mxu0 0
          %452 = vmatpush.bf16.xpose.msra.mxu0 0
          %453 = vmatpush.bf16.xpose.msra.mxu0 0
          %454 = vmatpush.bf16.xpose.msra.mxu0 0
          %455 = vmatpush.bf16.xpose.msra.mxu0 0
          %456 = vmatpush.bf16.xpose.msra.mxu0 0
          %457 = vmatpush.bf16.xpose.msra.mxu0 %v448
          %458 = vmatmul.bf16.gmra.mxu0 %v445
          %v459 = vpop.f32.mrf.mxu0
          %v460 = vadd.f32 0.0, %v459
          %v461 = vpop.f32.mrf.mxu0
          %462 = vdwg.mxu0
          %v463 = vpack.i.b16 %v289, %v289
          %v464 = vperm.slane %v463, 0
          %v467 = vunpack.c.l.b16 %v310
          %v468 = vunpack.c.l.b16 %v311
          %v469 = vpack.c.b16 %v468, %v467
          %v471 = vsel %vm339, %v464, 0
          %v474 = vsel %vm339, %v469, 0
          %476 = vmatpush.bf16.xpose.msra.mxu0 0
          %477 = vmatpush.bf16.xpose.msra.mxu0 0
          %478 = vmatpush.bf16.xpose.msra.mxu0 0
          %479 = vmatpush.bf16.xpose.msra.mxu0 0
          %480 = vmatpush.bf16.xpose.msra.mxu0 0
          %481 = vmatpush.bf16.xpose.msra.mxu0 0
          %482 = vmatpush.bf16.xpose.msra.mxu0 0
          %483 = vmatpush.bf16.xpose.msra.mxu0 %v474
          %484 = vmatmul.bf16.gmra.mxu0 %v471
          %v485 = vpop.f32.mrf.mxu0
          %v486 = vadd.f32 0.0, %v485
          %v487 = vpop.f32.mrf.mxu0
          %488 = vdwg.mxu0
          %v489 = vpack.i.b16 %v290, %v290
          %v490 = vperm.slane %v489, 0
          %v493 = vunpack.c.l.b16 %v312
          %v494 = vunpack.c.l.b16 %v313
          %v495 = vpack.c.b16 %v494, %v493
          %v497 = vsel %vm339, %v490, 0
          %v500 = vsel %vm339, %v495, 0
          %502 = vmatpush.bf16.xpose.msra.mxu0 0
          %503 = vmatpush.bf16.xpose.msra.mxu0 0
          %504 = vmatpush.bf16.xpose.msra.mxu0 0
          %505 = vmatpush.bf16.xpose.msra.mxu0 0
          %506 = vmatpush.bf16.xpose.msra.mxu0 0
          %507 = vmatpush.bf16.xpose.msra.mxu0 0
          %508 = vmatpush.bf16.xpose.msra.mxu0 0
          %509 = vmatpush.bf16.xpose.msra.mxu0 %v500
          %510 = vmatmul.bf16.gmra.mxu0 %v497
          %v511 = vpop.f32.mrf.mxu0
          %v512 = vadd.f32 0.0, %v511
          %v513 = vpop.f32.mrf.mxu0
          %514 = vdwg.mxu0
          %v515 = vpack.i.b16 %v291, %v291
          %v516 = vperm.slane %v515, 0
          %v519 = vunpack.c.l.b16 %v314
          %v520 = vunpack.c.l.b16 %v315
          %v521 = vpack.c.b16 %v520, %v519
          %v523 = vsel %vm339, %v516, 0
          %v526 = vsel %vm339, %v521, 0
          %528 = vmatpush.bf16.xpose.msra.mxu0 0
          %529 = vmatpush.bf16.xpose.msra.mxu0 0
          %530 = vmatpush.bf16.xpose.msra.mxu0 0
          %531 = vmatpush.bf16.xpose.msra.mxu0 0
          %532 = vmatpush.bf16.xpose.msra.mxu0 0
          %533 = vmatpush.bf16.xpose.msra.mxu0 0
          %534 = vmatpush.bf16.xpose.msra.mxu0 0
          %535 = vmatpush.bf16.xpose.msra.mxu0 %v526
          %536 = vmatmul.bf16.gmra.mxu0 %v523
          %v537 = vpop.f32.mrf.mxu0
          %v538 = vadd.f32 0.0, %v537
          %v539 = vpop.f32.mrf.mxu0
          %540 = vdwg.mxu0
          %v541 = vpack.i.b16 %v292, %v292
          %v542 = vperm.slane %v541, 0
          %v545 = vunpack.c.l.b16 %v316
          %v546 = vunpack.c.l.b16 %v317
          %v547 = vpack.c.b16 %v546, %v545
          %v549 = vsel %vm339, %v542, 0
          %v552 = vsel %vm339, %v547, 0
          %554 = vmatpush.bf16.xpose.msra.mxu0 0
          %555 = vmatpush.bf16.xpose.msra.mxu0 0
          %556 = vmatpush.bf16.xpose.msra.mxu0 0
          %557 = vmatpush.bf16.xpose.msra.mxu0 0
          %558 = vmatpush.bf16.xpose.msra.mxu0 0
          %559 = vmatpush.bf16.xpose.msra.mxu0 0
          %560 = vmatpush.bf16.xpose.msra.mxu0 0
          %561 = vmatpush.bf16.xpose.msra.mxu0 %v552
          %562 = vmatmul.bf16.gmra.mxu0 %v549
          %v563 = vpop.f32.mrf.mxu0
          %v564 = vadd.f32 0.0, %v563
          %v565 = vpop.f32.mrf.mxu0
          %566 = vdwg.mxu0
          %v567 = vpack.i.b16 %v293, %v293
          %v568 = vperm.slane %v567, 0
          %v571 = vunpack.c.l.b16 %v318
          %v572 = vunpack.c.l.b16 %v319
          %v573 = vpack.c.b16 %v572, %v571
          %v575 = vsel %vm339, %v568, 0
          %v578 = vsel %vm339, %v573, 0
          %580 = vmatpush.bf16.xpose.msra.mxu0 0
          %581 = vmatpush.bf16.xpose.msra.mxu0 0
          %582 = vmatpush.bf16.xpose.msra.mxu0 0
          %583 = vmatpush.bf16.xpose.msra.mxu0 0
          %584 = vmatpush.bf16.xpose.msra.mxu0 0
          %585 = vmatpush.bf16.xpose.msra.mxu0 0
          %586 = vmatpush.bf16.xpose.msra.mxu0 0
          %587 = vmatpush.bf16.xpose.msra.mxu0 %v578
          %588 = vmatmul.bf16.gmra.mxu0 %v575
          %v589 = vpop.f32.mrf.mxu0
          %v590 = vadd.f32 0.0, %v589
          %v591 = vpop.f32.mrf.mxu0
          %592 = vdwg.mxu0
          %v593 = vpack.i.b16 %v294, %v294
          %v594 = vperm.slane %v593, 0
          %v597 = vunpack.c.l.b16 %v320
          %v598 = vunpack.c.l.b16 %v321
          %v599 = vpack.c.b16 %v598, %v597
          %v601 = vsel %vm339, %v594, 0
          %v604 = vsel %vm339, %v599, 0
          %606 = vmatpush.bf16.xpose.msra.mxu0 0
          %607 = vmatpush.bf16.xpose.msra.mxu0 0
          %608 = vmatpush.bf16.xpose.msra.mxu0 0
          %609 = vmatpush.bf16.xpose.msra.mxu0 0
          %610 = vmatpush.bf16.xpose.msra.mxu0 0
          %611 = vmatpush.bf16.xpose.msra.mxu0 0
          %612 = vmatpush.bf16.xpose.msra.mxu0 0
          %613 = vmatpush.bf16.xpose.msra.mxu0 %v604
          %614 = vmatmul.bf16.gmra.mxu0 %v601
          %v615 = vpop.f32.mrf.mxu0
          %v616 = vadd.f32 0.0, %v615
          %v617 = vpop.f32.mrf.mxu0
          %618 = vdwg.mxu0
          %v619 = vpack.i.b16 %v295, %v295
          %v620 = vperm.slane %v619, 0
          %v623 = vunpack.c.l.b16 %v322
          %v624 = vunpack.c.l.b16 %v323
          %v625 = vpack.c.b16 %v624, %v623
          %v627 = vsel %vm339, %v620, 0
          %v630 = vsel %vm339, %v625, 0
          %632 = vmatpush.bf16.xpose.msra.mxu0 0
          %633 = vmatpush.bf16.xpose.msra.mxu0 0
          %634 = vmatpush.bf16.xpose.msra.mxu0 0
          %635 = vmatpush.bf16.xpose.msra.mxu0 0
          %636 = vmatpush.bf16.xpose.msra.mxu0 0
          %637 = vmatpush.bf16.xpose.msra.mxu0 0
          %638 = vmatpush.bf16.xpose.msra.mxu0 0
          %639 = vmatpush.bf16.xpose.msra.mxu0 %v630
          %640 = vmatmul.bf16.gmra.mxu0 %v627
          %v641 = vpop.f32.mrf.mxu0
          %v642 = vadd.f32 0.0, %v641
          %v643 = vpop.f32.mrf.mxu0
          %644 = vdwg.mxu0
          %v645 = vpack.i.b16 %v296, %v296
          %v646 = vperm.slane %v645, 0
          %v649 = vunpack.c.l.b16 %v324
          %v650 = vunpack.c.l.b16 %v325
          %v651 = vpack.c.b16 %v650, %v649
          %v653 = vsel %vm339, %v646, 0
          %v656 = vsel %vm339, %v651, 0
          %658 = vmatpush.bf16.xpose.msra.mxu0 0
          %659 = vmatpush.bf16.xpose.msra.mxu0 0
          %660 = vmatpush.bf16.xpose.msra.mxu0 0
          %661 = vmatpush.bf16.xpose.msra.mxu0 0
          %662 = vmatpush.bf16.xpose.msra.mxu0 0
          %663 = vmatpush.bf16.xpose.msra.mxu0 0
          %664 = vmatpush.bf16.xpose.msra.mxu0 0
          %665 = vmatpush.bf16.xpose.msra.mxu0 %v656
          %666 = vmatmul.bf16.gmra.mxu0 %v653
          %v667 = vpop.f32.mrf.mxu0
          %v668 = vadd.f32 0.0, %v667
          %v669 = vpop.f32.mrf.mxu0
          %670 = vdwg.mxu0
          %v671 = vpack.i.b16 %v297, %v297
          %v672 = vperm.slane %v671, 0
          %v675 = vunpack.c.l.b16 %v326
          %v676 = vunpack.c.l.b16 %v327
          %v677 = vpack.c.b16 %v676, %v675
          %v679 = vsel %vm339, %v672, 0
          %v682 = vsel %vm339, %v677, 0
          %684 = vmatpush.bf16.xpose.msra.mxu0 0
          %685 = vmatpush.bf16.xpose.msra.mxu0 0
          %686 = vmatpush.bf16.xpose.msra.mxu0 0
          %687 = vmatpush.bf16.xpose.msra.mxu0 0
          %688 = vmatpush.bf16.xpose.msra.mxu0 0
          %689 = vmatpush.bf16.xpose.msra.mxu0 0
          %690 = vmatpush.bf16.xpose.msra.mxu0 0
          %691 = vmatpush.bf16.xpose.msra.mxu0 %v682
          %692 = vmatmul.bf16.gmra.mxu0 %v679
          %v693 = vpop.f32.mrf.mxu0
          %v694 = vadd.f32 0.0, %v693
          %v695 = vpop.f32.mrf.mxu0
          %696 = vdwg.mxu0
          %v697 = vpack.i.b16 %v298, %v298
          %v698 = vperm.slane %v697, 0
          %v701 = vunpack.c.l.b16 %v328
          %v702 = vunpack.c.l.b16 %v329
          %v703 = vpack.c.b16 %v702, %v701
          %v705 = vsel %vm339, %v698, 0
          %v708 = vsel %vm339, %v703, 0
          %710 = vmatpush.bf16.xpose.msra.mxu0 0
          %711 = vmatpush.bf16.xpose.msra.mxu0 0
          %712 = vmatpush.bf16.xpose.msra.mxu0 0
          %713 = vmatpush.bf16.xpose.msra.mxu0 0
          %714 = vmatpush.bf16.xpose.msra.mxu0 0
          %715 = vmatpush.bf16.xpose.msra.mxu0 0
          %716 = vmatpush.bf16.xpose.msra.mxu0 0
          %717 = vmatpush.bf16.xpose.msra.mxu0 %v708
          %718 = vmatmul.bf16.gmra.mxu0 %v705
          %v719 = vpop.f32.mrf.mxu0
          %v720 = vadd.f32 0.0, %v719
          %v721 = vpop.f32.mrf.mxu0
          %722 = vdwg.mxu0
          %v723 = vpack.i.b16 %v299, %v299
          %v724 = vperm.slane %v723, 0
          %v727 = vunpack.c.l.b16 %v330
          %v728 = vunpack.c.l.b16 %v331
          %v729 = vpack.c.b16 %v728, %v727
          %v731 = vsel %vm339, %v724, 0
          %v734 = vsel %vm339, %v729, 0
          %736 = vmatpush.bf16.xpose.msra.mxu0 0
          %737 = vmatpush.bf16.xpose.msra.mxu0 0
          %738 = vmatpush.bf16.xpose.msra.mxu0 0
          %739 = vmatpush.bf16.xpose.msra.mxu0 0
          %740 = vmatpush.bf16.xpose.msra.mxu0 0
          %741 = vmatpush.bf16.xpose.msra.mxu0 0
          %742 = vmatpush.bf16.xpose.msra.mxu0 0
          %743 = vmatpush.bf16.xpose.msra.mxu0 %v734
          %744 = vmatmul.bf16.gmra.mxu0 %v731
          %v745 = vpop.f32.mrf.mxu0
          %v746 = vadd.f32 0.0, %v745
          %v747 = vpop.f32.mrf.mxu0
          %748 = vdwg.mxu0
          %v749 = vld [vmem:[#allocation2] sm:$0xff]
          %v750 = vld [vmem:[#allocation2 + $0x8] sm:$0xff]
          %v767 = vrot.slane %v382, 7
          %v768 = vsel %vm259, %v767, %v356
          %v769 = vrot.slane %v408, 6
          %v770 = vsel %vm263, %v769, %v768
          %v771 = vrot.slane %v434, 5
          %v772 = vsel %vm267, %v771, %v770
          %v773 = vrot.slane %v460, 4
          %vm774 = vcmask 1044484
          %v775 = vsel %vm774, %v773, %v772
          %v776 = vrot.slane %v486, 3
          %vm777 = vcmask 1045509
          %v778 = vsel %vm777, %v776, %v775
          %v779 = vrot.slane %v512, 2
          %vm780 = vcmask 1046534
          %v781 = vsel %vm780, %v779, %v778
          %v782 = vrot.slane %v538, 1
          %vm783 = vcmask 1047559
          %v784 = vsel %vm783, %v782, %v781
          %v785 = vrot.slane %v590, 7
          %v786 = vsel %vm259, %v785, %v564
          %v787 = vrot.slane %v616, 6
          %v788 = vsel %vm263, %v787, %v786
          %v789 = vrot.slane %v642, 5
          %v790 = vsel %vm267, %v789, %v788
          %v791 = vrot.slane %v668, 4
          %v792 = vsel %vm774, %v791, %v790
          %v793 = vrot.slane %v694, 3
          %v794 = vsel %vm777, %v793, %v792
          %v795 = vrot.slane %v720, 2
          %v796 = vsel %vm780, %v795, %v794
          %v797 = vrot.slane %v746, 1
          %v798 = vsel %vm783, %v797, %v796
          %v801 = vadd.f32 %v749, %v784
          %v802 = vadd.f32 %v750, %v798
          %803 = vst.msk [vmem:[#allocation2] sm:$0xff] %vm339, %v801
          %804 = vst.msk [vmem:[#allocation2 + $0x8] sm:$0xff] %vm339, %v802
        $region40: #{sgconv3_forward.4} parent=27 // pred_fallthru
          _
        // Predicated region
        $region41: #{sgconv3_forward.4} parent=27 // pred_check
          %p805 = pneg %p237
        $region42: #{sgconv3_forward.4} parent=27 // pred_check_branch
          %807 = sbr.rel (%p805) target = $region44
        $region43: #{sgconv3_forward.4} parent=27 // pred_region
          %v808 = vld [vmem:[#allocation2] sm:$0xff]
          %v809 = vld [vmem:[#allocation2 + $0x8] sm:$0xff]
          %v810 = vpack.c.bf16 %v808, %v808
          %v811 = vpack.c.bf16 %v809, %v809
          %vm812 = vcmask 125952
          %813 = vst.msk [vmem:[%s235] sm:$0xf] %vm812, %v810
          %814 = vst.msk [vmem:[%s235 + $0x4] sm:$0xf] %vm812, %v811
        $region44: #{sgconv3_forward.4} parent=27 // pred_fallthru
          _
        %p815 = scmp.lt.s32.totalorder %s19, 1
        %s816 = scalar_select %p815, %s19, 1
        %p817 = scmp.lt.s32.totalorder %s20, 0
        %s818 = scalar_select %p817, %s20, 0
        %s819 = smul.addr %s816, 2
        %s820 = sadd.s32 %s818, %s819
        %s821 = smul.addr %s820, 4
        %s822 = scalar_lea.vmem %s2, %s821
        // Predicated region
        $region45: #{sgconv3_forward.4} parent=27 // pred_check
          %p823 = pneg %p117
        $region46: #{sgconv3_forward.4} parent=27 // pred_check_branch
          %825 = sbr.rel (%p823) target = $region48
        $region47: #{sgconv3_forward.4} parent=27 // pred_region
          _
        $region48: #{sgconv3_forward.4} parent=27 // pred_fallthru
          _
      $region28: #{sgconv3_forward.4} parent=5 // pred_fallthru
        _
      %p826 = scmp.le.s32.totalorder 2, %s9
      // Predicated region
      $region49: #{sgconv3_forward.4} parent=5 // pred_check
        %p827 = pneg %p826
      $region50: #{sgconv3_forward.4} parent=5 // pred_check_branch
        %829 = sbr.rel (%p827) target = $region52
      $region51: #{sgconv3_forward.4} parent=5 // pred_region
        %s830 = ssub.s32 %s9, 2
        // Predicated region
        $region53: #{sgconv3_forward.4} parent=51 // pred_check
          %p831 = pneg %p123
        $region54: #{sgconv3_forward.4} parent=51 // pred_check_branch
          %833 = sbr.rel (%p831) target = $region56
        $region55: #{sgconv3_forward.4} parent=51 // pred_region
          %p834 = scmp.lt.s32.totalorder %s22, 1
          %s835 = scalar_select %p834, %s22, 1
          %p836 = scmp.lt.s32.totalorder %s23, 0
          %s837 = scalar_select %p836, %s23, 0
          %s838 = smul.addr %s835, 2
          %s839 = sadd.s32 %s837, %s838
          %s840 = smul.addr %s839, 4
          %s841 = scalar_lea.vmem %s2, %s840
        $region56: #{sgconv3_forward.4} parent=51 // pred_fallthru
          _
      $region52: #{sgconv3_forward.4} parent=5 // pred_fallthru
        _
    $region6: #{sgconv3_forward.4} parent=1 // loop_footer
      %s13 = sadd.s32 1, %s9
    $region7: #{sgconv3_forward.4} parent=1 // loop_footer_branch
      %8 = sbr.rel target = $region3
    $region8: #{sgconv3_forward.4} parent=1 // loop_exit
      _
    %842 = vsyncpa [#allocation4], 1
    %s843 = scalar_lea.sflag [#allocation4], 1
    %844 = vsyncpa %s843, 1

// kernel: sgconv3_forward.5
$region0: #{sgconv3_forward.5}
  #allocation0 [shape = 'u32[]', space=smem, size = 0x4, offset = 0x4, fixed_abs, tag = 'smem constant byte address 0x4 - core index']
  #allocation1 [shape = 'u32[72,128]{1,0:T(1,128)}', space=vmem, size = 0x9000, scoped, tag = 'internal scratch']
  #allocation2 [shape = 'f32[8,4,16]{2,1,0:T(4,128)}', space=vmem, size = 0x4000, scoped, tag = 'scratch operand']
  %s0 = inlined_call_operand.vmem [shape: bf16[2,16,16], index: 0, kind: input, shape index: {}]
  %s1 = inlined_call_operand.vmem [shape: bf16[2,48,16], index: 1, kind: input, shape index: {}, may-alias: {1,2}]
  %s2 = inlined_call_operand.vmem [shape: bf16[2,48,16], index: 2, kind: input, shape index: {}, may-alias: {1,2}]
  %s3 = inlined_call_operand.vmem [shape: bf16[1,8,16,16], index: 3, kind: input, shape index: {}]
  %s4 = inlined_call_operand.vmem [shape: bf16[16,16], index: 4, kind: input, shape index: {}]
  %s5 = inlined_call_operand.vmem [shape: f32[1,16], index: 5, kind: input, shape index: {}]
  %s6 = inlined_call_operand.hbm [shape: f32[2,16,16], index: 6, kind: output, shape index: {}]
  %s7 = sld [smem:[#allocation0]]
  $region69: #{sgconv3_forward.5} parent=0
    _
  %s9 = ssub.s32 1, %s7
  %s10 = scalar_select 0, %s9, %s7
  $region1: #{sgconv3_forward.5} parent=0
    #allocation3 [shape = 'u8[16384]{0}', space=vmem, size = 0x4000, scoped, tag = 'output window, operand 0']
    #allocation4 [shape = 's32[2]{0}', space=sflag, size = 0x8, scoped, tag = 'scoped memory for sgconv3_forward.5']
    %11 = vsyncpa [#allocation4], 0
    %s12 = scalar_lea.sflag [#allocation4], 1
    %13 = vsyncpa %s12, 0
    loop: start=0, step=1, limit=4
    $region2: #{sgconv3_forward.5} parent=1 // loop_pre_header
      _
    $region3: #{sgconv3_forward.5} parent=1 // loop_header
      %s15 = sphi 0, %s19
      %p16 = scmp.ge.s32.totalorder %s15, 4
      %s22 = sphi 0, %s41
      %s23 = sphi 0, %s37
      %s24 = sphi 0, %s33
      %s25 = sphi 0, %s22
      %s26 = sphi 0, %s23
      %s27 = sphi 0, %s24
      %s28 = sphi 0, %s25
      %s29 = sphi 0, %s26
      %s30 = sphi 0, %s27
      %s50 = sphi 0, %s52
      %s53 = sphi 0, %s50
      %s54 = sphi 0, %s53
      %s70 = sphi 0, %s54
      %s82 = sphi 0, %s84
      %s85 = sphi 0, %s82
      %s86 = sphi 0, %s85
      %s102 = sphi 0, %s86
      %s110 = sphi 0, %s112
      %s113 = sphi 0, %s110
      %s114 = sphi 0, %s113
      %s130 = sphi 0, %s114
      %s142 = sphi 0, %s144
      %s145 = sphi 0, %s142
      %s146 = sphi 0, %s145
      %s162 = sphi 0, %s146
      %s166 = sphi 0, %s166
      %s168 = sphi 0, %s166
      %s169 = sphi 0, %s168
      %s183 = sphi 0, %s169
      %s187 = sphi 0, %s187
      %s189 = sphi 0, %s187
      %s190 = sphi 0, %s189
      %s204 = sphi 0, %s190
      %s212 = sphi 0, %s214
      %s215 = sphi 0, %s212
      %s216 = sphi 0, %s215
      %s232 = sphi 0, %s216
    $region4: #{sgconv3_forward.5} parent=1 // loop_header_branch
      %18 = sbr.rel (%p16) target = $region8
    $region5: #{sgconv3_forward.5} parent=1 // loop_body
      %s20 = ssub.s32 %s15, 1
      %s21 = ssub.s32 %s15, 2
      %s31 = sadd.s32 1, %s24
      %p32 = scmp.ge.s32.totalorder %s31, 1
      %s33 = scalar_select %p32, 0, %s31
      %s34 = sadd.s32 1, %s23
      %s35 = scalar_select %p32, %s34, %s23
      %p36 = scmp.ge.s32.totalorder %s35, 1
      %s37 = scalar_select %p36, 0, %s35
      %s38 = sadd.s32 1, %s22
      %s39 = scalar_select %p36, %s38, %s22
      %p40 = scmp.ge.s32.totalorder %s39, 2
      %s41 = scalar_select %p40, 0, %s39
      %p42 = scmp.lt.s32.totalorder %s24, %s23
      %s43 = scalar_select %p42, %s24, %s23
      %p44 = scmp.lt.s32.totalorder %s33, %s37
      %s45 = scalar_select %p44, %s33, %s37
      %s46 = ssub.s32 %s22, %s41
      %s47 = ssub.s32 %s43, %s45
      %s48 = sor.u32 %s46, %s47
      %p49 = scmp.eq.s32.totalorder %s48, 0
      %s51 = sadd.s32 %s50, 1
      %s52 = scalar_select %p49, %s50, %s51
      %p55 = pneg %p49
      %p56 = scmp.eq.s32.totalorder %s15, 1
      %p57 = por %p55, %p56
      %p58 = scmp.ne.s32.totalorder %s50, %s53
      %p59 = scmp.eq.s32.totalorder %s15, 0
      %p60 = por %p58, %p59
      %p61 = scmp.ne.s32.totalorder %s50, %s53
      %p62 = scmp.eq.s32.totalorder %s20, 1
      %p63 = por %p61, %p62
      %p64 = scmp.ne.s32.totalorder %s53, %s54
      %p65 = scmp.eq.s32.totalorder %s20, 0
      %p66 = por %p64, %p65
      %p67 = scmp.ne.s32.totalorder %s53, %s54
      %p68 = scmp.eq.s32.totalorder %s21, 1
      %p69 = por %p67, %p68
      %p71 = scmp.ne.s32.totalorder %s54, %s70
      %p72 = scmp.eq.s32.totalorder %s21, 0
      %p73 = por %p71, %p72
      %p74 = scmp.lt.s32.totalorder %s24, %s23
      %s75 = scalar_select %p74, %s24, %s23
      %p76 = scmp.lt.s32.totalorder %s33, %s37
      %s77 = scalar_select %p76, %s33, %s37
      %s78 = ssub.s32 %s22, %s41
      %s79 = ssub.s32 %s75, %s77
      %s80 = sor.u32 %s78, %s79
      %p81 = scmp.eq.s32.totalorder %s80, 0
      %s83 = sadd.s32 %s82, 1
      %s84 = scalar_select %p81, %s82, %s83
      %p87 = pneg %p81
      %p88 = scmp.eq.s32.totalorder %s15, 1
      %p89 = por %p87, %p88
      %p90 = scmp.ne.s32.totalorder %s82, %s85
      %p91 = scmp.eq.s32.totalorder %s15, 0
      %p92 = por %p90, %p91
      %p93 = scmp.ne.s32.totalorder %s82, %s85
      %p94 = scmp.eq.s32.totalorder %s20, 1
      %p95 = por %p93, %p94
      %p96 = scmp.ne.s32.totalorder %s85, %s86
      %p97 = scmp.eq.s32.totalorder %s20, 0
      %p98 = por %p96, %p97
      %p99 = scmp.ne.s32.totalorder %s85, %s86
      %p100 = scmp.eq.s32.totalorder %s21, 1
      %p101 = por %p99, %p100
      %p103 = scmp.ne.s32.totalorder %s86, %s102
      %p104 = scmp.eq.s32.totalorder %s21, 0
      %p105 = por %p103, %p104
      %s106 = ssub.s32 %s22, %s41
      %s107 = ssub.s32 %s23, %s37
      %s108 = sor.u32 %s106, %s107
      %p109 = scmp.eq.s32.totalorder %s108, 0
      %s111 = sadd.s32 %s110, 1
      %s112 = scalar_select %p109, %s110, %s111
      %p115 = pneg %p109
      %p116 = scmp.eq.s32.totalorder %s15, 1
      %p117 = por %p115, %p116
      %p118 = scmp.ne.s32.totalorder %s110, %s113
      %p119 = scmp.eq.s32.totalorder %s15, 0
      %p120 = por %p118, %p119
      %p121 = scmp.ne.s32.totalorder %s110, %s113
      %p122 = scmp.eq.s32.totalorder %s20, 1
      %p123 = por %p121, %p122
      %p124 = scmp.ne.s32.totalorder %s113, %s114
      %p125 = scmp.eq.s32.totalorder %s20, 0
      %p126 = por %p124, %p125
      %p127 = scmp.ne.s32.totalorder %s113, %s114
      %p128 = scmp.eq.s32.totalorder %s21, 1
      %p129 = por %p127, %p128
      %p131 = scmp.ne.s32.totalorder %s114, %s130
      %p132 = scmp.eq.s32.totalorder %s21, 0
      %p133 = por %p131, %p132
      %s134 = ssub.s32 %s23, %s24
      %p135 = scmp.gt.s32.totalorder %s134, 0
      %s136 = scalar_select %p135, %s134, 0
      %s137 = ssub.s32 %s37, %s33
      %p138 = scmp.gt.s32.totalorder %s137, 0
      %s139 = scalar_select %p138, %s137, 0
      %s140 = ssub.s32 %s136, %s139
      %p141 = scmp.eq.s32.totalorder %s140, 0
      %s143 = sadd.s32 %s142, 1
      %s144 = scalar_select %p141, %s142, %s143
      %p147 = pneg %p141
      %p148 = scmp.eq.s32.totalorder %s15, 1
      %p149 = por %p147, %p148
      %p150 = scmp.ne.s32.totalorder %s142, %s145
      %p151 = scmp.eq.s32.totalorder %s15, 0
      %p152 = por %p150, %p151
      %p153 = scmp.ne.s32.totalorder %s142, %s145
      %p154 = scmp.eq.s32.totalorder %s20, 1
      %p155 = por %p153, %p154
      %p156 = scmp.ne.s32.totalorder %s145, %s146
      %p157 = scmp.eq.s32.totalorder %s20, 0
      %p158 = por %p156, %p157
      %p159 = scmp.ne.s32.totalorder %s145, %s146
      %p160 = scmp.eq.s32.totalorder %s21, 1
      %p161 = por %p159, %p160
      %p163 = scmp.ne.s32.totalorder %s146, %s162
      %p164 = scmp.eq.s32.totalorder %s21, 0
      %p165 = por %p163, %p164
      %s167 = sadd.s32 %s166, 1
      %p170 = scmp.eq.s32.totalorder %s15, 1
      %p171 = scmp.ne.s32.totalorder %s166, %s168
      %p172 = scmp.eq.s32.totalorder %s15, 0
      %p173 = por %p171, %p172
      %p174 = scmp.ne.s32.totalorder %s166, %s168
      %p175 = scmp.eq.s32.totalorder %s20, 1
      %p176 = por %p174, %p175
      %p177 = scmp.ne.s32.totalorder %s168, %s169
      %p178 = scmp.eq.s32.totalorder %s20, 0
      %p179 = por %p177, %p178
      %p180 = scmp.ne.s32.totalorder %s168, %s169
      %p181 = scmp.eq.s32.totalorder %s21, 1
      %p182 = por %p180, %p181
      %p184 = scmp.ne.s32.totalorder %s169, %s183
      %p185 = scmp.eq.s32.totalorder %s21, 0
      %p186 = por %p184, %p185
      %s188 = sadd.s32 %s187, 1
      %p191 = scmp.eq.s32.totalorder %s15, 1
      %p192 = scmp.ne.s32.totalorder %s187, %s189
      %p193 = scmp.eq.s32.totalorder %s15, 0
      %p194 = por %p192, %p193
      %p195 = scmp.ne.s32.totalorder %s187, %s189
      %p196 = scmp.eq.s32.totalorder %s20, 1
      %p197 = por %p195, %p196
      %p198 = scmp.ne.s32.totalorder %s189, %s190
      %p199 = scmp.eq.s32.totalorder %s20, 0
      %p200 = por %p198, %p199
      %p201 = scmp.ne.s32.totalorder %s189, %s190
      %p202 = scmp.eq.s32.totalorder %s21, 1
      %p203 = por %p201, %p202
      %p205 = scmp.ne.s32.totalorder %s190, %s204
      %p206 = scmp.eq.s32.totalorder %s21, 0
      %p207 = por %p205, %p206
      %s208 = ssub.s32 %s22, %s41
      %s209 = ssub.s32 %s23, %s37
      %s210 = sor.u32 %s208, %s209
      %p211 = scmp.eq.s32.totalorder %s210, 0
      %s213 = sadd.s32 %s212, 1
      %s214 = scalar_select %p211, %s212, %s213
      %p217 = pneg %p211
      %p218 = scmp.eq.s32.totalorder %s15, 1
      %p219 = por %p217, %p218
      %p220 = scmp.ne.s32.totalorder %s212, %s215
      %p221 = scmp.eq.s32.totalorder %s15, 0
      %p222 = por %p220, %p221
      %p223 = scmp.ne.s32.totalorder %s212, %s215
      %p224 = scmp.eq.s32.totalorder %s20, 1
      %p225 = por %p223, %p224
      %p226 = scmp.ne.s32.totalorder %s215, %s216
      %p227 = scmp.eq.s32.totalorder %s20, 0
      %p228 = por %p226, %p227
      %p229 = scmp.ne.s32.totalorder %s215, %s216
      %p230 = scmp.eq.s32.totalorder %s21, 1
      %p231 = por %p229, %p230
      %p233 = scmp.ne.s32.totalorder %s216, %s232
      %p234 = scmp.eq.s32.totalorder %s21, 0
      %p235 = por %p233, %p234
      %p236 = scmp.le.s32.totalorder 1, %s15
      %p237 = scmp.lt.s32.totalorder %s15, 3
      %p238 = pnand %p236, %p237
      %p239 = pneg %p238
      // Predicated region
      $region9: #{sgconv3_forward.5} parent=5 // pred_check
        _
      $region10: #{sgconv3_forward.5} parent=5 // pred_check_branch
        %241 = sbr.rel (%p238) target = $region12
      $region11: #{sgconv3_forward.5} parent=5 // pred_region
        %s242 = ssub.s32 %s15, 1
        // Predicated region
        $region13: #{sgconv3_forward.5} parent=11 // pred_check
          %p243 = pneg %p158
        $region14: #{sgconv3_forward.5} parent=11 // pred_check_branch
          %245 = sbr.rel (%p243) target = $region16
        $region15: #{sgconv3_forward.5} parent=11 // pred_region
          %s246 = ssub.s32 %s26, %s27
          %p247 = scmp.gt.s32.totalorder %s246, 0
          %s248 = scalar_select %p247, %s246, 0
          %p249 = scmp.lt.s32.totalorder %s248, 0
          %s250 = scalar_select %p249, %s248, 0
          %s251 = smul.addr %s250, 16
          %s252 = smul.addr %s251, 4
          %s253 = scalar_lea.vmem %s3, %s252
          %s254 = ssub.s32 %s26, %s27
          %p255 = scmp.gt.s32.totalorder %s254, 0
          %s256 = scalar_select %p255, %s254, 0
        $region16: #{sgconv3_forward.5} parent=11 // pred_fallthru
          _
        // Predicated region
        $region17: #{sgconv3_forward.5} parent=11 // pred_check
          %p257 = pneg %p179
        $region18: #{sgconv3_forward.5} parent=11 // pred_check_branch
          %259 = sbr.rel (%p257) target = $region20
        $region19: #{sgconv3_forward.5} parent=11 // pred_region
          _
        $region20: #{sgconv3_forward.5} parent=11 // pred_fallthru
          _
        // Predicated region
        $region21: #{sgconv3_forward.5} parent=11 // pred_check
          %p260 = pneg %p200
        $region22: #{sgconv3_forward.5} parent=11 // pred_check_branch
          %262 = sbr.rel (%p260) target = $region24
        $region23: #{sgconv3_forward.5} parent=11 // pred_region
          _
        $region24: #{sgconv3_forward.5} parent=11 // pred_fallthru
          _
      $region12: #{sgconv3_forward.5} parent=5 // pred_fallthru
        _
      %p263 = scmp.lt.s32.totalorder %s15, 2
      // Predicated region
      $region25: #{sgconv3_forward.5} parent=5 // pred_check
        %p264 = pneg %p263
      $region26: #{sgconv3_forward.5} parent=5 // pred_check_branch
        %266 = sbr.rel (%p264) target = $region28
      $region27: #{sgconv3_forward.5} parent=5 // pred_region
        // Predicated region
        $region29: #{sgconv3_forward.5} parent=27 // pred_check
          %p267 = pneg %p60
        $region30: #{sgconv3_forward.5} parent=27 // pred_check_branch
          %269 = sbr.rel (%p267) target = $region32
        $region31: #{sgconv3_forward.5} parent=27 // pred_region
          %p270 = scmp.lt.s32.totalorder %s24, %s23
          %s271 = scalar_select %p270, %s24, %s23
          %p272 = scmp.lt.s32.totalorder %s22, 1
          %s273 = scalar_select %p272, %s22, 1
          %p274 = scmp.lt.s32.totalorder %s271, 0
          %s275 = scalar_select %p274, %s271, 0
          %s276 = smul.addr %s273, 2
          %s277 = sadd.s32 %s275, %s276
          %s278 = smul.addr %s277, 4
          %s279 = scalar_lea.vmem %s0, %s278
          %p280 = scmp.lt.s32.totalorder %s24, %s23
          %s281 = scalar_select %p280, %s24, %s23
        $region32: #{sgconv3_forward.5} parent=27 // pred_fallthru
          _
        // Predicated region
        $region33: #{sgconv3_forward.5} parent=27 // pred_check
          %p282 = pneg %p92
        $region34: #{sgconv3_forward.5} parent=27 // pred_check_branch
          %284 = sbr.rel (%p282) target = $region36
        $region35: #{sgconv3_forward.5} parent=27 // pred_region
          %p285 = scmp.lt.s32.totalorder %s24, %s23
          %s286 = scalar_select %p285, %s24, %s23
          %p287 = scmp.lt.s32.totalorder %s22, 1
          %s288 = scalar_select %p287, %s22, 1
          %p289 = scmp.lt.s32.totalorder %s286, 0
          %s290 = scalar_select %p289, %s286, 0
          %s291 = sadd.s32 %s290, 4
          %s292 = smul.addr %s288, 6
          %s293 = sadd.s32 %s291, %s292
          %s294 = smul.addr %s293, 4
          %s295 = scalar_lea.vmem %s1, %s294
          %p296 = scmp.lt.s32.totalorder %s24, %s23
          %s297 = scalar_select %p296, %s24, %s23
        $region36: #{sgconv3_forward.5} parent=27 // pred_fallthru
          _
        // Predicated region
        $region37: #{sgconv3_forward.5} parent=27 // pred_check
          %p298 = pneg %p120
        $region38: #{sgconv3_forward.5} parent=27 // pred_check_branch
          %300 = sbr.rel (%p298) target = $region40
        $region39: #{sgconv3_forward.5} parent=27 // pred_region
          %p301 = scmp.lt.s32.totalorder %s22, 1
          %s302 = scalar_select %p301, %s22, 1
          %p303 = scmp.lt.s32.totalorder %s23, 0
          %s304 = scalar_select %p303, %s23, 0
          %s305 = smul.addr %s302, 6
          %s306 = sadd.s32 %s304, %s305
          %s307 = smul.addr %s306, 4
          %s308 = scalar_lea.vmem %s2, %s307
        $region40: #{sgconv3_forward.5} parent=27 // pred_fallthru
          _
      $region28: #{sgconv3_forward.5} parent=5 // pred_fallthru
        _
      %p309 = scmp.le.s32.totalorder 1, %s15
      %p310 = scmp.lt.s32.totalorder %s15, 3
      %p311 = pnand %p309, %p310
      %p312 = pneg %p311
      // Predicated region
      $region41: #{sgconv3_forward.5} parent=5 // pred_check
        _
      $region42: #{sgconv3_forward.5} parent=5 // pred_check_branch
        %314 = sbr.rel (%p311) target = $region44
      $region43: #{sgconv3_forward.5} parent=5 // pred_region
        %s315 = ssub.s32 %s15, 1
        %p316 = scmp.lt.s32.totalorder %s27, %s26
        %s317 = scalar_select %p316, %s27, %s26
        %p318 = scmp.lt.s32.totalorder %s25, 1
        %s319 = scalar_select %p318, %s25, 1
        %p320 = scmp.lt.s32.totalorder %s317, 0
        %s321 = scalar_select %p320, %s317, 0
        %s322 = smul.addr %s319, 2
        %s323 = sadd.s32 %s321, %s322
        %s324 = smul.addr %s323, 4
        %s325 = scalar_lea.vmem %s0, %s324
        %p326 = pneg %p66
        %p327 = pneg %p63
        %p328 = scmp.lt.s32.totalorder %s27, %s26
        %s329 = scalar_select %p328, %s27, %s26
        %p330 = scmp.lt.s32.totalorder %s25, 1
        %s331 = scalar_select %p330, %s25, 1
        %p332 = scmp.lt.s32.totalorder %s329, 0
        %s333 = scalar_select %p332, %s329, 0
        %s334 = sadd.s32 %s333, 4
        %s335 = smul.addr %s331, 6
        %s336 = sadd.s32 %s334, %s335
        %s337 = smul.addr %s336, 4
        %s338 = scalar_lea.vmem %s1, %s337
        %p339 = pneg %p98
        %p340 = pneg %p95
        %p341 = scmp.lt.s32.totalorder %s25, 1
        %s342 = scalar_select %p341, %s25, 1
        %p343 = scmp.lt.s32.totalorder %s26, 0
        %s344 = scalar_select %p343, %s26, 0
        %s345 = smul.addr %s342, 6
        %s346 = sadd.s32 %s344, %s345
        %s347 = smul.addr %s346, 4
        %s348 = scalar_lea.vmem %s2, %s347
        %p349 = pneg %p126
        %p350 = pneg %p123
        %s351 = ssub.s32 %s26, %s27
        %p352 = scmp.gt.s32.totalorder %s351, 0
        %s353 = scalar_select %p352, %s351, 0
        %p354 = scmp.lt.s32.totalorder %s353, 0
        %s355 = scalar_select %p354, %s353, 0
        %s356 = smul.addr %s355, 16
        %s357 = smul.addr %s356, 4
        %s358 = scalar_lea.vmem %s3, %s357
        %p359 = pneg %p158
        %p360 = pneg %p155
        %p361 = pneg %p179
        %p362 = pneg %p176
        %p363 = pneg %p200
        %p364 = pneg %p197
        %p365 = pneg %p228
        %p366 = pneg %p225
        %s367 = sand.u32 %s215, 1
        %s368 = scalar_lea.sflag [#allocation4], %s367
        %s369 = sand.u32 %s215, 1
        %s370 = smul.addr %s369, 16
        %s371 = scalar_lea.vmem [#allocation3], %s370
        %p372 = scmp.lt.s32.totalorder %s27, %s26
        %s373 = scalar_select %p372, %s27, %s26
        %p374 = scmp.lt.s32.totalorder %s25, 1
        %s375 = scalar_select %p374, %s25, 1
        %p376 = scmp.lt.s32.totalorder %s373, 0
        %s377 = scalar_select %p376, %s373, 0
        %s378 = smul.addr %s375, 2
        %s379 = sadd.s32 %s377, %s378
        %s380 = smul.addr %s379, 4
        %s381 = scalar_lea.vmem %s0, %s380
        %p382 = scmp.lt.s32.totalorder %s27, %s26
        %s383 = scalar_select %p382, %s27, %s26
        %p384 = scmp.lt.s32.totalorder %s27, %s26
        %s385 = scalar_select %p384, %s27, %s26
        %p386 = scmp.lt.s32.totalorder %s25, 1
        %s387 = scalar_select %p386, %s25, 1
        %p388 = scmp.lt.s32.totalorder %s385, 0
        %s389 = scalar_select %p388, %s385, 0
        %s390 = sadd.s32 %s389, 4
        %s391 = smul.addr %s387, 6
        %s392 = sadd.s32 %s390, %s391
        %s393 = smul.addr %s392, 4
        %s394 = scalar_lea.vmem %s1, %s393
        %p395 = scmp.lt.s32.totalorder %s27, %s26
        %s396 = scalar_select %p395, %s27, %s26
        %p397 = scmp.lt.s32.totalorder %s25, 1
        %s398 = scalar_select %p397, %s25, 1
        %p399 = scmp.lt.s32.totalorder %s26, 0
        %s400 = scalar_select %p399, %s26, 0
        %s401 = smul.addr %s398, 6
        %s402 = sadd.s32 %s400, %s401
        %s403 = smul.addr %s402, 4
        %s404 = scalar_lea.vmem %s2, %s403
        %s405 = ssub.s32 %s26, %s27
        %p406 = scmp.gt.s32.totalorder %s405, 0
        %s407 = scalar_select %p406, %s405, 0
        %p408 = scmp.lt.s32.totalorder %s407, 0
        %s409 = scalar_select %p408, %s407, 0
        %s410 = smul.addr %s409, 16
        %s411 = smul.addr %s410, 4
        %s412 = scalar_lea.vmem %s3, %s411
        %s413 = ssub.s32 %s26, %s27
        %p414 = scmp.gt.s32.totalorder %s413, 0
        %s415 = scalar_select %p414, %s413, 0
        %s416 = smul.u32 2, %s26
        %p418 = scmp.eq.s32.totalorder %s27, 0
        // Predicated region
        $region45: #{sgconv3_forward.5} parent=43 // pred_check
          %p419 = pneg %p418
        $region46: #{sgconv3_forward.5} parent=43 // pred_check_branch
          %421 = sbr.rel (%p419) target = $region48
        $region47: #{sgconv3_forward.5} parent=43 // pred_region
          %vm422 = vcmask 125952
          %423 = vst.msk [vmem:[#allocation2] sm:$0xf] %vm422, 0.0
          %424 = vst.msk [vmem:[#allocation2 + $0x4] sm:$0xf] %vm422, 0.0
          %425 = vst.msk [vmem:[#allocation2 + $0x8] sm:$0xf] %vm422, 0.0
          %426 = vst.msk [vmem:[#allocation2 + $0xc] sm:$0xf] %vm422, 0.0
          %427 = vst.msk [vmem:[#allocation2 + $0x10] sm:$0xf] %vm422, 0.0
          %428 = vst.msk [vmem:[#allocation2 + $0x14] sm:$0xf] %vm422, 0.0
          %429 = vst.msk [vmem:[#allocation2 + $0x18] sm:$0xf] %vm422, 0.0
          %430 = vst.msk [vmem:[#allocation2 + $0x1c] sm:$0xf] %vm422, 0.0
        $region48: #{sgconv3_forward.5} parent=43 // pred_fallthru
          _
        %p431 = scmp.le.s32.totalorder %s27, %s26
        // Predicated region
        $region49: #{sgconv3_forward.5} parent=43 // pred_check
          %p432 = pneg %p431
        $region50: #{sgconv3_forward.5} parent=43 // pred_check_branch
          %434 = sbr.rel (%p432) target = $region52
        $region51: #{sgconv3_forward.5} parent=43 // pred_region
          %v435 = vld [vmem:[%s381] sm:$0xf]
          %v436 = vld [vmem:[%s381 + $0x4] sm:$0xf]
          %v437 = vld [vmem:[%s394] sm:$0xf]
          %v438 = vld [vmem:[%s394 + $0x4] sm:$0xf]
          %v441 = vrot.slane %v435, 3
          %v442 = vrot.slane %v436, 3
          %vm443 = vcmask 1040384
          %v446 = vsel %vm443, %v435, %v441
          %vm448 = vcmask 1041409
          %v449 = vsel %vm448, %v435, %v441
          %v451 = vrot.slane %v449, 1
          %vm452 = vcmask 1042434
          %v453 = vsel %vm452, %v435, %v441
          %v455 = vrot.slane %v453, 2
          %vm456 = vcmask 1043459
          %v457 = vsel %vm456, %v435, %v441
          %v459 = vrot.slane %v457, 3
          %v462 = vsel %vm443, %v436, %v442
          %v464 = vsel %vm448, %v436, %v442
          %v466 = vrot.slane %v464, 1
          %v467 = vsel %vm452, %v436, %v442
          %v469 = vrot.slane %v467, 2
          %v470 = vsel %vm456, %v436, %v442
          %v472 = vrot.slane %v470, 3
          %v473 = vunpack.i.l.s16 %v446
          %v474 = vunpack.i.h.s16 %v446
          %v475 = vunpack.i.l.s16 %v451
          %v476 = vunpack.i.h.s16 %v451
          %v477 = vunpack.i.l.s16 %v455
          %v478 = vunpack.i.h.s16 %v455
          %v479 = vunpack.i.l.s16 %v459
          %v480 = vunpack.i.h.s16 %v459
          %v481 = vunpack.i.l.s16 %v462
          %v482 = vunpack.i.h.s16 %v462
          %v483 = vunpack.i.l.s16 %v466
          %v484 = vunpack.i.h.s16 %v466
          %v485 = vunpack.i.l.s16 %v469
          %v486 = vunpack.i.h.s16 %v469
          %v487 = vunpack.i.l.s16 %v472
          %v488 = vunpack.i.h.s16 %v472
          %v491 = vrot.slane %v437, 3
          %v492 = vrot.slane %v438, 3
          %v495 = vsel %vm443, %v437, %v491
          %v496 = vsel %vm448, %v437, %v491
          %v498 = vrot.slane %v496, 1
          %v499 = vsel %vm452, %v437, %v491
          %v501 = vrot.slane %v499, 2
          %v502 = vsel %vm456, %v437, %v491
          %v504 = vrot.slane %v502, 3
          %v507 = vsel %vm443, %v438, %v492
          %v508 = vsel %vm448, %v438, %v492
          %v510 = vrot.slane %v508, 1
          %v511 = vsel %vm452, %v438, %v492
          %v513 = vrot.slane %v511, 2
          %v514 = vsel %vm456, %v438, %v492
          %v516 = vrot.slane %v514, 3
          %v525 = vpack.i.b16 %v473, %v473
          %v526 = vpack.i.b16 %v474, %v474
          %v527 = vpack.i.b16 %v475, %v475
          %v528 = vpack.i.b16 %v476, %v476
          %v529 = vpack.i.b16 %v477, %v477
          %v530 = vpack.i.b16 %v478, %v478
          %v531 = vpack.i.b16 %v479, %v479
          %v532 = vpack.i.b16 %v480, %v480
          %v533 = vpack.i.b16 %v481, %v481
          %v534 = vpack.i.b16 %v482, %v482
          %v535 = vpack.i.b16 %v483, %v483
          %v536 = vpack.i.b16 %v484, %v484
          %v537 = vpack.i.b16 %v485, %v485
          %v538 = vpack.i.b16 %v486, %v486
          %v539 = vpack.i.b16 %v487, %v487
          %v540 = vpack.i.b16 %v488, %v488
          %v541 = vperm.slane %v525, 0
          %v542 = vperm.slane %v526, 0
          %v543 = vperm.slane %v527, 0
          %v544 = vperm.slane %v528, 0
          %v545 = vperm.slane %v529, 0
          %v546 = vperm.slane %v530, 0
          %v547 = vperm.slane %v531, 0
          %v548 = vperm.slane %v532, 0
          %v549 = vperm.slane %v533, 0
          %v550 = vperm.slane %v534, 0
          %v551 = vperm.slane %v535, 0
          %v552 = vperm.slane %v536, 0
          %v553 = vperm.slane %v537, 0
          %v554 = vperm.slane %v538, 0
          %v555 = vperm.slane %v539, 0
          %v556 = vperm.slane %v540, 0
          %v558 = vpack.i.b16 %v541, %v541
          %v560 = vperm.slane %v558, 0
          %v562 = vpack.i.b16 %v542, %v542
          %v564 = vperm.slane %v562, 0
          %v566 = vpack.i.b16 %v543, %v543
          %v568 = vperm.slane %v566, 0
          %v570 = vpack.i.b16 %v544, %v544
          %v572 = vperm.slane %v570, 0
          %v574 = vpack.i.b16 %v545, %v545
          %v576 = vperm.slane %v574, 0
          %v578 = vpack.i.b16 %v546, %v546
          %v580 = vperm.slane %v578, 0
          %v582 = vpack.i.b16 %v547, %v547
          %v584 = vperm.slane %v582, 0
          %v586 = vpack.i.b16 %v548, %v548
          %v588 = vperm.slane %v586, 0
          %v590 = vpack.i.b16 %v549, %v549
          %v592 = vperm.slane %v590, 0
          %v594 = vpack.i.b16 %v550, %v550
          %v596 = vperm.slane %v594, 0
          %v598 = vpack.i.b16 %v551, %v551
          %v600 = vperm.slane %v598, 0
          %v602 = vpack.i.b16 %v552, %v552
          %v604 = vperm.slane %v602, 0
          %v606 = vpack.i.b16 %v553, %v553
          %v608 = vperm.slane %v606, 0
          %v610 = vpack.i.b16 %v554, %v554
          %v612 = vperm.slane %v610, 0
          %v614 = vpack.i.b16 %v555, %v555
          %v616 = vperm.slane %v614, 0
          %v618 = vpack.i.b16 %v556, %v556
          %v620 = vperm.slane %v618, 0
          %v621 = vunpack.c.l.bf16 %v560
          %v622 = vunpack.c.l.bf16 %v564
          %v623 = vunpack.c.l.bf16 %v568
          %v624 = vunpack.c.l.bf16 %v572
          %v625 = vunpack.c.l.bf16 %v576
          %v626 = vunpack.c.l.bf16 %v580
          %v627 = vunpack.c.l.bf16 %v584
          %v628 = vunpack.c.l.bf16 %v588
          %v629 = vunpack.c.l.bf16 %v592
          %v630 = vunpack.c.l.bf16 %v596
          %v631 = vunpack.c.l.bf16 %v600
          %v632 = vunpack.c.l.bf16 %v604
          %v633 = vunpack.c.l.bf16 %v608
          %v634 = vunpack.c.l.bf16 %v612
          %v635 = vunpack.c.l.bf16 %v616
          %v636 = vunpack.c.l.bf16 %v620
          %v637 = vunpack.c.l.bf16 %v495
          %v638 = vunpack.c.l.bf16 %v498
          %v639 = vunpack.c.l.bf16 %v501
          %v640 = vunpack.c.l.bf16 %v504
          %v641 = vunpack.c.l.bf16 %v507
          %v642 = vunpack.c.l.bf16 %v510
          %v643 = vunpack.c.l.bf16 %v513
          %v644 = vunpack.c.l.bf16 %v516
          %v645 = vmul.f32 %v621, %v637
          %v646 = vmul.f32 %v622, %v637
          %v647 = vmul.f32 %v623, %v638
          %v648 = vmul.f32 %v624, %v638
          %v649 = vmul.f32 %v625, %v639
          %v650 = vmul.f32 %v626, %v639
          %v651 = vmul.f32 %v627, %v640
          %v652 = vmul.f32 %v628, %v640
          %v653 = vmul.f32 %v629, %v641
          %v654 = vmul.f32 %v630, %v641
          %v655 = vmul.f32 %v631, %v642
          %v656 = vmul.f32 %v632, %v642
          %v657 = vmul.f32 %v633, %v643
          %v658 = vmul.f32 %v634, %v643
          %v659 = vmul.f32 %v635, %v644
          %v660 = vmul.f32 %v636, %v644
          %v661 = vpack.c.bf16 %v645, %v645
          %v662 = vpack.c.bf16 %v646, %v646
          %v663 = vpack.c.bf16 %v647, %v647
          %v664 = vpack.c.bf16 %v648, %v648
          %v665 = vpack.c.bf16 %v649, %v649
          %v666 = vpack.c.bf16 %v650, %v650
          %v667 = vpack.c.bf16 %v651, %v651
          %v668 = vpack.c.bf16 %v652, %v652
          %v669 = vpack.c.bf16 %v653, %v653
          %v670 = vpack.c.bf16 %v654, %v654
          %v671 = vpack.c.bf16 %v655, %v655
          %v672 = vpack.c.bf16 %v656, %v656
          %v673 = vpack.c.bf16 %v657, %v657
          %v674 = vpack.c.bf16 %v658, %v658
          %v675 = vpack.c.bf16 %v659, %v659
          %v676 = vpack.c.bf16 %v660, %v660
          %v677 = vld [vmem:[#allocation2] sm:$0xf]
          %v678 = vld [vmem:[#allocation2 + $0x4] sm:$0xf]
          %v679 = vld [vmem:[#allocation2 + $0x8] sm:$0xf]
          %v680 = vld [vmem:[#allocation2 + $0xc] sm:$0xf]
          %v681 = vld [vmem:[#allocation2 + $0x10] sm:$0xf]
          %v682 = vld [vmem:[#allocation2 + $0x14] sm:$0xf]
          %v683 = vld [vmem:[#allocation2 + $0x18] sm:$0xf]
          %v684 = vld [vmem:[#allocation2 + $0x1c] sm:$0xf]
          %v685 = vld [vmem:[%s412] sm:$0xf]
          %v686 = vld [vmem:[%s412 + $0x4] sm:$0xf]
          %v687 = vld [vmem:[%s412 + $0x8] sm:$0xf]
          %v688 = vld [vmem:[%s412 + $0xc] sm:$0xf]
          %v689 = vld [vmem:[%s412 + $0x10] sm:$0xf]
          %v690 = vld [vmem:[%s412 + $0x14] sm:$0xf]
          %v691 = vld [vmem:[%s412 + $0x18] sm:$0xf]
          %v692 = vld [vmem:[%s412 + $0x1c] sm:$0xf]
          %v693 = vld [vmem:[%s412 + $0x20] sm:$0xf]
          %v694 = vld [vmem:[%s412 + $0x24] sm:$0xf]
          %v695 = vld [vmem:[%s412 + $0x28] sm:$0xf]
          %v696 = vld [vmem:[%s412 + $0x2c] sm:$0xf]
          %v697 = vld [vmem:[%s412 + $0x30] sm:$0xf]
          %v698 = vld [vmem:[%s412 + $0x34] sm:$0xf]
          %v699 = vld [vmem:[%s412 + $0x38] sm:$0xf]
          %v700 = vld [vmem:[%s412 + $0x3c] sm:$0xf]
          %702 = vst [vmem:[#allocation1] ss:$9 sm:$0xff] %v661
          %s704 = scalar_lea.vmem [#allocation1], 1
          %705 = vst [vmem:[%s704] ss:$9 sm:$0xff] %v662
          %v706 = vld [vmem:[#allocation1] sm:$0xff]
          %v709 = vunpack.c.l.b16 %v685
          %v710 = vunpack.c.l.b16 %v686
          %v711 = vpack.c.b16 %v710, %v709
          %vm712 = vcmask 130048
          %v713 = vsel %vm712, %v706, 0
          %v716 = vsel %vm712, %v711, 0
          %718 = vmatpush.bf16.xpose.msra.mxu0 0
          %719 = vmatpush.bf16.xpose.msra.mxu0 0
          %720 = vmatpush.bf16.xpose.msra.mxu0 0
          %721 = vmatpush.bf16.xpose.msra.mxu0 0
          %722 = vmatpush.bf16.xpose.msra.mxu0 0
          %723 = vmatpush.bf16.xpose.msra.mxu0 0
          %724 = vmatpush.bf16.xpose.msra.mxu0 0
          %725 = vmatpush.bf16.xpose.msra.mxu0 %v716
          %726 = vmatmul.bf16.gmra.mxu0 %v713
          %v727 = vpop.f32.mrf.mxu0
          %v728 = vadd.f32 0.0, %v727
          %v729 = vpop.f32.mrf.mxu0
          %730 = vdwg.mxu0
          %732 = vst [vmem:[#allocation1] ss:$9 sm:$0xff] %v663
          %s734 = scalar_lea.vmem [#allocation1], 1
          %735 = vst [vmem:[%s734] ss:$9 sm:$0xff] %v664
          %v736 = vld [vmem:[#allocation1] sm:$0xff]
          %v739 = vunpack.c.l.b16 %v687
          %v740 = vunpack.c.l.b16 %v688
          %v741 = vpack.c.b16 %v740, %v739
          %v742 = vsel %vm712, %v736, 0
          %v745 = vsel %vm712, %v741, 0
          %747 = vmatpush.bf16.xpose.msra.mxu0 0
          %748 = vmatpush.bf16.xpose.msra.mxu0 0
          %749 = vmatpush.bf16.xpose.msra.mxu0 0
          %750 = vmatpush.bf16.xpose.msra.mxu0 0
          %751 = vmatpush.bf16.xpose.msra.mxu0 0
          %752 = vmatpush.bf16.xpose.msra.mxu0 0
          %753 = vmatpush.bf16.xpose.msra.mxu0 0
          %754 = vmatpush.bf16.xpose.msra.mxu0 %v745
          %755 = vmatmul.bf16.gmra.mxu0 %v742
          %v756 = vpop.f32.mrf.mxu0
          %v757 = vadd.f32 0.0, %v756
          %v758 = vpop.f32.mrf.mxu0
          %759 = vdwg.mxu0
          %761 = vst [vmem:[#allocation1] ss:$9 sm:$0xff] %v665
          %s763 = scalar_lea.vmem [#allocation1], 1
          %764 = vst [vmem:[%s763] ss:$9 sm:$0xff] %v666
          %v765 = vld [vmem:[#allocation1] sm:$0xff]
          %v768 = vunpack.c.l.b16 %v689
          %v769 = vunpack.c.l.b16 %v690
          %v770 = vpack.c.b16 %v769, %v768
          %v771 = vsel %vm712, %v765, 0
          %v774 = vsel %vm712, %v770, 0
          %776 = vmatpush.bf16.xpose.msra.mxu0 0
          %777 = vmatpush.bf16.xpose.msra.mxu0 0
          %778 = vmatpush.bf16.xpose.msra.mxu0 0
          %779 = vmatpush.bf16.xpose.msra.mxu0 0
          %780 = vmatpush.bf16.xpose.msra.mxu0 0
          %781 = vmatpush.bf16.xpose.msra.mxu0 0
          %782 = vmatpush.bf16.xpose.msra.mxu0 0
          %783 = vmatpush.bf16.xpose.msra.mxu0 %v774
          %784 = vmatmul.bf16.gmra.mxu0 %v771
          %v785 = vpop.f32.mrf.mxu0
          %v786 = vadd.f32 0.0, %v785
          %v787 = vpop.f32.mrf.mxu0
          %788 = vdwg.mxu0
          %790 = vst [vmem:[#allocation1] ss:$9 sm:$0xff] %v667
          %s792 = scalar_lea.vmem [#allocation1], 1
          %793 = vst [vmem:[%s792] ss:$9 sm:$0xff] %v668
          %v794 = vld [vmem:[#allocation1] sm:$0xff]
          %v797 = vunpack.c.l.b16 %v691
          %v798 = vunpack.c.l.b16 %v692
          %v799 = vpack.c.b16 %v798, %v797
          %v800 = vsel %vm712, %v794, 0
          %v803 = vsel %vm712, %v799, 0
          %805 = vmatpush.bf16.xpose.msra.mxu0 0
          %806 = vmatpush.bf16.xpose.msra.mxu0 0
          %807 = vmatpush.bf16.xpose.msra.mxu0 0
          %808 = vmatpush.bf16.xpose.msra.mxu0 0
          %809 = vmatpush.bf16.xpose.msra.mxu0 0
          %810 = vmatpush.bf16.xpose.msra.mxu0 0
          %811 = vmatpush.bf16.xpose.msra.mxu0 0
          %812 = vmatpush.bf16.xpose.msra.mxu0 %v803
          %813 = vmatmul.bf16.gmra.mxu0 %v800
          %v814 = vpop.f32.mrf.mxu0
          %v815 = vadd.f32 0.0, %v814
          %v816 = vpop.f32.mrf.mxu0
          %817 = vdwg.mxu0
          %819 = vst [vmem:[#allocation1] ss:$9 sm:$0xff] %v669
          %s821 = scalar_lea.vmem [#allocation1], 1
          %822 = vst [vmem:[%s821] ss:$9 sm:$0xff] %v670
          %v823 = vld [vmem:[#allocation1] sm:$0xff]
          %v826 = vunpack.c.l.b16 %v693
          %v827 = vunpack.c.l.b16 %v694
          %v828 = vpack.c.b16 %v827, %v826
          %v829 = vsel %vm712, %v823, 0
          %v832 = vsel %vm712, %v828, 0
          %834 = vmatpush.bf16.xpose.msra.mxu0 0
          %835 = vmatpush.bf16.xpose.msra.mxu0 0
          %836 = vmatpush.bf16.xpose.msra.mxu0 0
          %837 = vmatpush.bf16.xpose.msra.mxu0 0
          %838 = vmatpush.bf16.xpose.msra.mxu0 0
          %839 = vmatpush.bf16.xpose.msra.mxu0 0
          %840 = vmatpush.bf16.xpose.msra.mxu0 0
          %841 = vmatpush.bf16.xpose.msra.mxu0 %v832
          %842 = vmatmul.bf16.gmra.mxu0 %v829
          %v843 = vpop.f32.mrf.mxu0
          %v844 = vadd.f32 0.0, %v843
          %v845 = vpop.f32.mrf.mxu0
          %846 = vdwg.mxu0
          %848 = vst [vmem:[#allocation1] ss:$9 sm:$0xff] %v671
          %s850 = scalar_lea.vmem [#allocation1], 1
          %851 = vst [vmem:[%s850] ss:$9 sm:$0xff] %v672
          %v852 = vld [vmem:[#allocation1] sm:$0xff]
          %v855 = vunpack.c.l.b16 %v695
          %v856 = vunpack.c.l.b16 %v696
          %v857 = vpack.c.b16 %v856, %v855
          %v858 = vsel %vm712, %v852, 0
          %v861 = vsel %vm712, %v857, 0
          %863 = vmatpush.bf16.xpose.msra.mxu0 0
          %864 = vmatpush.bf16.xpose.msra.mxu0 0
          %865 = vmatpush.bf16.xpose.msra.mxu0 0
          %866 = vmatpush.bf16.xpose.msra.mxu0 0
          %867 = vmatpush.bf16.xpose.msra.mxu0 0
          %868 = vmatpush.bf16.xpose.msra.mxu0 0
          %869 = vmatpush.bf16.xpose.msra.mxu0 0
          %870 = vmatpush.bf16.xpose.msra.mxu0 %v861
          %871 = vmatmul.bf16.gmra.mxu0 %v858
          %v872 = vpop.f32.mrf.mxu0
          %v873 = vadd.f32 0.0, %v872
          %v874 = vpop.f32.mrf.mxu0
          %875 = vdwg.mxu0
          %877 = vst [vmem:[#allocation1] ss:$9 sm:$0xff] %v673
          %s879 = scalar_lea.vmem [#allocation1], 1
          %880 = vst [vmem:[%s879] ss:$9 sm:$0xff] %v674
          %v881 = vld [vmem:[#allocation1] sm:$0xff]
          %v884 = vunpack.c.l.b16 %v697
          %v885 = vunpack.c.l.b16 %v698
          %v886 = vpack.c.b16 %v885, %v884
          %v887 = vsel %vm712, %v881, 0
          %v890 = vsel %vm712, %v886, 0
          %892 = vmatpush.bf16.xpose.msra.mxu0 0
          %893 = vmatpush.bf16.xpose.msra.mxu0 0
          %894 = vmatpush.bf16.xpose.msra.mxu0 0
          %895 = vmatpush.bf16.xpose.msra.mxu0 0
          %896 = vmatpush.bf16.xpose.msra.mxu0 0
          %897 = vmatpush.bf16.xpose.msra.mxu0 0
          %898 = vmatpush.bf16.xpose.msra.mxu0 0
          %899 = vmatpush.bf16.xpose.msra.mxu0 %v890
          %900 = vmatmul.bf16.gmra.mxu0 %v887
          %v901 = vpop.f32.mrf.mxu0
          %v902 = vadd.f32 0.0, %v901
          %v903 = vpop.f32.mrf.mxu0
          %904 = vdwg.mxu0
          %906 = vst [vmem:[#allocation1] ss:$9 sm:$0xff] %v675
          %s908 = scalar_lea.vmem [#allocation1], 1
          %909 = vst [vmem:[%s908] ss:$9 sm:$0xff] %v676
          %v910 = vld [vmem:[#allocation1] sm:$0xff]
          %v913 = vunpack.c.l.b16 %v699
          %v914 = vunpack.c.l.b16 %v700
          %v915 = vpack.c.b16 %v914, %v913
          %v916 = vsel %vm712, %v910, 0
          %v919 = vsel %vm712, %v915, 0
          %921 = vmatpush.bf16.xpose.msra.mxu0 0
          %922 = vmatpush.bf16.xpose.msra.mxu0 0
          %923 = vmatpush.bf16.xpose.msra.mxu0 0
          %924 = vmatpush.bf16.xpose.msra.mxu0 0
          %925 = vmatpush.bf16.xpose.msra.mxu0 0
          %926 = vmatpush.bf16.xpose.msra.mxu0 0
          %927 = vmatpush.bf16.xpose.msra.mxu0 0
          %928 = vmatpush.bf16.xpose.msra.mxu0 %v919
          %929 = vmatmul.bf16.gmra.mxu0 %v916
          %v930 = vpop.f32.mrf.mxu0
          %v931 = vadd.f32 0.0, %v930
          %v932 = vpop.f32.mrf.mxu0
          %933 = vdwg.mxu0
          %v934 = vadd.f32 %v677, %v728
          %v935 = vadd.f32 %v678, %v757
          %v936 = vadd.f32 %v679, %v786
          %v937 = vadd.f32 %v680, %v815
          %v938 = vadd.f32 %v681, %v844
          %v939 = vadd.f32 %v682, %v873
          %v940 = vadd.f32 %v683, %v902
          %v941 = vadd.f32 %v684, %v931
          %vm942 = vcmask 125952
          %943 = vst.msk [vmem:[#allocation2] sm:$0xf] %vm942, %v934
          %944 = vst.msk [vmem:[#allocation2 + $0x4] sm:$0xf] %vm942, %v935
          %945 = vst.msk [vmem:[#allocation2 + $0x8] sm:$0xf] %vm942, %v936
          %946 = vst.msk [vmem:[#allocation2 + $0xc] sm:$0xf] %vm942, %v937
          %947 = vst.msk [vmem:[#allocation2 + $0x10] sm:$0xf] %vm942, %v938
          %948 = vst.msk [vmem:[#allocation2 + $0x14] sm:$0xf] %vm942, %v939
          %949 = vst.msk [vmem:[#allocation2 + $0x18] sm:$0xf] %vm942, %v940
          %950 = vst.msk [vmem:[#allocation2 + $0x1c] sm:$0xf] %vm942, %v941
        $region52: #{sgconv3_forward.5} parent=43 // pred_fallthru
          _
        // Predicated region
        $region53: #{sgconv3_forward.5} parent=43 // pred_check
          %p951 = pneg %p418
        $region54: #{sgconv3_forward.5} parent=43 // pred_check_branch
          %953 = sbr.rel (%p951) target = $region56
        $region55: #{sgconv3_forward.5} parent=43 // pred_region
          %v954 = vld [vmem:[#allocation2] sm:$0xf]
          %v955 = vld [vmem:[#allocation2 + $0x4] sm:$0xf]
          %v956 = vld [vmem:[#allocation2 + $0x8] sm:$0xf]
          %v957 = vld [vmem:[#allocation2 + $0xc] sm:$0xf]
          %v958 = vld [vmem:[#allocation2 + $0x10] sm:$0xf]
          %v959 = vld [vmem:[#allocation2 + $0x14] sm:$0xf]
          %v960 = vld [vmem:[#allocation2 + $0x18] sm:$0xf]
          %v961 = vld [vmem:[#allocation2 + $0x1c] sm:$0xf]
          %v970 = vrot.slane %v954, 2
          %v971 = vrot.slane %v955, 2
          %v972 = vrot.slane %v956, 2
          %v973 = vrot.slane %v957, 2
          %v974 = vrot.slane %v958, 2
          %v975 = vrot.slane %v959, 2
          %v976 = vrot.slane %v960, 2
          %v977 = vrot.slane %v961, 2
          %v986 = vld [vmem:[%s404] sm:$0xf]
          %v987 = vld [vmem:[%s404 + $0x4] sm:$0xf]
          %v988 = vunpack.c.l.bf16 %v986
          %v989 = vunpack.c.l.bf16 %v987
          %v992 = vrot.slane %v988, 1
          %v993 = vrot.slane %v988, 2
          %v994 = vrot.slane %v988, 3
          %v995 = vrot.slane %v988, 4
          %v996 = vrot.slane %v988, 5
          %v997 = vrot.slane %v988, 6
          %v998 = vrot.slane %v988, 7
          %v999 = vrot.slane %v989, 1
          %v1000 = vrot.slane %v989, 2
          %v1001 = vrot.slane %v989, 3
          %v1002 = vrot.slane %v989, 4
          %v1003 = vrot.slane %v989, 5
          %v1004 = vrot.slane %v989, 6
          %v1005 = vrot.slane %v989, 7
          %v1006 = vperm.slane %v988, 0
          %v1007 = vperm.slane %v992, 0
          %v1008 = vperm.slane %v993, 0
          %v1009 = vperm.slane %v994, 0
          %v1010 = vperm.slane %v995, 0
          %v1011 = vperm.slane %v996, 0
          %v1012 = vperm.slane %v997, 0
          %v1013 = vperm.slane %v998, 0
          %v1014 = vperm.slane %v989, 0
          %v1015 = vperm.slane %v999, 0
          %v1016 = vperm.slane %v1000, 0
          %v1017 = vperm.slane %v1001, 0
          %v1018 = vperm.slane %v1002, 0
          %v1019 = vperm.slane %v1003, 0
          %v1020 = vperm.slane %v1004, 0
          %v1021 = vperm.slane %v1005, 0
          %v1038 = vmul.f32 %v1006, %v954
          %v1039 = vmul.f32 %v1007, %v970
          %v1040 = vmul.f32 %v1008, %v955
          %v1041 = vmul.f32 %v1009, %v971
          %v1042 = vmul.f32 %v1010, %v956
          %v1043 = vmul.f32 %v1011, %v972
          %v1044 = vmul.f32 %v1012, %v957
          %v1045 = vmul.f32 %v1013, %v973
          %v1046 = vmul.f32 %v1014, %v958
          %v1047 = vmul.f32 %v1015, %v974
          %v1048 = vmul.f32 %v1016, %v959
          %v1049 = vmul.f32 %v1017, %v975
          %v1050 = vmul.f32 %v1018, %v960
          %v1051 = vmul.f32 %v1019, %v976
          %v1052 = vmul.f32 %v1020, %v961
          %v1053 = vmul.f32 %v1021, %v977
          %vm1054 = vcmask 123904
          %v1055 = vsel %vm1054, %v1038, 0.0
          %v1056 = vsel %vm1054, %v1039, 0.0
          %v1057 = vadd.f32 %v1055, %v1056
          %v1058 = vsel %vm1054, %v1040, 0.0
          %v1059 = vsel %vm1054, %v1041, 0.0
          %v1060 = vadd.f32 %v1058, %v1059
          %v1061 = vsel %vm1054, %v1042, 0.0
          %v1062 = vsel %vm1054, %v1043, 0.0
          %v1063 = vadd.f32 %v1061, %v1062
          %v1064 = vsel %vm1054, %v1044, 0.0
          %v1065 = vsel %vm1054, %v1045, 0.0
          %v1066 = vadd.f32 %v1064, %v1065
          %v1067 = vsel %vm1054, %v1046, 0.0
          %v1068 = vsel %vm1054, %v1047, 0.0
          %v1069 = vadd.f32 %v1067, %v1068
          %v1070 = vsel %vm1054, %v1048, 0.0
          %v1071 = vsel %vm1054, %v1049, 0.0
          %v1072 = vadd.f32 %v1070, %v1071
          %v1073 = vsel %vm1054, %v1050, 0.0
          %v1074 = vsel %vm1054, %v1051, 0.0
          %v1075 = vadd.f32 %v1073, %v1074
          %v1076 = vsel %vm1054, %v1052, 0.0
          %v1077 = vsel %vm1054, %v1053, 0.0
          %v1078 = vadd.f32 %v1076, %v1077
          %v1079 = vmul.f32 %v1057, 0.5
          %v1080 = vmul.f32 %v1060, 0.5
          %v1081 = vmul.f32 %v1063, 0.5
          %v1082 = vmul.f32 %v1066, 0.5
          %v1083 = vmul.f32 %v1069, 0.5
          %v1084 = vmul.f32 %v1072, 0.5
          %v1085 = vmul.f32 %v1075, 0.5
          %v1086 = vmul.f32 %v1078, 0.5
          %v1087 = vmul.f32 %v1057, 0.044715
          %v1088 = vmul.f32 %v1060, 0.044715
          %v1089 = vmul.f32 %v1063, 0.044715
          %v1090 = vmul.f32 %v1066, 0.044715
          %v1091 = vmul.f32 %v1069, 0.044715
          %v1092 = vmul.f32 %v1072, 0.044715
          %v1093 = vmul.f32 %v1075, 0.044715
          %v1094 = vmul.f32 %v1078, 0.044715
          %v1095 = vmul.f32 %v1087, %v1057
          %v1096 = vmul.f32 %v1088, %v1060
          %v1097 = vmul.f32 %v1089, %v1063
          %v1098 = vmul.f32 %v1090, %v1066
          %v1099 = vmul.f32 %v1091, %v1069
          %v1100 = vmul.f32 %v1092, %v1072
          %v1101 = vmul.f32 %v1093, %v1075
          %v1102 = vmul.f32 %v1094, %v1078
          %v1103 = vmul.f32 %v1095, %v1057
          %v1104 = vmul.f32 %v1096, %v1060
          %v1105 = vmul.f32 %v1097, %v1063
          %v1106 = vmul.f32 %v1098, %v1066
          %v1107 = vmul.f32 %v1099, %v1069
          %v1108 = vmul.f32 %v1100, %v1072
          %v1109 = vmul.f32 %v1101, %v1075
          %v1110 = vmul.f32 %v1102, %v1078
          %v1111 = vadd.f32 %v1057, %v1103
          %v1112 = vadd.f32 %v1060, %v1104
          %v1113 = vadd.f32 %v1063, %v1105
          %v1114 = vadd.f32 %v1066, %v1106
          %v1115 = vadd.f32 %v1069, %v1107
          %v1116 = vadd.f32 %v1072, %v1108
          %v1117 = vadd.f32 %v1075, %v1109
          %v1118 = vadd.f32 %v1078, %v1110
          %v1119 = vmul.f32 %v1111, 0.7978846
          %v1120 = vmul.f32 %v1112, 0.7978846
          %v1121 = vmul.f32 %v1113, 0.7978846
          %v1122 = vmul.f32 %v1114, 0.7978846
          %v1123 = vmul.f32 %v1115, 0.7978846
          %v1124 = vmul.f32 %v1116, 0.7978846
          %v1125 = vmul.f32 %v1117, 0.7978846
          %v1126 = vmul.f32 %v1118, 0.7978846
          %v1127 = vtanh.pop %v1119
          %v1128 = vtanh.pop %v1120
          %v1129 = vtanh.pop %v1121
          %v1130 = vtanh.pop %v1122
          %v1131 = vtanh.pop %v1123
          %v1132 = vtanh.pop %v1124
          %v1133 = vtanh.pop %v1125
          %v1134 = vtanh.pop %v1126
          %v1135 = vadd.f32 %v1127, 1.0
          %v1136 = vadd.f32 %v1128, 1.0
          %v1137 = vadd.f32 %v1129, 1.0
          %v1138 = vadd.f32 %v1130, 1.0
          %v1139 = vadd.f32 %v1131, 1.0
          %v1140 = vadd.f32 %v1132, 1.0
          %v1141 = vadd.f32 %v1133, 1.0
          %v1142 = vadd.f32 %v1134, 1.0
          %v1143 = vmul.f32 %v1079, %v1135
          %v1144 = vmul.f32 %v1080, %v1136
          %v1145 = vmul.f32 %v1081, %v1137
          %v1146 = vmul.f32 %v1082, %v1138
          %v1147 = vmul.f32 %v1083, %v1139
          %v1148 = vmul.f32 %v1084, %v1140
          %v1149 = vmul.f32 %v1085, %v1141
          %v1150 = vmul.f32 %v1086, %v1142
          %1159 = vst [vmem:[#allocation1] ss:$4 sm:$0xff] %v1143
          %s1160 = scalar_lea.vmem [#allocation1], 1
          %1161 = vst [vmem:[%s1160] ss:$4 sm:$0xff] %v1144
          %s1162 = scalar_lea.vmem [#allocation1], 2
          %1163 = vst [vmem:[%s1162] ss:$4 sm:$0xff] %v1145
          %s1164 = scalar_lea.vmem [#allocation1], 3
          %1165 = vst [vmem:[%s1164] ss:$4 sm:$0xff] %v1146
          %s1166 = scalar_lea.vmem [#allocation1], 32
          %1167 = vst [vmem:[%s1166] ss:$4 sm:$0xff] %v1147
          %s1168 = scalar_lea.vmem [#allocation1], 33
          %1169 = vst [vmem:[%s1168] ss:$4 sm:$0xff] %v1148
          %s1170 = scalar_lea.vmem [#allocation1], 34
          %1171 = vst [vmem:[%s1170] ss:$4 sm:$0xff] %v1149
          %s1172 = scalar_lea.vmem [#allocation1], 35
          %1173 = vst [vmem:[%s1172] ss:$4 sm:$0xff] %v1150
          %v1174 = vld.sshfl [vmem:[#allocation1] sm:$0xff pattern:$0x73625140]
          %v1175 = vld.sshfl [vmem:[#allocation1 + $0x20] sm:$0xff pattern:$0x73625140]
          %1178 = vxpose.xlu0.b32.start [1/16] %v1174, 128
          %1179 = vxpose.xlu0.b32.cont [2/16] %v1175, 128
          %1180 = vxpose.xlu0.b32.cont [3/16] 0.0, 128
          %1181 = vxpose.xlu0.b32.cont [4/16] 0.0, 128
          %1182 = vxpose.xlu0.b32.cont [5/16] 0.0, 128
          %1183 = vxpose.xlu0.b32.cont [6/16] 0.0, 128
          %1184 = vxpose.xlu0.b32.cont [7/16] 0.0, 128
          %1185 = vxpose.xlu0.b32.cont [8/16] 0.0, 128
          %1186 = vxpose.xlu0.b32.cont [9/16] 0.0, 128
          %1187 = vxpose.xlu0.b32.cont [10/16] 0.0, 128
          %1188 = vxpose.xlu0.b32.cont [11/16] 0.0, 128
          %1189 = vxpose.xlu0.b32.cont [12/16] 0.0, 128
          %1190 = vxpose.xlu0.b32.cont [13/16] 0.0, 128
          %1191 = vxpose.xlu0.b32.cont [14/16] 0.0, 128
          %1192 = vxpose.xlu0.b32.cont [15/16] 0.0, 128
          %1193 = vxpose.xlu0.b32.end [16/16] 0.0, 128
          %v1194 = vpop.trf.xlu0
          %v1195 = vpop.trf.xlu0
          %v1196 = vpop.trf.xlu0
          %v1197 = vpop.trf.xlu0
          %v1198 = vpop.trf.xlu0
          %v1199 = vpop.trf.xlu0
          %v1200 = vpop.trf.xlu0
          %v1201 = vpop.trf.xlu0
          %v1202 = vpop.trf.xlu0
          %v1203 = vpop.trf.xlu0
          %v1204 = vpop.trf.xlu0
          %v1205 = vpop.trf.xlu0
          %v1206 = vpop.trf.xlu0
          %v1207 = vpop.trf.xlu0
          %v1208 = vpop.trf.xlu0
          %v1209 = vpop.trf.xlu0
          %v1210 = vpack.c.bf16 %v1195, %v1194
          %v1211 = vld [vmem:[%s4] sm:$0xf]
          %v1212 = vld [vmem:[%s4 + $0x4] sm:$0xf]
          %v1213 = vld [vmem:[%s5] sm:$0x1]
          %v1215 = vperm.slane %v1213, 0
          %v1219 = vunpack.c.l.b16 %v1211
          %v1220 = vunpack.c.l.b16 %v1212
          %v1221 = vpack.c.b16 %v1220, %v1219
          %vm1223 = vcmask 130048
          %v1225 = vsel %vm1223, %v1210, 0
          %1227 = vmatpush.bf16.msra.mxu0 0
          %1228 = vmatpush.bf16.msra.mxu0 0
          %1229 = vmatpush.bf16.msra.mxu0 0
          %1230 = vmatpush.bf16.msra.mxu0 0
          %1231 = vmatpush.bf16.msra.mxu0 0
          %1232 = vmatpush.bf16.msra.mxu0 0
          %1233 = vmatpush.bf16.msra.mxu0 0
          %1234 = vmatpush.bf16.msra.mxu0 %v1221
          %1235 = vmatmul.bf16.gmra.mxu0 %v1225
          %v1236 = vpop.f32.mrf.mxu0
          %v1237 = vadd.f32 %v1215, %v1236
          %v1238 = vpop.f32.mrf.mxu0
          %v1239 = vadd.f32 %v1215, %v1238
          %1240 = vdwg.mxu0
          %v1241 = vmul.f32 %v1237, 0.5
          %v1242 = vmul.f32 %v1239, 0.5
          %v1243 = vmul.f32 %v1237, 0.044715
          %v1244 = vmul.f32 %v1239, 0.044715
          %v1245 = vmul.f32 %v1243, %v1237
          %v1246 = vmul.f32 %v1244, %v1239
          %v1247 = vmul.f32 %v1245, %v1237
          %v1248 = vmul.f32 %v1246, %v1239
          %v1249 = vadd.f32 %v1237, %v1247
          %v1250 = vadd.f32 %v1239, %v1248
          %v1251 = vmul.f32 %v1249, 0.7978846
          %v1252 = vmul.f32 %v1250, 0.7978846
          %v1253 = vtanh.pop %v1251
          %v1254 = vtanh.pop %v1252
          %v1255 = vadd.f32 %v1253, 1.0
          %v1256 = vadd.f32 %v1254, 1.0
          %v1257 = vmul.f32 %v1241, %v1255
          %v1258 = vmul.f32 %v1242, %v1256
          %1259 = vst.msk [vmem:[%s371] sm:$0xff] %vm1223, %v1257
          %1260 = vst.msk [vmem:[%s371 + $0x8] sm:$0xff] %vm1223, %v1258
        $region56: #{sgconv3_forward.5} parent=43 // pred_fallthru
          _
        %s1261 = sand.u32 %s215, 1
        %s1262 = scalar_lea.sflag [#allocation4], %s1261
        %s1263 = sand.u32 %s215, 1
        %s1264 = smul.addr %s1263, 16
        %s1265 = scalar_lea.vmem [#allocation3], %s1264
        // Predicated region
        $region57: #{sgconv3_forward.5} parent=43 // pred_check
          %p1266 = pneg %p225
        $region58: #{sgconv3_forward.5} parent=43 // pred_check_branch
          %1268 = sbr.rel (%p1266) target = $region60
        $region59: #{sgconv3_forward.5} parent=43 // pred_region
          %s1269 = smul.u32 2, %s26
          %1271 = vsyncadd %s1262, 0
          %s1272 = smul.addr %s25, 2
          %s1273 = sadd.s32 %s1269, %s1272
          %s1274 = smul.addr %s1273, 8
          %s1275 = scalar_lea.hbm %s6, %s1274
          %s1276 = sshll.u32 %s1265, 4
          %s1277 = int_to_ptr.vmem [resolvable:$true] %s1276
          %s1278 = sshll.u32 %s1275, 4
          %s1279 = int_to_ptr.hbm [resolvable:$true] %s1278
          %1284 = dma.vmem_to_hbm [thread:$0]  %s1277, 256, %s1279, %s1262, 128, 128, 8
        $region60: #{sgconv3_forward.5} parent=43 // pred_fallthru
          _
      $region44: #{sgconv3_forward.5} parent=5 // pred_fallthru
        _
      %p1285 = scmp.le.s32.totalorder 2, %s15
      // Predicated region
      $region61: #{sgconv3_forward.5} parent=5 // pred_check
        %p1286 = pneg %p1285
      $region62: #{sgconv3_forward.5} parent=5 // pred_check_branch
        %1288 = sbr.rel (%p1286) target = $region64
      $region63: #{sgconv3_forward.5} parent=5 // pred_region
        %s1289 = ssub.s32 %s15, 2
        // Predicated region
        $region65: #{sgconv3_forward.5} parent=63 // pred_check
          %p1290 = pneg %p231
        $region66: #{sgconv3_forward.5} parent=63 // pred_check_branch
          %1292 = sbr.rel (%p1290) target = $region68
        $region67: #{sgconv3_forward.5} parent=63 // pred_region
          %s1293 = sand.u32 %s216, 1
          %s1294 = scalar_lea.sflag [#allocation4], %s1293
          %s1295 = sand.u32 %s216, 1
          %s1296 = smul.addr %s1295, 16
          %s1297 = scalar_lea.vmem [#allocation3], %s1296
          %1299 = dma.done %s1294, 256
        $region68: #{sgconv3_forward.5} parent=63 // pred_fallthru
          _
      $region64: #{sgconv3_forward.5} parent=5 // pred_fallthru
        _
    $region6: #{sgconv3_forward.5} parent=1 // loop_footer
      %s19 = sadd.s32 1, %s15
    $region7: #{sgconv3_forward.5} parent=1 // loop_footer_branch
      %14 = sbr.rel target = $region3
    $region8: #{sgconv3_forward.5} parent=1 // loop_exit
      _
    %1300 = vsyncpa [#allocation4], 1
    %s1301 = scalar_lea.sflag [#allocation4], 1
    %1302 = vsyncpa %s1301, 1

</llo_original>
